<compile_context>
chip_gen: v6e
topology: v6e:2x2x1
jax: 0.10.0
libtpu: 0.0.40
codegen_flags: <defaults>
</compile_context>

<pallas_src>
import jax
import jax.numpy as jnp
from jax import lax
from jax.experimental import pallas as pl
from jax.experimental.pallas import tpu as pltpu


def make_mlp_kernel(tile_b, out_dim, sub_rows):
    """Kernel factory: closes over static tile / sub-block sizes."""
    n_sub = tile_b // sub_rows

    def kernel(x_ref, w1_ref, b1_ref, w2_ref, b2_ref, w3_ref, b3_ref, o_ref):
        def compute(r0):
            # In-kernel f32 -> bf16 cast of the streamed x sub-block (VALU is idle).
            xb = x_ref[pl.ds(r0, sub_rows), :].astype(jnp.bfloat16)

            # Linear(in_dim, 64) + ReLU (f32 accumulate on the MXU).
            h1 = jnp.dot(xb, w1_ref[...], preferred_element_type=jnp.float32)
            h1 = jnp.maximum(h1 + b1_ref[...], 0.0).astype(jnp.bfloat16)

            # Linear(64, 32) + ReLU.
            h2 = jnp.dot(h1, w2_ref[...], preferred_element_type=jnp.float32)
            h2 = jnp.maximum(h2 + b2_ref[...], 0.0).astype(jnp.bfloat16)

            # Dropout(p=0.5): identity in eval mode.

            # Linear(32, out_dim).
            logits = jnp.dot(h2, w3_ref[...],
                             preferred_element_type=jnp.float32) + b3_ref[...]

            if out_dim == 2:
                # 2-class softmax == sigmoid of the logit difference: no XLU
                # cross-lane max/sum, no divide; p0 + p1 == 1 by construction.
                d = logits[:, 1:2] - logits[:, 0:1]            # [sub, 1]
                d = jnp.clip(d, -30.0, 30.0)                   # avoid exp overflow
                p1 = pl.reciprocal(1.0 + jnp.exp(-d), approx=True)  # EUP exp + rcp
                col = lax.broadcasted_iota(jnp.int32, logits.shape, 1)
                probs = jnp.where(col == 1, p1, 1.0 - p1)
            else:
                # Generic numerically-stable softmax over the feature axis.
                m = jnp.max(logits, axis=-1, keepdims=True)
                e = jnp.exp(logits - m)
                probs = e * pl.reciprocal(jnp.sum(e, axis=-1, keepdims=True),
                                          approx=True)

            o_ref[pl.ds(r0, sub_rows), :] = probs.astype(o_ref.dtype)

        if n_sub == 1:
            compute(0)
        else:
            def body(s, carry):
                compute(pl.multiple_of(s * sub_rows, sub_rows))
                return carry
            lax.fori_loop(0, n_sub, body, 0, unroll=(n_sub <= 8))

    return kernel


def _select_tiling(B, in_dim):
    """Pick (tile_b, vmem_ceiling_bytes) from the chip generation's VMEM size."""
    vmem_cap = 64 << 20  # conservative default (v7x per-TC VMEM)
    try:
        info = pltpu.get_tpu_info()
        vmem_cap = int(getattr(info, "vmem_capacity_bytes", vmem_cap))
    except Exception:
        pass

    if vmem_cap >= (100 << 20):          # v5e / v6e: 128 MiB physical VMEM
        vmem_ceiling = 100 << 20
        target_x_tile_bytes = 32 << 20   # ~2048 rows at in_dim=4096 (f32 stream)
    else:                                # v7x: 64 MiB per TensorCore
        vmem_ceiling = 56 << 20          # leave headroom for compiler scratch
        target_x_tile_bytes = 16 << 20   # ~1024 rows at in_dim=4096 (f32 stream)

    tile_b = max(16, target_x_tile_bytes // (in_dim * 4))
    # >= 2 grid steps so the "parallel" batch axis can shard across both v7x TCs.
    half_b = -(-B // 2)
    half_b = -(-half_b // 16) * 16
    tile_b = min(tile_b, half_b)
    # Multiple of 16 rows: full bf16 sublane packing (matters most on v5e).
    tile_b = max(16, (tile_b // 16) * 16)
    return int(tile_b), int(vmem_ceiling)


def mlp_net_forward(x, params, *, tile_b=None):
    """x: [B, in_dim] float32. params: dict of transposed weights/biases."""
    B, in_dim = x.shape
    w1, b1 = params["w1"], params["b1"]   # [in_dim, 64], [1, 64]
    w2, b2 = params["w2"], params["b2"]   # [64, 32],     [1, 32]
    w3, b3 = params["w3"], params["b3"]   # [32, out],    [1, out]
    out_dim = w3.shape[1]

    auto_tile_b, vmem_ceiling = _select_tiling(B, in_dim)
    if tile_b is None:
        tile_b = auto_tile_b
    else:
        tile_b = max(16, (int(tile_b) // 16) * 16)

    # Weights are tiny and read once: bf16 them in the wrapper. Biases stay f32.
    # x is NOT touched here (no wrapper cast/pad pass on the dominant operand).
    w1b = w1.astype(jnp.bfloat16)
    w2b = w2.astype(jnp.bfloat16)
    w3b = w3.astype(jnp.bfloat16)

    n_tiles = pl.cdiv(B, tile_b)
    b_pad = n_tiles * tile_b
    # Ragged-batch fallback only (demo shapes divide evenly -> no extra pass).
    x_in = x if b_pad == B else jnp.pad(x, ((0, b_pad - B), (0, 0)))

    # Sub-block the compute so f32 intermediates stay vreg-sized.
    if tile_b % 512 == 0:
        sub_rows = 512
    elif tile_b % 256 == 0:
        sub_rows = 256
    else:
        sub_rows = tile_b

    # VMEM footprint: resident (single-buffered) weights + double-buffered f32
    # x tiles + double-buffered output tiles + slack for intermediates/scratch.
    w_bytes = (w1b.size + w2b.size + w3b.size) * 2 + (b1.size + b2.size + b3.size) * 4
    x_tile_bytes = tile_b * in_dim * 4
    out_tile_bytes = tile_b * out_dim * 4
    footprint = w_bytes + 2 * x_tile_bytes + 2 * out_tile_bytes
    vmem_limit = int(min(vmem_ceiling, max(32 << 20, footprint + (8 << 20))))

    cost = pl.CostEstimate(
        flops=2 * b_pad * (in_dim * 64 + 64 * 32 + 32 * out_dim),
        transcendentals=b_pad * (1 if out_dim == 2 else out_dim),
        bytes_accessed=b_pad * in_dim * 4 + w_bytes + b_pad * out_dim * 4,
    )

    kernel = make_mlp_kernel(tile_b, out_dim, sub_rows)
    const2d = lambda i: (0, 0)   # weights/biases: same block every step -> resident

    def run(single_buffer_weights):
        extra = {"pipeline_mode": pl.Buffered(1)} if single_buffer_weights else {}
        resident = lambda shape: pl.BlockSpec(shape, const2d, **extra)
        return pl.pallas_call(
            kernel,
            out_shape=jax.ShapeDtypeStruct((b_pad, out_dim), jnp.float32),
            grid=(n_tiles,),
            in_specs=[
                pl.BlockSpec((tile_b, in_dim), lambda i: (i, 0)),  # streamed f32 x
                resident(w1b.shape),
                resident(b1.shape),
                resident(w2b.shape),
                resident(b2.shape),
                resident(w3b.shape),
                resident(b3.shape),
            ],
            out_specs=pl.BlockSpec((tile_b, out_dim), lambda i: (i, 0)),
            compiler_params=pltpu.CompilerParams(
                dimension_semantics=("parallel",),
                vmem_limit_bytes=vmem_limit,
            ),
            cost_estimate=cost,
        )(x_in, w1b, b1, w2b, b2, w3b, b3)

    try:
        out = run(True)
    except Exception:
        # Robustness fallback: identical kernel, default (double) weight buffers.
        out = run(False)

    return out if b_pad == B else out[:B]


def init_params(key, in_dim, out_dim):
    """Deterministic synthetic parameters (PyTorch-Linear-like uniform init)."""
    ks = jax.random.split(key, 6)

    def linear(kw, kb, fan_in, fan_out):
        bound = 1.0 / (fan_in ** 0.5)
        # Stored transposed: [fan_in, fan_out] so the kernel does x @ W.
        w = jax.random.uniform(kw, (fan_in, fan_out), jnp.float32, -bound, bound)
        b = jax.random.uniform(kb, (1, fan_out), jnp.float32, -bound, bound)
        return w, b

    w1, b1 = linear(ks[0], ks[1], in_dim, 64)
    w2, b2 = linear(ks[2], ks[3], 64, 32)
    w3, b3 = linear(ks[4], ks[5], 32, out_dim)
    return {"w1": w1, "b1": b1, "w2": w2, "b2": b2, "w3": w3, "b3": b3}


if __name__ == "__main__":
    key = jax.random.PRNGKey(0)
    k_x, k_p = jax.random.split(key)

    # Small demo shapes consistent with the module (default in_dim=4096 shrunk).
    B, in_dim, out_dim = 256, 512, 2

    x = jax.random.normal(k_x, (B, in_dim), dtype=jnp.float32)
    params = init_params(k_p, in_dim, out_dim)

    out = mlp_net_forward(x, params)          # auto tile: >=2 grid steps, VMEM-sized
    out = jax.block_until_ready(out)

    # Sanity: shape + softmax rows sum to 1.
    assert out.shape == (B, out_dim)
    assert bool(jnp.allclose(jnp.sum(out, axis=1), 1.0, atol=1e-5))

    # Cross-check against a pure-JAX reference mirroring the bf16 operand casts.
    def ref(x, p):
        f32 = lambda a: a.astype(jnp.bfloat16).astype(jnp.float32)
        h1 = jnp.maximum(f32(x) @ f32(p["w1"]) + p["b1"], 0.0)
        h2 = jnp.maximum(f32(h1) @ f32(p["w2"]) + p["b2"], 0.0)
        logits = f32(h2) @ f32(p["w3"]) + p["b3"]
        return jax.nn.softmax(logits, axis=1)

    assert bool(jnp.allclose(out, ref(x, params), atol=5e-3))

    print("KERNEL_OK")
</pallas_src>

<mosaic_0001>
module attributes {stable_mosaic.version = 11 : i64} {
  func.func @kernel(%arg0: i32, %arg1: memref<128x512xf32, #tpu.memory_space<vmem>>, %arg2: memref<512x64xbf16, #tpu.memory_space<vmem>>, %arg3: memref<1x64xf32, #tpu.memory_space<vmem>>, %arg4: memref<64x32xbf16, #tpu.memory_space<vmem>>, %arg5: memref<1x32xf32, #tpu.memory_space<vmem>>, %arg6: memref<32x2xbf16, #tpu.memory_space<vmem>>, %arg7: memref<1x2xf32, #tpu.memory_space<vmem>>, %arg8: memref<128x2xf32, #tpu.memory_space<vmem>>) attributes {dimension_semantics = [#tpu.dimension_semantics<parallel>], iteration_bounds = array<i64: 2>, scalar_prefetch = 0 : i64, scratch_operands = 0 : i64, tpu.core_type = #tpu.core_type<tc>, window_params = [{transform_indices = @transform_0, window_bounds = array<i64: 128, 512>}, {pipeline_mode = #tpu.pipeline_mode<synchronous>, transform_indices = @transform_1, window_bounds = array<i64: 512, 64>}, {pipeline_mode = #tpu.pipeline_mode<synchronous>, transform_indices = @transform_2, window_bounds = array<i64: 1, 64>}, {pipeline_mode = #tpu.pipeline_mode<synchronous>, transform_indices = @transform_3, window_bounds = array<i64: 64, 32>}, {pipeline_mode = #tpu.pipeline_mode<synchronous>, transform_indices = @transform_4, window_bounds = array<i64: 1, 32>}, {pipeline_mode = #tpu.pipeline_mode<synchronous>, transform_indices = @transform_5, window_bounds = array<i64: 32, 2>}, {pipeline_mode = #tpu.pipeline_mode<synchronous>, transform_indices = @transform_6, window_bounds = array<i64: 1, 2>}, {transform_indices = @transform_7, window_bounds = array<i64: 128, 2>}]} {
    %c0 = arith.constant 0 : index
    %c0_0 = arith.constant 0 : index
    %0 = vector.load %arg1[%c0, %c0_0] : memref<128x512xf32, #tpu.memory_space<vmem>>, vector<128x512xf32>
    %1 = arith.truncf %0 : vector<128x512xf32> to vector<128x512xbf16>
    %c0_1 = arith.constant 0 : index
    %c0_2 = arith.constant 0 : index
    %2 = vector.load %arg2[%c0_1, %c0_2] : memref<512x64xbf16, #tpu.memory_space<vmem>>, vector<512x64xbf16>
    %cst = arith.constant dense<0.000000e+00> : vector<128x64xf32>
    %3 = tpu.matmul %1, %2, %cst {dimension_numbers = #tpu.dot_dimension_numbers<[1], [0], [0], [1], [0, 0, 1, 1], [], []>} : vector<128x512xbf16>, vector<512x64xbf16>, vector<128x64xf32> -> vector<128x64xf32>
    %c0_3 = arith.constant 0 : index
    %c0_4 = arith.constant 0 : index
    %4 = vector.load %arg3[%c0_3, %c0_4] : memref<1x64xf32, #tpu.memory_space<vmem>>, vector<1x64xf32>
    %5 = vector.broadcast %4 : vector<1x64xf32> to vector<128x64xf32>
    %6 = arith.addf %3, %5 : vector<128x64xf32>
    %cst_5 = arith.constant 0.000000e+00 : f32
    %7 = vector.broadcast %cst_5 : f32 to vector<128x64xf32>
    %8 = arith.maximumf %6, %7 : vector<128x64xf32>
    %9 = arith.truncf %8 : vector<128x64xf32> to vector<128x64xbf16>
    %c0_6 = arith.constant 0 : index
    %c0_7 = arith.constant 0 : index
    %10 = vector.load %arg4[%c0_6, %c0_7] : memref<64x32xbf16, #tpu.memory_space<vmem>>, vector<64x32xbf16>
    %cst_8 = arith.constant dense<0.000000e+00> : vector<128x32xf32>
    %11 = tpu.matmul %9, %10, %cst_8 {dimension_numbers = #tpu.dot_dimension_numbers<[1], [0], [0], [1], [0, 0, 1, 1], [], []>} : vector<128x64xbf16>, vector<64x32xbf16>, vector<128x32xf32> -> vector<128x32xf32>
    %c0_9 = arith.constant 0 : index
    %c0_10 = arith.constant 0 : index
    %12 = vector.load %arg5[%c0_9, %c0_10] : memref<1x32xf32, #tpu.memory_space<vmem>>, vector<1x32xf32>
    %13 = vector.broadcast %12 : vector<1x32xf32> to vector<128x32xf32>
    %14 = arith.addf %11, %13 : vector<128x32xf32>
    %cst_11 = arith.constant 0.000000e+00 : f32
    %15 = vector.broadcast %cst_11 : f32 to vector<128x32xf32>
    %16 = arith.maximumf %14, %15 : vector<128x32xf32>
    %17 = arith.truncf %16 : vector<128x32xf32> to vector<128x32xbf16>
    %c0_12 = arith.constant 0 : index
    %c0_13 = arith.constant 0 : index
    %18 = vector.load %arg6[%c0_12, %c0_13] : memref<32x2xbf16, #tpu.memory_space<vmem>>, vector<32x2xbf16>
    %cst_14 = arith.constant dense<0.000000e+00> : vector<128x2xf32>
    %19 = tpu.matmul %17, %18, %cst_14 {dimension_numbers = #tpu.dot_dimension_numbers<[1], [0], [0], [1], [0, 0, 1, 1], [], []>} : vector<128x32xbf16>, vector<32x2xbf16>, vector<128x2xf32> -> vector<128x2xf32>
    %c0_15 = arith.constant 0 : index
    %c0_16 = arith.constant 0 : index
    %20 = vector.load %arg7[%c0_15, %c0_16] : memref<1x2xf32, #tpu.memory_space<vmem>>, vector<1x2xf32>
    %21 = vector.broadcast %20 : vector<1x2xf32> to vector<128x2xf32>
    %22 = arith.addf %19, %21 : vector<128x2xf32>
    %23 = vector.extract_strided_slice %22 {offsets = [0, 1], sizes = [128, 1], strides = [1, 1]} : vector<128x2xf32> to vector<128x1xf32>
    %24 = vector.extract_strided_slice %22 {offsets = [0, 0], sizes = [128, 1], strides = [1, 1]} : vector<128x2xf32> to vector<128x1xf32>
    %25 = arith.subf %23, %24 : vector<128x1xf32>
    %cst_17 = arith.constant -3.000000e+01 : f32
    %cst_18 = arith.constant 3.000000e+01 : f32
    %26 = vector.broadcast %cst_17 : f32 to vector<128x1xf32>
    %27 = arith.maximumf %26, %25 : vector<128x1xf32>
    %28 = vector.broadcast %cst_18 : f32 to vector<128x1xf32>
    %29 = arith.minimumf %28, %27 : vector<128x1xf32>
    %cst_19 = arith.constant 0.000000e+00 : f32
    %30 = vector.broadcast %cst_19 : f32 to vector<128x1xf32>
    %31 = arith.subf %30, %29 : vector<128x1xf32>
    %32 = math.exp %31 : vector<128x1xf32>
    %cst_20 = arith.constant 1.000000e+00 : f32
    %33 = vector.broadcast %cst_20 : f32 to vector<128x1xf32>
    %34 = arith.addf %33, %32 : vector<128x1xf32>
    %35 = tpu.reciprocal %34 {approx = true} : vector<128x1xf32> -> vector<128x1xf32>
    %36 = tpu.iota {dimensions = array<i32: 1>} : vector<128x2xi32>
    %c1_i32 = arith.constant 1 : i32
    %37 = vector.broadcast %c1_i32 : i32 to vector<128x2xi32>
    %38 = arith.cmpi eq, %36, %37 : vector<128x2xi32>
    %cst_21 = arith.constant 1.000000e+00 : f32
    %39 = vector.broadcast %cst_21 : f32 to vector<128x1xf32>
    %40 = arith.subf %39, %35 : vector<128x1xf32>
    %41 = vector.shape_cast %35 : vector<128x1xf32> to vector<128x1xf32>
    %42 = vector.broadcast %41 : vector<128x1xf32> to vector<128x2xf32>
    %43 = vector.shape_cast %40 : vector<128x1xf32> to vector<128x1xf32>
    %44 = vector.broadcast %43 : vector<128x1xf32> to vector<128x2xf32>
    %45 = arith.select %38, %42, %44 : vector<128x2xi1>, vector<128x2xf32>
    %c0_22 = arith.constant 0 : index
    %c0_23 = arith.constant 0 : index
    %46 = vector.load %arg8[%c0_22, %c0_23] : memref<128x2xf32, #tpu.memory_space<vmem>>, vector<128x2xf32>
    tpu.vector_store %arg8[%c0_22, %c0_23], %45 {strides = array<i32>} : memref<128x2xf32, #tpu.memory_space<vmem>>, vector<128x2xf32>,
    return
  }
  func.func @transform_0(%arg0: i32) -> (i32, i32) {
    %c0_i32 = arith.constant 0 : i32
    %c0_i32_0 = arith.constant 0 : i32
    return %arg0, %c0_i32 : i32, i32
  }
  func.func @transform_1(%arg0: i32) -> (i32, i32) {
    %c0_i32 = arith.constant 0 : i32
    %c0_i32_0 = arith.constant 0 : i32
    %c0_i32_1 = arith.constant 0 : i32
    return %c0_i32, %c0_i32_0 : i32, i32
  }
  func.func @transform_2(%arg0: i32) -> (i32, i32) {
    %c0_i32 = arith.constant 0 : i32
    %c0_i32_0 = arith.constant 0 : i32
    %c0_i32_1 = arith.constant 0 : i32
    return %c0_i32, %c0_i32_0 : i32, i32
  }
  func.func @transform_3(%arg0: i32) -> (i32, i32) {
    %c0_i32 = arith.constant 0 : i32
    %c0_i32_0 = arith.constant 0 : i32
    %c0_i32_1 = arith.constant 0 : i32
    return %c0_i32, %c0_i32_0 : i32, i32
  }
  func.func @transform_4(%arg0: i32) -> (i32, i32) {
    %c0_i32 = arith.constant 0 : i32
    %c0_i32_0 = arith.constant 0 : i32
    %c0_i32_1 = arith.constant 0 : i32
    return %c0_i32, %c0_i32_0 : i32, i32
  }
  func.func @transform_5(%arg0: i32) -> (i32, i32) {
    %c0_i32 = arith.constant 0 : i32
    %c0_i32_0 = arith.constant 0 : i32
    %c0_i32_1 = arith.constant 0 : i32
    return %c0_i32, %c0_i32_0 : i32, i32
  }
  func.func @transform_6(%arg0: i32) -> (i32, i32) {
    %c0_i32 = arith.constant 0 : i32
    %c0_i32_0 = arith.constant 0 : i32
    %c0_i32_1 = arith.constant 0 : i32
    return %c0_i32, %c0_i32_0 : i32, i32
  }
  func.func @transform_7(%arg0: i32) -> (i32, i32) {
    %c0_i32 = arith.constant 0 : i32
    %c0_i32_0 = arith.constant 0 : i32
    return %arg0, %c0_i32 : i32, i32
  }
}

module attributes {stable_mosaic.version = 11 : i64} {
  func.func @kernel(%arg0: i32, %arg1: memref<128x512xf32, #tpu.memory_space<vmem>>, %arg2: memref<512x64xbf16, #tpu.memory_space<vmem>>, %arg3: memref<1x64xf32, #tpu.memory_space<vmem>>, %arg4: memref<64x32xbf16, #tpu.memory_space<vmem>>, %arg5: memref<1x32xf32, #tpu.memory_space<vmem>>, %arg6: memref<32x2xbf16, #tpu.memory_space<vmem>>, %arg7: memref<1x2xf32, #tpu.memory_space<vmem>>, %arg8: memref<128x2xf32, #tpu.memory_space<vmem>>) attributes {dimension_semantics = [#tpu.dimension_semantics<parallel>], iteration_bounds = array<i64: 2>, scalar_prefetch = 0 : i64, scratch_operands = 0 : i64, tpu.core_type = #tpu.core_type<tc>, window_params = [{transform_indices = @transform_0, window_bounds = array<i64: 128, 512>}, {pipeline_mode = #tpu.pipeline_mode<synchronous>, transform_indices = @transform_1, window_bounds = array<i64: 512, 64>}, {pipeline_mode = #tpu.pipeline_mode<synchronous>, transform_indices = @transform_2, window_bounds = array<i64: 1, 64>}, {pipeline_mode = #tpu.pipeline_mode<synchronous>, transform_indices = @transform_3, window_bounds = array<i64: 64, 32>}, {pipeline_mode = #tpu.pipeline_mode<synchronous>, transform_indices = @transform_4, window_bounds = array<i64: 1, 32>}, {pipeline_mode = #tpu.pipeline_mode<synchronous>, transform_indices = @transform_5, window_bounds = array<i64: 32, 2>}, {pipeline_mode = #tpu.pipeline_mode<synchronous>, transform_indices = @transform_6, window_bounds = array<i64: 1, 2>}, {transform_indices = @transform_7, window_bounds = array<i64: 128, 2>}]} {
    %c0 = arith.constant 0 : index
    %c0_0 = arith.constant 0 : index
    %0 = vector.load %arg1[%c0, %c0_0] : memref<128x512xf32, #tpu.memory_space<vmem>>, vector<128x512xf32>
    %1 = arith.truncf %0 : vector<128x512xf32> to vector<128x512xbf16>
    %c0_1 = arith.constant 0 : index
    %c0_2 = arith.constant 0 : index
    %2 = vector.load %arg2[%c0_1, %c0_2] : memref<512x64xbf16, #tpu.memory_space<vmem>>, vector<512x64xbf16>
    %cst = arith.constant dense<0.000000e+00> : vector<128x64xf32>
    %3 = tpu.matmul %1, %2, %cst {dimension_numbers = #tpu.dot_dimension_numbers<[1], [0], [0], [1], [0, 0, 1, 1], [], []>} : vector<128x512xbf16>, vector<512x64xbf16>, vector<128x64xf32> -> vector<128x64xf32>
    %c0_3 = arith.constant 0 : index
    %c0_4 = arith.constant 0 : index
    %4 = vector.load %arg3[%c0_3, %c0_4] : memref<1x64xf32, #tpu.memory_space<vmem>>, vector<1x64xf32>
    %5 = vector.broadcast %4 : vector<1x64xf32> to vector<128x64xf32>
    %6 = arith.addf %3, %5 : vector<128x64xf32>
    %cst_5 = arith.constant 0.000000e+00 : f32
    %7 = vector.broadcast %cst_5 : f32 to vector<128x64xf32>
    %8 = arith.maximumf %6, %7 : vector<128x64xf32>
    %9 = arith.truncf %8 : vector<128x64xf32> to vector<128x64xbf16>
    %c0_6 = arith.constant 0 : index
    %c0_7 = arith.constant 0 : index
    %10 = vector.load %arg4[%c0_6, %c0_7] : memref<64x32xbf16, #tpu.memory_space<vmem>>, vector<64x32xbf16>
    %cst_8 = arith.constant dense<0.000000e+00> : vector<128x32xf32>
    %11 = tpu.matmul %9, %10, %cst_8 {dimension_numbers = #tpu.dot_dimension_numbers<[1], [0], [0], [1], [0, 0, 1, 1], [], []>} : vector<128x64xbf16>, vector<64x32xbf16>, vector<128x32xf32> -> vector<128x32xf32>
    %c0_9 = arith.constant 0 : index
    %c0_10 = arith.constant 0 : index
    %12 = vector.load %arg5[%c0_9, %c0_10] : memref<1x32xf32, #tpu.memory_space<vmem>>, vector<1x32xf32>
    %13 = vector.broadcast %12 : vector<1x32xf32> to vector<128x32xf32>
    %14 = arith.addf %11, %13 : vector<128x32xf32>
    %cst_11 = arith.constant 0.000000e+00 : f32
    %15 = vector.broadcast %cst_11 : f32 to vector<128x32xf32>
    %16 = arith.maximumf %14, %15 : vector<128x32xf32>
    %17 = arith.truncf %16 : vector<128x32xf32> to vector<128x32xbf16>
    %c0_12 = arith.constant 0 : index
    %c0_13 = arith.constant 0 : index
    %18 = vector.load %arg6[%c0_12, %c0_13] : memref<32x2xbf16, #tpu.memory_space<vmem>>, vector<32x2xbf16>
    %cst_14 = arith.constant dense<0.000000e+00> : vector<128x2xf32>
    %19 = tpu.matmul %17, %18, %cst_14 {dimension_numbers = #tpu.dot_dimension_numbers<[1], [0], [0], [1], [0, 0, 1, 1], [], []>} : vector<128x32xbf16>, vector<32x2xbf16>, vector<128x2xf32> -> vector<128x2xf32>
    %c0_15 = arith.constant 0 : index
    %c0_16 = arith.constant 0 : index
    %20 = vector.load %arg7[%c0_15, %c0_16] : memref<1x2xf32, #tpu.memory_space<vmem>>, vector<1x2xf32>
    %21 = vector.broadcast %20 : vector<1x2xf32> to vector<128x2xf32>
    %22 = arith.addf %19, %21 : vector<128x2xf32>
    %23 = vector.extract_strided_slice %22 {offsets = [0, 1], sizes = [128, 1], strides = [1, 1]} : vector<128x2xf32> to vector<128x1xf32>
    %24 = vector.extract_strided_slice %22 {offsets = [0, 0], sizes = [128, 1], strides = [1, 1]} : vector<128x2xf32> to vector<128x1xf32>
    %25 = arith.subf %23, %24 : vector<128x1xf32>
    %cst_17 = arith.constant -3.000000e+01 : f32
    %cst_18 = arith.constant 3.000000e+01 : f32
    %26 = vector.broadcast %cst_17 : f32 to vector<128x1xf32>
    %27 = arith.maximumf %26, %25 : vector<128x1xf32>
    %28 = vector.broadcast %cst_18 : f32 to vector<128x1xf32>
    %29 = arith.minimumf %28, %27 : vector<128x1xf32>
    %cst_19 = arith.constant 0.000000e+00 : f32
    %30 = vector.broadcast %cst_19 : f32 to vector<128x1xf32>
    %31 = arith.subf %30, %29 : vector<128x1xf32>
    %32 = math.exp %31 : vector<128x1xf32>
    %cst_20 = arith.constant 1.000000e+00 : f32
    %33 = vector.broadcast %cst_20 : f32 to vector<128x1xf32>
    %34 = arith.addf %33, %32 : vector<128x1xf32>
    %35 = tpu.reciprocal %34 {approx = true} : vector<128x1xf32> -> vector<128x1xf32>
    %36 = tpu.iota {dimensions = array<i32: 1>} : vector<128x2xi32>
    %c1_i32 = arith.constant 1 : i32
    %37 = vector.broadcast %c1_i32 : i32 to vector<128x2xi32>
    %38 = arith.cmpi eq, %36, %37 : vector<128x2xi32>
    %cst_21 = arith.constant 1.000000e+00 : f32
    %39 = vector.broadcast %cst_21 : f32 to vector<128x1xf32>
    %40 = arith.subf %39, %35 : vector<128x1xf32>
    %41 = vector.shape_cast %35 : vector<128x1xf32> to vector<128x1xf32>
    %42 = vector.broadcast %41 : vector<128x1xf32> to vector<128x2xf32>
    %43 = vector.shape_cast %40 : vector<128x1xf32> to vector<128x1xf32>
    %44 = vector.broadcast %43 : vector<128x1xf32> to vector<128x2xf32>
    %45 = arith.select %38, %42, %44 : vector<128x2xi1>, vector<128x2xf32>
    %c0_22 = arith.constant 0 : index
    %c0_23 = arith.constant 0 : index
    %46 = vector.load %arg8[%c0_22, %c0_23] : memref<128x2xf32, #tpu.memory_space<vmem>>, vector<128x2xf32>
    tpu.vector_store %arg8[%c0_22, %c0_23], %45 {strides = array<i32>} : memref<128x2xf32, #tpu.memory_space<vmem>>, vector<128x2xf32>,
    return
  }
  func.func @transform_0(%arg0: i32) -> (i32, i32) {
    %c0_i32 = arith.constant 0 : i32
    %c0_i32_0 = arith.constant 0 : i32
    return %arg0, %c0_i32 : i32, i32
  }
  func.func @transform_1(%arg0: i32) -> (i32, i32) {
    %c0_i32 = arith.constant 0 : i32
    %c0_i32_0 = arith.constant 0 : i32
    %c0_i32_1 = arith.constant 0 : i32
    return %c0_i32, %c0_i32_0 : i32, i32
  }
  func.func @transform_2(%arg0: i32) -> (i32, i32) {
    %c0_i32 = arith.constant 0 : i32
    %c0_i32_0 = arith.constant 0 : i32
    %c0_i32_1 = arith.constant 0 : i32
    return %c0_i32, %c0_i32_0 : i32, i32
  }
  func.func @transform_3(%arg0: i32) -> (i32, i32) {
    %c0_i32 = arith.constant 0 : i32
    %c0_i32_0 = arith.constant 0 : i32
    %c0_i32_1 = arith.constant 0 : i32
    return %c0_i32, %c0_i32_0 : i32, i32
  }
  func.func @transform_4(%arg0: i32) -> (i32, i32) {
    %c0_i32 = arith.constant 0 : i32
    %c0_i32_0 = arith.constant 0 : i32
    %c0_i32_1 = arith.constant 0 : i32
    return %c0_i32, %c0_i32_0 : i32, i32
  }
  func.func @transform_5(%arg0: i32) -> (i32, i32) {
    %c0_i32 = arith.constant 0 : i32
    %c0_i32_0 = arith.constant 0 : i32
    %c0_i32_1 = arith.constant 0 : i32
    return %c0_i32, %c0_i32_0 : i32, i32
  }
  func.func @transform_6(%arg0: i32) -> (i32, i32) {
    %c0_i32 = arith.constant 0 : i32
    %c0_i32_0 = arith.constant 0 : i32
    %c0_i32_1 = arith.constant 0 : i32
    return %c0_i32, %c0_i32_0 : i32, i32
  }
  func.func @transform_7(%arg0: i32) -> (i32, i32) {
    %c0_i32 = arith.constant 0 : i32
    %c0_i32_0 = arith.constant 0 : i32
    return %arg0, %c0_i32 : i32, i32
  }
}

</mosaic_0001>

<llo_original>
// kernel: tpu_custom_call.1
$region0: #{tpu_custom_call.1}
  #allocation0 [shape = 'u32[]', space=smem, size = 0x4, offset = 0x4, fixed_abs, tag = 'smem constant byte address 0x4 - core index']
  #allocation1 [shape = 'u32[144,128]{1,0:T(1,128)}', space=vmem, size = 0x12000, scoped, tag = 'internal scratch']
  %s0 = inlined_call_operand.hbm [shape: f32[256,512], index: 0, kind: input, shape index: {}]
  %s1 = inlined_call_operand.vmem [shape: bf16[512,64], index: 1, kind: input, shape index: {}]
  %s2 = inlined_call_operand.vmem [shape: f32[1,64], index: 2, kind: input, shape index: {}]
  %s3 = inlined_call_operand.vmem [shape: bf16[64,32], index: 3, kind: input, shape index: {}]
  %s4 = inlined_call_operand.vmem [shape: f32[1,32], index: 4, kind: input, shape index: {}]
  %s5 = inlined_call_operand.vmem [shape: bf16[32,2], index: 5, kind: input, shape index: {}]
  %s6 = inlined_call_operand.vmem [shape: f32[1,2], index: 6, kind: input, shape index: {}]
  %s7 = inlined_call_operand.vmem [shape: f32[256,2], index: 7, kind: output, shape index: {}]
  %s8 = sld [smem:[#allocation0]]
  $region65: #{tpu_custom_call.1} parent=0
    _
  %s10 = ssub.s32 1, %s8
  %s11 = scalar_select 0, %s10, %s8
  $region1: #{tpu_custom_call.1} parent=0
    #allocation2 [shape = 'u8[524288]{0}', space=vmem, size = 0x80000, scoped, tag = 'input window, operand 0']
    #allocation3 [shape = 's32[2]{0}', space=sflag, size = 0x8, scoped, tag = 'scoped memory for tpu_custom_call.1']
    %12 = vsyncpa [#allocation3], 0
    %s13 = scalar_lea.sflag [#allocation3], 1
    %14 = vsyncpa %s13, 0
    loop: start=0, step=1, limit=4
    $region2: #{tpu_custom_call.1} parent=1 // loop_pre_header
      _
    $region3: #{tpu_custom_call.1} parent=1 // loop_header
      %s16 = sphi 0, %s20
      %p17 = scmp.ge.s32.totalorder %s16, 4
      %s26 = sphi 0, %s28
      %s29 = sphi 0, %s26
      %s30 = sphi 0, %s29
      %s46 = sphi 0, %s30
      %s50 = sphi 0, %s50
      %s52 = sphi 0, %s50
      %s53 = sphi 0, %s52
      %s67 = sphi 0, %s53
      %s71 = sphi 0, %s71
      %s73 = sphi 0, %s71
      %s74 = sphi 0, %s73
      %s88 = sphi 0, %s74
      %s92 = sphi 0, %s92
      %s94 = sphi 0, %s92
      %s95 = sphi 0, %s94
      %s109 = sphi 0, %s95
      %s113 = sphi 0, %s113
      %s115 = sphi 0, %s113
      %s116 = sphi 0, %s115
      %s130 = sphi 0, %s116
      %s134 = sphi 0, %s134
      %s136 = sphi 0, %s134
      %s137 = sphi 0, %s136
      %s151 = sphi 0, %s137
      %s155 = sphi 0, %s155
      %s157 = sphi 0, %s155
      %s158 = sphi 0, %s157
      %s172 = sphi 0, %s158
      %s178 = sphi 0, %s180
      %s181 = sphi 0, %s178
      %s182 = sphi 0, %s181
      %s198 = sphi 0, %s182
    $region4: #{tpu_custom_call.1} parent=1 // loop_header_branch
      %19 = sbr.rel (%p17) target = $region8
    $region5: #{tpu_custom_call.1} parent=1 // loop_body
      %s21 = ssub.s32 %s16, 1
      %s22 = ssub.s32 %s16, 2
      %s23 = sadd.s32 %s16, 1
      %s24 = ssub.s32 %s16, %s23
      %p25 = scmp.eq.s32.totalorder %s24, 0
      %s27 = sadd.s32 %s26, 1
      %s28 = scalar_select %p25, %s26, %s27
      %p31 = pneg %p25
      %p32 = scmp.eq.s32.totalorder %s16, 1
      %p33 = por %p31, %p32
      %p34 = scmp.ne.s32.totalorder %s26, %s29
      %p35 = scmp.eq.s32.totalorder %s16, 0
      %p36 = por %p34, %p35
      %p37 = scmp.ne.s32.totalorder %s26, %s29
      %p38 = scmp.eq.s32.totalorder %s21, 1
      %p39 = por %p37, %p38
      %p40 = scmp.ne.s32.totalorder %s29, %s30
      %p41 = scmp.eq.s32.totalorder %s21, 0
      %p42 = por %p40, %p41
      %p43 = scmp.ne.s32.totalorder %s29, %s30
      %p44 = scmp.eq.s32.totalorder %s22, 1
      %p45 = por %p43, %p44
      %p47 = scmp.ne.s32.totalorder %s30, %s46
      %p48 = scmp.eq.s32.totalorder %s22, 0
      %p49 = por %p47, %p48
      %s51 = sadd.s32 %s50, 1
      %p54 = scmp.eq.s32.totalorder %s16, 1
      %p55 = scmp.ne.s32.totalorder %s50, %s52
      %p56 = scmp.eq.s32.totalorder %s16, 0
      %p57 = por %p55, %p56
      %p58 = scmp.ne.s32.totalorder %s50, %s52
      %p59 = scmp.eq.s32.totalorder %s21, 1
      %p60 = por %p58, %p59
      %p61 = scmp.ne.s32.totalorder %s52, %s53
      %p62 = scmp.eq.s32.totalorder %s21, 0
      %p63 = por %p61, %p62
      %p64 = scmp.ne.s32.totalorder %s52, %s53
      %p65 = scmp.eq.s32.totalorder %s22, 1
      %p66 = por %p64, %p65
      %p68 = scmp.ne.s32.totalorder %s53, %s67
      %p69 = scmp.eq.s32.totalorder %s22, 0
      %p70 = por %p68, %p69
      %s72 = sadd.s32 %s71, 1
      %p75 = scmp.eq.s32.totalorder %s16, 1
      %p76 = scmp.ne.s32.totalorder %s71, %s73
      %p77 = scmp.eq.s32.totalorder %s16, 0
      %p78 = por %p76, %p77
      %p79 = scmp.ne.s32.totalorder %s71, %s73
      %p80 = scmp.eq.s32.totalorder %s21, 1
      %p81 = por %p79, %p80
      %p82 = scmp.ne.s32.totalorder %s73, %s74
      %p83 = scmp.eq.s32.totalorder %s21, 0
      %p84 = por %p82, %p83
      %p85 = scmp.ne.s32.totalorder %s73, %s74
      %p86 = scmp.eq.s32.totalorder %s22, 1
      %p87 = por %p85, %p86
      %p89 = scmp.ne.s32.totalorder %s74, %s88
      %p90 = scmp.eq.s32.totalorder %s22, 0
      %p91 = por %p89, %p90
      %s93 = sadd.s32 %s92, 1
      %p96 = scmp.eq.s32.totalorder %s16, 1
      %p97 = scmp.ne.s32.totalorder %s92, %s94
      %p98 = scmp.eq.s32.totalorder %s16, 0
      %p99 = por %p97, %p98
      %p100 = scmp.ne.s32.totalorder %s92, %s94
      %p101 = scmp.eq.s32.totalorder %s21, 1
      %p102 = por %p100, %p101
      %p103 = scmp.ne.s32.totalorder %s94, %s95
      %p104 = scmp.eq.s32.totalorder %s21, 0
      %p105 = por %p103, %p104
      %p106 = scmp.ne.s32.totalorder %s94, %s95
      %p107 = scmp.eq.s32.totalorder %s22, 1
      %p108 = por %p106, %p107
      %p110 = scmp.ne.s32.totalorder %s95, %s109
      %p111 = scmp.eq.s32.totalorder %s22, 0
      %p112 = por %p110, %p111
      %s114 = sadd.s32 %s113, 1
      %p117 = scmp.eq.s32.totalorder %s16, 1
      %p118 = scmp.ne.s32.totalorder %s113, %s115
      %p119 = scmp.eq.s32.totalorder %s16, 0
      %p120 = por %p118, %p119
      %p121 = scmp.ne.s32.totalorder %s113, %s115
      %p122 = scmp.eq.s32.totalorder %s21, 1
      %p123 = por %p121, %p122
      %p124 = scmp.ne.s32.totalorder %s115, %s116
      %p125 = scmp.eq.s32.totalorder %s21, 0
      %p126 = por %p124, %p125
      %p127 = scmp.ne.s32.totalorder %s115, %s116
      %p128 = scmp.eq.s32.totalorder %s22, 1
      %p129 = por %p127, %p128
      %p131 = scmp.ne.s32.totalorder %s116, %s130
      %p132 = scmp.eq.s32.totalorder %s22, 0
      %p133 = por %p131, %p132
      %s135 = sadd.s32 %s134, 1
      %p138 = scmp.eq.s32.totalorder %s16, 1
      %p139 = scmp.ne.s32.totalorder %s134, %s136
      %p140 = scmp.eq.s32.totalorder %s16, 0
      %p141 = por %p139, %p140
      %p142 = scmp.ne.s32.totalorder %s134, %s136
      %p143 = scmp.eq.s32.totalorder %s21, 1
      %p144 = por %p142, %p143
      %p145 = scmp.ne.s32.totalorder %s136, %s137
      %p146 = scmp.eq.s32.totalorder %s21, 0
      %p147 = por %p145, %p146
      %p148 = scmp.ne.s32.totalorder %s136, %s137
      %p149 = scmp.eq.s32.totalorder %s22, 1
      %p150 = por %p148, %p149
      %p152 = scmp.ne.s32.totalorder %s137, %s151
      %p153 = scmp.eq.s32.totalorder %s22, 0
      %p154 = por %p152, %p153
      %s156 = sadd.s32 %s155, 1
      %p159 = scmp.eq.s32.totalorder %s16, 1
      %p160 = scmp.ne.s32.totalorder %s155, %s157
      %p161 = scmp.eq.s32.totalorder %s16, 0
      %p162 = por %p160, %p161
      %p163 = scmp.ne.s32.totalorder %s155, %s157
      %p164 = scmp.eq.s32.totalorder %s21, 1
      %p165 = por %p163, %p164
      %p166 = scmp.ne.s32.totalorder %s157, %s158
      %p167 = scmp.eq.s32.totalorder %s21, 0
      %p168 = por %p166, %p167
      %p169 = scmp.ne.s32.totalorder %s157, %s158
      %p170 = scmp.eq.s32.totalorder %s22, 1
      %p171 = por %p169, %p170
      %p173 = scmp.ne.s32.totalorder %s158, %s172
      %p174 = scmp.eq.s32.totalorder %s22, 0
      %p175 = por %p173, %p174
      %s176 = ssub.s32 %s16, %s23
      %p177 = scmp.eq.s32.totalorder %s176, 0
      %s179 = sadd.s32 %s178, 1
      %s180 = scalar_select %p177, %s178, %s179
      %p183 = pneg %p177
      %p184 = scmp.eq.s32.totalorder %s16, 1
      %p185 = por %p183, %p184
      %p186 = scmp.ne.s32.totalorder %s178, %s181
      %p187 = scmp.eq.s32.totalorder %s16, 0
      %p188 = por %p186, %p187
      %p189 = scmp.ne.s32.totalorder %s178, %s181
      %p190 = scmp.eq.s32.totalorder %s21, 1
      %p191 = por %p189, %p190
      %p192 = scmp.ne.s32.totalorder %s181, %s182
      %p193 = scmp.eq.s32.totalorder %s21, 0
      %p194 = por %p192, %p193
      %p195 = scmp.ne.s32.totalorder %s181, %s182
      %p196 = scmp.eq.s32.totalorder %s22, 1
      %p197 = por %p195, %p196
      %p199 = scmp.ne.s32.totalorder %s182, %s198
      %p200 = scmp.eq.s32.totalorder %s22, 0
      %p201 = por %p199, %p200
      %p202 = scmp.le.s32.totalorder 1, %s16
      %p203 = scmp.lt.s32.totalorder %s16, 3
      %p204 = pnand %p202, %p203
      %p205 = pneg %p204
      // Predicated region
      $region9: #{tpu_custom_call.1} parent=5 // pred_check
        _
      $region10: #{tpu_custom_call.1} parent=5 // pred_check_branch
        %207 = sbr.rel (%p204) target = $region12
      $region11: #{tpu_custom_call.1} parent=5 // pred_region
        %s208 = ssub.s32 %s16, 1
        // Predicated region
        $region13: #{tpu_custom_call.1} parent=11 // pred_check
          %p209 = pneg %p63
        $region14: #{tpu_custom_call.1} parent=11 // pred_check_branch
          %211 = sbr.rel (%p209) target = $region16
        $region15: #{tpu_custom_call.1} parent=11 // pred_region
          _
        $region16: #{tpu_custom_call.1} parent=11 // pred_fallthru
          _
        // Predicated region
        $region17: #{tpu_custom_call.1} parent=11 // pred_check
          %p212 = pneg %p84
        $region18: #{tpu_custom_call.1} parent=11 // pred_check_branch
          %214 = sbr.rel (%p212) target = $region20
        $region19: #{tpu_custom_call.1} parent=11 // pred_region
          _
        $region20: #{tpu_custom_call.1} parent=11 // pred_fallthru
          _
        // Predicated region
        $region21: #{tpu_custom_call.1} parent=11 // pred_check
          %p215 = pneg %p105
        $region22: #{tpu_custom_call.1} parent=11 // pred_check_branch
          %217 = sbr.rel (%p215) target = $region24
        $region23: #{tpu_custom_call.1} parent=11 // pred_region
          _
        $region24: #{tpu_custom_call.1} parent=11 // pred_fallthru
          _
        // Predicated region
        $region25: #{tpu_custom_call.1} parent=11 // pred_check
          %p218 = pneg %p126
        $region26: #{tpu_custom_call.1} parent=11 // pred_check_branch
          %220 = sbr.rel (%p218) target = $region28
        $region27: #{tpu_custom_call.1} parent=11 // pred_region
          _
        $region28: #{tpu_custom_call.1} parent=11 // pred_fallthru
          _
        // Predicated region
        $region29: #{tpu_custom_call.1} parent=11 // pred_check
          %p221 = pneg %p147
        $region30: #{tpu_custom_call.1} parent=11 // pred_check_branch
          %223 = sbr.rel (%p221) target = $region32
        $region31: #{tpu_custom_call.1} parent=11 // pred_region
          _
        $region32: #{tpu_custom_call.1} parent=11 // pred_fallthru
          _
        // Predicated region
        $region33: #{tpu_custom_call.1} parent=11 // pred_check
          %p224 = pneg %p168
        $region34: #{tpu_custom_call.1} parent=11 // pred_check_branch
          %226 = sbr.rel (%p224) target = $region36
        $region35: #{tpu_custom_call.1} parent=11 // pred_region
          _
        $region36: #{tpu_custom_call.1} parent=11 // pred_fallthru
          _
      $region12: #{tpu_custom_call.1} parent=5 // pred_fallthru
        _
      %p227 = scmp.lt.s32.totalorder %s16, 2
      // Predicated region
      $region37: #{tpu_custom_call.1} parent=5 // pred_check
        %p228 = pneg %p227
      $region38: #{tpu_custom_call.1} parent=5 // pred_check_branch
        %230 = sbr.rel (%p228) target = $region40
      $region39: #{tpu_custom_call.1} parent=5 // pred_region
        // Predicated region
        $region41: #{tpu_custom_call.1} parent=39 // pred_check
          %p231 = pneg %p36
        $region42: #{tpu_custom_call.1} parent=39 // pred_check_branch
          %233 = sbr.rel (%p231) target = $region44
        $region43: #{tpu_custom_call.1} parent=39 // pred_region
          %s234 = sand.u32 %s26, 1
          %s235 = scalar_lea.sflag [#allocation3], %s234
          %s236 = sand.u32 %s26, 1
          %s237 = smul.addr %s236, 512
          %s238 = scalar_lea.vmem [#allocation2], %s237
          %s239 = smul.u32 16, %s16
          %s241 = ssub.s32 8192, 8192
          %242 = vsyncadd %s235, %s241
          %s243 = smul.addr %s239, 4
          %s244 = smul.addr %s243, 128
          %s245 = scalar_lea.hbm %s0, %s244
          %s246 = sshll.u32 %s238, 4
          %s247 = int_to_ptr.vmem [resolvable:$true] %s246
          %252 = dma.hbm_to_vmem [thread:$0]  %s245, 8192, %s247, %s235, 512, 512, 32
        $region44: #{tpu_custom_call.1} parent=39 // pred_fallthru
          _
      $region40: #{tpu_custom_call.1} parent=5 // pred_fallthru
        _
      %p253 = scmp.le.s32.totalorder 1, %s16
      %p254 = scmp.lt.s32.totalorder %s16, 3
      %p255 = pnand %p253, %p254
      %p256 = pneg %p255
      // Predicated region
      $region45: #{tpu_custom_call.1} parent=5 // pred_check
        _
      $region46: #{tpu_custom_call.1} parent=5 // pred_check_branch
        %258 = sbr.rel (%p255) target = $region48
      $region47: #{tpu_custom_call.1} parent=5 // pred_region
        %s259 = ssub.s32 %s16, 1
        %s260 = sand.u32 %s29, 1
        %s261 = scalar_lea.sflag [#allocation3], %s260
        %s262 = sand.u32 %s29, 1
        %s263 = smul.addr %s262, 512
        %s264 = scalar_lea.vmem [#allocation2], %s263
        // Predicated region
        $region49: #{tpu_custom_call.1} parent=47 // pred_check
          %p265 = pneg %p42
        $region50: #{tpu_custom_call.1} parent=47 // pred_check_branch
          %267 = sbr.rel (%p265) target = $region52
        $region51: #{tpu_custom_call.1} parent=47 // pred_region
          %268 = dma.done %s261, 8192
        $region52: #{tpu_custom_call.1} parent=47 // pred_fallthru
          _
        %s269 = sand.u32 %s29, 1
        %s270 = scalar_lea.sflag [#allocation3], %s269
        %s271 = sand.u32 %s29, 1
        %s272 = smul.addr %s271, 512
        %s273 = scalar_lea.vmem [#allocation2], %s272
        %p274 = pneg %p42
        %p275 = pneg %p39
        %p276 = pneg %p63
        %p277 = pneg %p60
        %p278 = pneg %p84
        %p279 = pneg %p81
        %p280 = pneg %p105
        %p281 = pneg %p102
        %p282 = pneg %p126
        %p283 = pneg %p123
        %p284 = pneg %p147
        %p285 = pneg %p144
        %p286 = pneg %p168
        %p287 = pneg %p165
        %p288 = pneg %p194
        %p289 = pneg %p191
        %s290 = smul.u32 16, %s21
        %p291 = scmp.lt.s32.totalorder %s290, 31
        %s292 = scalar_select %p291, %s290, 31
        %s293 = smul.addr %s292, 8
        %s294 = scalar_lea.vmem %s7, %s293
        %s295 = smul.u32 16, %s21
        %s296 = smul.u32 16, %s21
        %p297 = scmp.lt.s32.totalorder %s296, 31
        %s298 = scalar_select %p297, %s296, 31
        %s299 = smul.addr %s298, 8
        %s300 = scalar_lea.vmem %s7, %s299
        %s301 = smul.u32 16, %s21
        %v303 = vld [vmem:[%s264] sm:$0xff]
        %v304 = vld [vmem:[%s264 + $0x8] sm:$0xff]
        %v305 = vld [vmem:[%s264 + $0x10] sm:$0xff]
        %v306 = vld [vmem:[%s264 + $0x18] sm:$0xff]
        %v307 = vld [vmem:[%s264 + $0x20] sm:$0xff]
        %v308 = vld [vmem:[%s264 + $0x28] sm:$0xff]
        %v309 = vld [vmem:[%s264 + $0x30] sm:$0xff]
        %v310 = vld [vmem:[%s264 + $0x38] sm:$0xff]
        %v311 = vld [vmem:[%s264 + $0x40] sm:$0xff]
        %v312 = vld [vmem:[%s264 + $0x48] sm:$0xff]
        %v313 = vld [vmem:[%s264 + $0x50] sm:$0xff]
        %v314 = vld [vmem:[%s264 + $0x58] sm:$0xff]
        %v315 = vld [vmem:[%s264 + $0x60] sm:$0xff]
        %v316 = vld [vmem:[%s264 + $0x68] sm:$0xff]
        %v317 = vld [vmem:[%s264 + $0x70] sm:$0xff]
        %v318 = vld [vmem:[%s264 + $0x78] sm:$0xff]
        %v319 = vld [vmem:[%s264 + $0x80] sm:$0xff]
        %v320 = vld [vmem:[%s264 + $0x88] sm:$0xff]
        %v321 = vld [vmem:[%s264 + $0x90] sm:$0xff]
        %v322 = vld [vmem:[%s264 + $0x98] sm:$0xff]
        %v323 = vld [vmem:[%s264 + $0xa0] sm:$0xff]
        %v324 = vld [vmem:[%s264 + $0xa8] sm:$0xff]
        %v325 = vld [vmem:[%s264 + $0xb0] sm:$0xff]
        %v326 = vld [vmem:[%s264 + $0xb8] sm:$0xff]
        %v327 = vld [vmem:[%s264 + $0xc0] sm:$0xff]
        %v328 = vld [vmem:[%s264 + $0xc8] sm:$0xff]
        %v329 = vld [vmem:[%s264 + $0xd0] sm:$0xff]
        %v330 = vld [vmem:[%s264 + $0xd8] sm:$0xff]
        %v331 = vld [vmem:[%s264 + $0xe0] sm:$0xff]
        %v332 = vld [vmem:[%s264 + $0xe8] sm:$0xff]
        %v333 = vld [vmem:[%s264 + $0xf0] sm:$0xff]
        %v334 = vld [vmem:[%s264 + $0xf8] sm:$0xff]
        %v335 = vld [vmem:[%s264 + $0x100] sm:$0xff]
        %v336 = vld [vmem:[%s264 + $0x108] sm:$0xff]
        %v337 = vld [vmem:[%s264 + $0x110] sm:$0xff]
        %v338 = vld [vmem:[%s264 + $0x118] sm:$0xff]
        %v339 = vld [vmem:[%s264 + $0x120] sm:$0xff]
        %v340 = vld [vmem:[%s264 + $0x128] sm:$0xff]
        %v341 = vld [vmem:[%s264 + $0x130] sm:$0xff]
        %v342 = vld [vmem:[%s264 + $0x138] sm:$0xff]
        %v343 = vld [vmem:[%s264 + $0x140] sm:$0xff]
        %v344 = vld [vmem:[%s264 + $0x148] sm:$0xff]
        %v345 = vld [vmem:[%s264 + $0x150] sm:$0xff]
        %v346 = vld [vmem:[%s264 + $0x158] sm:$0xff]
        %v347 = vld [vmem:[%s264 + $0x160] sm:$0xff]
        %v348 = vld [vmem:[%s264 + $0x168] sm:$0xff]
        %v349 = vld [vmem:[%s264 + $0x170] sm:$0xff]
        %v350 = vld [vmem:[%s264 + $0x178] sm:$0xff]
        %v351 = vld [vmem:[%s264 + $0x180] sm:$0xff]
        %v352 = vld [vmem:[%s264 + $0x188] sm:$0xff]
        %v353 = vld [vmem:[%s264 + $0x190] sm:$0xff]
        %v354 = vld [vmem:[%s264 + $0x198] sm:$0xff]
        %v355 = vld [vmem:[%s264 + $0x1a0] sm:$0xff]
        %v356 = vld [vmem:[%s264 + $0x1a8] sm:$0xff]
        %v357 = vld [vmem:[%s264 + $0x1b0] sm:$0xff]
        %v358 = vld [vmem:[%s264 + $0x1b8] sm:$0xff]
        %v359 = vld [vmem:[%s264 + $0x1c0] sm:$0xff]
        %v360 = vld [vmem:[%s264 + $0x1c8] sm:$0xff]
        %v361 = vld [vmem:[%s264 + $0x1d0] sm:$0xff]
        %v362 = vld [vmem:[%s264 + $0x1d8] sm:$0xff]
        %v363 = vld [vmem:[%s264 + $0x1e0] sm:$0xff]
        %v364 = vld [vmem:[%s264 + $0x1e8] sm:$0xff]
        %v365 = vld [vmem:[%s264 + $0x1f0] sm:$0xff]
        %v366 = vld [vmem:[%s264 + $0x1f8] sm:$0xff]
        %v367 = vpack.c.bf16 %v307, %v303
        %v368 = vpack.c.bf16 %v308, %v304
        %v369 = vpack.c.bf16 %v309, %v305
        %v370 = vpack.c.bf16 %v310, %v306
        %v371 = vpack.c.bf16 %v315, %v311
        %v372 = vpack.c.bf16 %v316, %v312
        %v373 = vpack.c.bf16 %v317, %v313
        %v374 = vpack.c.bf16 %v318, %v314
        %v375 = vpack.c.bf16 %v323, %v319
        %v376 = vpack.c.bf16 %v324, %v320
        %v377 = vpack.c.bf16 %v325, %v321
        %v378 = vpack.c.bf16 %v326, %v322
        %v379 = vpack.c.bf16 %v331, %v327
        %v380 = vpack.c.bf16 %v332, %v328
        %v381 = vpack.c.bf16 %v333, %v329
        %v382 = vpack.c.bf16 %v334, %v330
        %v383 = vpack.c.bf16 %v339, %v335
        %v384 = vpack.c.bf16 %v340, %v336
        %v385 = vpack.c.bf16 %v341, %v337
        %v386 = vpack.c.bf16 %v342, %v338
        %v387 = vpack.c.bf16 %v347, %v343
        %v388 = vpack.c.bf16 %v348, %v344
        %v389 = vpack.c.bf16 %v349, %v345
        %v390 = vpack.c.bf16 %v350, %v346
        %v391 = vpack.c.bf16 %v355, %v351
        %v392 = vpack.c.bf16 %v356, %v352
        %v393 = vpack.c.bf16 %v357, %v353
        %v394 = vpack.c.bf16 %v358, %v354
        %v395 = vpack.c.bf16 %v363, %v359
        %v396 = vpack.c.bf16 %v364, %v360
        %v397 = vpack.c.bf16 %v365, %v361
        %v398 = vpack.c.bf16 %v366, %v362
        %v399 = vld [vmem:[%s1] sm:$0xf]
        %v400 = vld [vmem:[%s1 + $0x4] sm:$0xf]
        %v401 = vld [vmem:[%s1 + $0x8] sm:$0xf]
        %v402 = vld [vmem:[%s1 + $0xc] sm:$0xf]
        %v403 = vld [vmem:[%s1 + $0x10] sm:$0xf]
        %v404 = vld [vmem:[%s1 + $0x14] sm:$0xf]
        %v405 = vld [vmem:[%s1 + $0x18] sm:$0xf]
        %v406 = vld [vmem:[%s1 + $0x1c] sm:$0xf]
        %v407 = vld [vmem:[%s1 + $0x20] sm:$0xf]
        %v408 = vld [vmem:[%s1 + $0x24] sm:$0xf]
        %v409 = vld [vmem:[%s1 + $0x28] sm:$0xf]
        %v410 = vld [vmem:[%s1 + $0x2c] sm:$0xf]
        %v411 = vld [vmem:[%s1 + $0x30] sm:$0xf]
        %v412 = vld [vmem:[%s1 + $0x34] sm:$0xf]
        %v413 = vld [vmem:[%s1 + $0x38] sm:$0xf]
        %v414 = vld [vmem:[%s1 + $0x3c] sm:$0xf]
        %v415 = vld [vmem:[%s1 + $0x40] sm:$0xf]
        %v416 = vld [vmem:[%s1 + $0x44] sm:$0xf]
        %v417 = vld [vmem:[%s1 + $0x48] sm:$0xf]
        %v418 = vld [vmem:[%s1 + $0x4c] sm:$0xf]
        %v419 = vld [vmem:[%s1 + $0x50] sm:$0xf]
        %v420 = vld [vmem:[%s1 + $0x54] sm:$0xf]
        %v421 = vld [vmem:[%s1 + $0x58] sm:$0xf]
        %v422 = vld [vmem:[%s1 + $0x5c] sm:$0xf]
        %v423 = vld [vmem:[%s1 + $0x60] sm:$0xf]
        %v424 = vld [vmem:[%s1 + $0x64] sm:$0xf]
        %v425 = vld [vmem:[%s1 + $0x68] sm:$0xf]
        %v426 = vld [vmem:[%s1 + $0x6c] sm:$0xf]
        %v427 = vld [vmem:[%s1 + $0x70] sm:$0xf]
        %v428 = vld [vmem:[%s1 + $0x74] sm:$0xf]
        %v429 = vld [vmem:[%s1 + $0x78] sm:$0xf]
        %v430 = vld [vmem:[%s1 + $0x7c] sm:$0xf]
        %v431 = vld [vmem:[%s1 + $0x80] sm:$0xf]
        %v432 = vld [vmem:[%s1 + $0x84] sm:$0xf]
        %v433 = vld [vmem:[%s1 + $0x88] sm:$0xf]
        %v434 = vld [vmem:[%s1 + $0x8c] sm:$0xf]
        %v435 = vld [vmem:[%s1 + $0x90] sm:$0xf]
        %v436 = vld [vmem:[%s1 + $0x94] sm:$0xf]
        %v437 = vld [vmem:[%s1 + $0x98] sm:$0xf]
        %v438 = vld [vmem:[%s1 + $0x9c] sm:$0xf]
        %v439 = vld [vmem:[%s1 + $0xa0] sm:$0xf]
        %v440 = vld [vmem:[%s1 + $0xa4] sm:$0xf]
        %v441 = vld [vmem:[%s1 + $0xa8] sm:$0xf]
        %v442 = vld [vmem:[%s1 + $0xac] sm:$0xf]
        %v443 = vld [vmem:[%s1 + $0xb0] sm:$0xf]
        %v444 = vld [vmem:[%s1 + $0xb4] sm:$0xf]
        %v445 = vld [vmem:[%s1 + $0xb8] sm:$0xf]
        %v446 = vld [vmem:[%s1 + $0xbc] sm:$0xf]
        %v447 = vld [vmem:[%s1 + $0xc0] sm:$0xf]
        %v448 = vld [vmem:[%s1 + $0xc4] sm:$0xf]
        %v449 = vld [vmem:[%s1 + $0xc8] sm:$0xf]
        %v450 = vld [vmem:[%s1 + $0xcc] sm:$0xf]
        %v451 = vld [vmem:[%s1 + $0xd0] sm:$0xf]
        %v452 = vld [vmem:[%s1 + $0xd4] sm:$0xf]
        %v453 = vld [vmem:[%s1 + $0xd8] sm:$0xf]
        %v454 = vld [vmem:[%s1 + $0xdc] sm:$0xf]
        %v455 = vld [vmem:[%s1 + $0xe0] sm:$0xf]
        %v456 = vld [vmem:[%s1 + $0xe4] sm:$0xf]
        %v457 = vld [vmem:[%s1 + $0xe8] sm:$0xf]
        %v458 = vld [vmem:[%s1 + $0xec] sm:$0xf]
        %v459 = vld [vmem:[%s1 + $0xf0] sm:$0xf]
        %v460 = vld [vmem:[%s1 + $0xf4] sm:$0xf]
        %v461 = vld [vmem:[%s1 + $0xf8] sm:$0xf]
        %v462 = vld [vmem:[%s1 + $0xfc] sm:$0xf]
        %v463 = vld [vmem:[%s2] sm:$0x1]
        %v465 = vlaneseq
        %v466 = vshrl.u32 %v465, 7
        %v467 = vsub.s32 0, %v466
        %v468 = vrot.slane %v463, %v467
        %v534 = vunpack.c.l.b16 %v399
        %v535 = vunpack.c.l.b16 %v400
        %v536 = vunpack.c.l.b16 %v401
        %v537 = vunpack.c.l.b16 %v402
        %v538 = vunpack.c.l.b16 %v403
        %v539 = vunpack.c.l.b16 %v404
        %v540 = vunpack.c.l.b16 %v405
        %v541 = vunpack.c.l.b16 %v406
        %v542 = vunpack.c.l.b16 %v407
        %v543 = vunpack.c.l.b16 %v408
        %v544 = vunpack.c.l.b16 %v409
        %v545 = vunpack.c.l.b16 %v410
        %v546 = vunpack.c.l.b16 %v411
        %v547 = vunpack.c.l.b16 %v412
        %v548 = vunpack.c.l.b16 %v413
        %v549 = vunpack.c.l.b16 %v414
        %v550 = vunpack.c.l.b16 %v415
        %v551 = vunpack.c.l.b16 %v416
        %v552 = vunpack.c.l.b16 %v417
        %v553 = vunpack.c.l.b16 %v418
        %v554 = vunpack.c.l.b16 %v419
        %v555 = vunpack.c.l.b16 %v420
        %v556 = vunpack.c.l.b16 %v421
        %v557 = vunpack.c.l.b16 %v422
        %v558 = vunpack.c.l.b16 %v423
        %v559 = vunpack.c.l.b16 %v424
        %v560 = vunpack.c.l.b16 %v425
        %v561 = vunpack.c.l.b16 %v426
        %v562 = vunpack.c.l.b16 %v427
        %v563 = vunpack.c.l.b16 %v428
        %v564 = vunpack.c.l.b16 %v429
        %v565 = vunpack.c.l.b16 %v430
        %v566 = vunpack.c.l.b16 %v431
        %v567 = vunpack.c.l.b16 %v432
        %v568 = vunpack.c.l.b16 %v433
        %v569 = vunpack.c.l.b16 %v434
        %v570 = vunpack.c.l.b16 %v435
        %v571 = vunpack.c.l.b16 %v436
        %v572 = vunpack.c.l.b16 %v437
        %v573 = vunpack.c.l.b16 %v438
        %v574 = vunpack.c.l.b16 %v439
        %v575 = vunpack.c.l.b16 %v440
        %v576 = vunpack.c.l.b16 %v441
        %v577 = vunpack.c.l.b16 %v442
        %v578 = vunpack.c.l.b16 %v443
        %v579 = vunpack.c.l.b16 %v444
        %v580 = vunpack.c.l.b16 %v445
        %v581 = vunpack.c.l.b16 %v446
        %v582 = vunpack.c.l.b16 %v447
        %v583 = vunpack.c.l.b16 %v448
        %v584 = vunpack.c.l.b16 %v449
        %v585 = vunpack.c.l.b16 %v450
        %v586 = vunpack.c.l.b16 %v451
        %v587 = vunpack.c.l.b16 %v452
        %v588 = vunpack.c.l.b16 %v453
        %v589 = vunpack.c.l.b16 %v454
        %v590 = vunpack.c.l.b16 %v455
        %v591 = vunpack.c.l.b16 %v456
        %v592 = vunpack.c.l.b16 %v457
        %v593 = vunpack.c.l.b16 %v458
        %v594 = vunpack.c.l.b16 %v459
        %v595 = vunpack.c.l.b16 %v460
        %v596 = vunpack.c.l.b16 %v461
        %v597 = vunpack.c.l.b16 %v462
        %v598 = vpack.c.b16 %v535, %v534
        %v599 = vpack.c.b16 %v537, %v536
        %v600 = vpack.c.b16 %v539, %v538
        %v601 = vpack.c.b16 %v541, %v540
        %v602 = vpack.c.b16 %v543, %v542
        %v603 = vpack.c.b16 %v545, %v544
        %v604 = vpack.c.b16 %v547, %v546
        %v605 = vpack.c.b16 %v549, %v548
        %v606 = vpack.c.b16 %v551, %v550
        %v607 = vpack.c.b16 %v553, %v552
        %v608 = vpack.c.b16 %v555, %v554
        %v609 = vpack.c.b16 %v557, %v556
        %v610 = vpack.c.b16 %v559, %v558
        %v611 = vpack.c.b16 %v561, %v560
        %v612 = vpack.c.b16 %v563, %v562
        %v613 = vpack.c.b16 %v565, %v564
        %v614 = vpack.c.b16 %v567, %v566
        %v615 = vpack.c.b16 %v569, %v568
        %v616 = vpack.c.b16 %v571, %v570
        %v617 = vpack.c.b16 %v573, %v572
        %v618 = vpack.c.b16 %v575, %v574
        %v619 = vpack.c.b16 %v577, %v576
        %v620 = vpack.c.b16 %v579, %v578
        %v621 = vpack.c.b16 %v581, %v580
        %v622 = vpack.c.b16 %v583, %v582
        %v623 = vpack.c.b16 %v585, %v584
        %v624 = vpack.c.b16 %v587, %v586
        %v625 = vpack.c.b16 %v589, %v588
        %v626 = vpack.c.b16 %v591, %v590
        %v627 = vpack.c.b16 %v593, %v592
        %v628 = vpack.c.b16 %v595, %v594
        %v629 = vpack.c.b16 %v597, %v596
        %662 = vmatprep.subr.bf16.mxu0 0
        %663 = vmatpush1.bf16.msra.mxu0 %v605
        %664 = vmatprep.subr.bf16.mxu0 0
        %665 = vmatpush1.bf16.msra.mxu0 %v604
        %666 = vmatprep.subr.bf16.mxu0 0
        %667 = vmatpush1.bf16.msra.mxu0 %v603
        %668 = vmatprep.subr.bf16.mxu0 0
        %669 = vmatpush1.bf16.msra.mxu0 %v602
        %670 = vmatprep.subr.bf16.mxu0 0
        %671 = vmatpush1.bf16.msra.mxu0 %v601
        %672 = vmatprep.subr.bf16.mxu0 0
        %673 = vmatpush1.bf16.msra.mxu0 %v600
        %674 = vmatprep.subr.bf16.mxu0 0
        %675 = vmatpush1.bf16.msra.mxu0 %v599
        %676 = vmatprep.subr.bf16.mxu0 0
        %677 = vmatpush1.bf16.msra.mxu0 %v598
        %678 = vmatprep.subr.bf16.mxu0 0
        %679 = vmatpush2.bf16.msra.mxu0 %v613
        %680 = vmatprep.subr.bf16.mxu0 0
        %681 = vmatpush2.bf16.msra.mxu0 %v612
        %682 = vmatprep.subr.bf16.mxu0 0
        %683 = vmatpush2.bf16.msra.mxu0 %v611
        %684 = vmatprep.subr.bf16.mxu0 0
        %685 = vmatpush2.bf16.msra.mxu0 %v610
        %686 = vmatprep.subr.bf16.mxu0 0
        %687 = vmatpush2.bf16.msra.mxu0 %v609
        %688 = vmatprep.subr.bf16.mxu0 0
        %689 = vmatpush2.bf16.msra.mxu0 %v608
        %690 = vmatprep.subr.bf16.mxu0 0
        %691 = vmatpush2.bf16.msra.mxu0 %v607
        %692 = vmatprep.subr.bf16.mxu0 0
        %693 = vmatpush2.bf16.msra.mxu0 %v606
        %694 = vmatprep.mubr.bf16.mxu0 %v368
        %695 = vmatmul.mubr.bf16.gmra.mxu0 %v367
        %v696 = vpop.f32.mrf.mxu0
        %v697 = vadd.f32 %v468, %v696
        %v698 = vpop.f32.mrf.mxu0
        %v699 = vpop.f32.mrf.mxu0
        %v700 = vadd.f32 %v468, %v699
        %v701 = vpop.f32.mrf.mxu0
        %702 = vmatprep.mubr.bf16.mxu0 %v372
        %703 = vmatmul.mubr.bf16.gmra.mxu0 %v371
        %v704 = vpop.f32.mrf.mxu0
        %v705 = vadd.f32 %v468, %v704
        %v706 = vpop.f32.mrf.mxu0
        %v707 = vpop.f32.mrf.mxu0
        %v708 = vadd.f32 %v468, %v707
        %v709 = vpop.f32.mrf.mxu0
        %710 = vmatprep.mubr.bf16.mxu0 %v376
        %711 = vmatmul.mubr.bf16.gmra.mxu0 %v375
        %v712 = vpop.f32.mrf.mxu0
        %v713 = vadd.f32 %v468, %v712
        %v714 = vpop.f32.mrf.mxu0
        %v715 = vpop.f32.mrf.mxu0
        %v716 = vadd.f32 %v468, %v715
        %v717 = vpop.f32.mrf.mxu0
        %718 = vmatprep.mubr.bf16.mxu0 %v380
        %719 = vmatmul.mubr.bf16.gmra.mxu0 %v379
        %v720 = vpop.f32.mrf.mxu0
        %v721 = vadd.f32 %v468, %v720
        %v722 = vpop.f32.mrf.mxu0
        %v723 = vpop.f32.mrf.mxu0
        %v724 = vadd.f32 %v468, %v723
        %v725 = vpop.f32.mrf.mxu0
        %726 = vmatprep.mubr.bf16.mxu0 %v384
        %727 = vmatmul.mubr.bf16.gmra.mxu0 %v383
        %v728 = vpop.f32.mrf.mxu0
        %v729 = vadd.f32 %v468, %v728
        %v730 = vpop.f32.mrf.mxu0
        %v731 = vpop.f32.mrf.mxu0
        %v732 = vadd.f32 %v468, %v731
        %v733 = vpop.f32.mrf.mxu0
        %734 = vmatprep.mubr.bf16.mxu0 %v388
        %735 = vmatmul.mubr.bf16.gmra.mxu0 %v387
        %v736 = vpop.f32.mrf.mxu0
        %v737 = vadd.f32 %v468, %v736
        %v738 = vpop.f32.mrf.mxu0
        %v739 = vpop.f32.mrf.mxu0
        %v740 = vadd.f32 %v468, %v739
        %v741 = vpop.f32.mrf.mxu0
        %742 = vmatprep.mubr.bf16.mxu0 %v392
        %743 = vmatmul.mubr.bf16.gmra.mxu0 %v391
        %v744 = vpop.f32.mrf.mxu0
        %v745 = vadd.f32 %v468, %v744
        %v746 = vpop.f32.mrf.mxu0
        %v747 = vpop.f32.mrf.mxu0
        %v748 = vadd.f32 %v468, %v747
        %v749 = vpop.f32.mrf.mxu0
        %750 = vmatprep.mubr.bf16.mxu0 %v396
        %751 = vmatmul.mubr.bf16.gmra.mxu0 %v395
        %v752 = vpop.f32.mrf.mxu0
        %v753 = vadd.f32 %v468, %v752
        %v754 = vpop.f32.mrf.mxu0
        %v755 = vpop.f32.mrf.mxu0
        %v756 = vadd.f32 %v468, %v755
        %v757 = vpop.f32.mrf.mxu0
        %758 = vdwg.mxu0
        %759 = vmatprep.subr.bf16.mxu0 0
        %760 = vmatpush1.bf16.msra.mxu0 %v621
        %761 = vmatprep.subr.bf16.mxu0 0
        %762 = vmatpush1.bf16.msra.mxu0 %v620
        %763 = vmatprep.subr.bf16.mxu0 0
        %764 = vmatpush1.bf16.msra.mxu0 %v619
        %765 = vmatprep.subr.bf16.mxu0 0
        %766 = vmatpush1.bf16.msra.mxu0 %v618
        %767 = vmatprep.subr.bf16.mxu0 0
        %768 = vmatpush1.bf16.msra.mxu0 %v617
        %769 = vmatprep.subr.bf16.mxu0 0
        %770 = vmatpush1.bf16.msra.mxu0 %v616
        %771 = vmatprep.subr.bf16.mxu0 0
        %772 = vmatpush1.bf16.msra.mxu0 %v615
        %773 = vmatprep.subr.bf16.mxu0 0
        %774 = vmatpush1.bf16.msra.mxu0 %v614
        %775 = vmatprep.subr.bf16.mxu0 0
        %776 = vmatpush2.bf16.msra.mxu0 %v629
        %777 = vmatprep.subr.bf16.mxu0 0
        %778 = vmatpush2.bf16.msra.mxu0 %v628
        %779 = vmatprep.subr.bf16.mxu0 0
        %780 = vmatpush2.bf16.msra.mxu0 %v627
        %781 = vmatprep.subr.bf16.mxu0 0
        %782 = vmatpush2.bf16.msra.mxu0 %v626
        %783 = vmatprep.subr.bf16.mxu0 0
        %784 = vmatpush2.bf16.msra.mxu0 %v625
        %785 = vmatprep.subr.bf16.mxu0 0
        %786 = vmatpush2.bf16.msra.mxu0 %v624
        %787 = vmatprep.subr.bf16.mxu0 0
        %788 = vmatpush2.bf16.msra.mxu0 %v623
        %789 = vmatprep.subr.bf16.mxu0 0
        %790 = vmatpush2.bf16.msra.mxu0 %v622
        %791 = vmatprep.mubr.bf16.mxu0 %v370
        %792 = vmatmul.mubr.bf16.gmra.mxu0 %v369
        %v793 = vpop.f32.mrf.mxu0
        %v794 = vadd.f32 %v697, %v793
        %v795 = vpop.f32.mrf.mxu0
        %v796 = vpop.f32.mrf.mxu0
        %v797 = vadd.f32 %v700, %v796
        %v798 = vpop.f32.mrf.mxu0
        %799 = vmatprep.mubr.bf16.mxu0 %v374
        %800 = vmatmul.mubr.bf16.gmra.mxu0 %v373
        %v801 = vpop.f32.mrf.mxu0
        %v802 = vadd.f32 %v705, %v801
        %v803 = vpop.f32.mrf.mxu0
        %v804 = vpop.f32.mrf.mxu0
        %v805 = vadd.f32 %v708, %v804
        %v806 = vpop.f32.mrf.mxu0
        %807 = vmatprep.mubr.bf16.mxu0 %v378
        %808 = vmatmul.mubr.bf16.gmra.mxu0 %v377
        %v809 = vpop.f32.mrf.mxu0
        %v810 = vadd.f32 %v713, %v809
        %v811 = vpop.f32.mrf.mxu0
        %v812 = vpop.f32.mrf.mxu0
        %v813 = vadd.f32 %v716, %v812
        %v814 = vpop.f32.mrf.mxu0
        %815 = vmatprep.mubr.bf16.mxu0 %v382
        %816 = vmatmul.mubr.bf16.gmra.mxu0 %v381
        %v817 = vpop.f32.mrf.mxu0
        %v818 = vadd.f32 %v721, %v817
        %v819 = vpop.f32.mrf.mxu0
        %v820 = vpop.f32.mrf.mxu0
        %v821 = vadd.f32 %v724, %v820
        %v822 = vpop.f32.mrf.mxu0
        %823 = vmatprep.mubr.bf16.mxu0 %v386
        %824 = vmatmul.mubr.bf16.gmra.mxu0 %v385
        %v825 = vpop.f32.mrf.mxu0
        %v826 = vadd.f32 %v729, %v825
        %v827 = vpop.f32.mrf.mxu0
        %v828 = vpop.f32.mrf.mxu0
        %v829 = vadd.f32 %v732, %v828
        %v830 = vpop.f32.mrf.mxu0
        %831 = vmatprep.mubr.bf16.mxu0 %v390
        %832 = vmatmul.mubr.bf16.gmra.mxu0 %v389
        %v833 = vpop.f32.mrf.mxu0
        %v834 = vadd.f32 %v737, %v833
        %v835 = vpop.f32.mrf.mxu0
        %v836 = vpop.f32.mrf.mxu0
        %v837 = vadd.f32 %v740, %v836
        %v838 = vpop.f32.mrf.mxu0
        %839 = vmatprep.mubr.bf16.mxu0 %v394
        %840 = vmatmul.mubr.bf16.gmra.mxu0 %v393
        %v841 = vpop.f32.mrf.mxu0
        %v842 = vadd.f32 %v745, %v841
        %v843 = vpop.f32.mrf.mxu0
        %v844 = vpop.f32.mrf.mxu0
        %v845 = vadd.f32 %v748, %v844
        %v846 = vpop.f32.mrf.mxu0
        %847 = vmatprep.mubr.bf16.mxu0 %v398
        %848 = vmatmul.mubr.bf16.gmra.mxu0 %v397
        %v849 = vpop.f32.mrf.mxu0
        %v850 = vadd.f32 %v753, %v849
        %v851 = vpop.f32.mrf.mxu0
        %v852 = vpop.f32.mrf.mxu0
        %v853 = vadd.f32 %v756, %v852
        %v854 = vpop.f32.mrf.mxu0
        %855 = vdwg.mxu0
        %v856 = vmax.f32 %v794, 0.0
        %v857 = vmax.f32 %v797, 0.0
        %v858 = vmax.f32 %v802, 0.0
        %v859 = vmax.f32 %v805, 0.0
        %v860 = vmax.f32 %v810, 0.0
        %v861 = vmax.f32 %v813, 0.0
        %v862 = vmax.f32 %v818, 0.0
        %v863 = vmax.f32 %v821, 0.0
        %v864 = vmax.f32 %v826, 0.0
        %v865 = vmax.f32 %v829, 0.0
        %v866 = vmax.f32 %v834, 0.0
        %v867 = vmax.f32 %v837, 0.0
        %v868 = vmax.f32 %v842, 0.0
        %v869 = vmax.f32 %v845, 0.0
        %v870 = vmax.f32 %v850, 0.0
        %v871 = vmax.f32 %v853, 0.0
        %v872 = vpack.c.bf16 %v857, %v856
        %v873 = vpack.c.bf16 %v859, %v858
        %v874 = vpack.c.bf16 %v861, %v860
        %v875 = vpack.c.bf16 %v863, %v862
        %v876 = vpack.c.bf16 %v865, %v864
        %v877 = vpack.c.bf16 %v867, %v866
        %v878 = vpack.c.bf16 %v869, %v868
        %v879 = vpack.c.bf16 %v871, %v870
        %v880 = vld [vmem:[%s3] sm:$0xf]
        %v881 = vld [vmem:[%s3 + $0x4] sm:$0xf]
        %v882 = vld [vmem:[%s3 + $0x8] sm:$0xf]
        %v883 = vld [vmem:[%s3 + $0xc] sm:$0xf]
        %v884 = vld [vmem:[%s3 + $0x10] sm:$0xf]
        %v885 = vld [vmem:[%s3 + $0x14] sm:$0xf]
        %v886 = vld [vmem:[%s3 + $0x18] sm:$0xf]
        %v887 = vld [vmem:[%s3 + $0x1c] sm:$0xf]
        %v888 = vld [vmem:[%s4] sm:$0x1]
        %v890 = vlaneseq
        %v891 = vshrl.u32 %v890, 7
        %v892 = vsub.s32 0, %v891
        %v893 = vrot.slane %v888, %v892
        %v903 = vunpack.c.l.b16 %v880
        %v904 = vunpack.c.l.b16 %v881
        %v905 = vunpack.c.l.b16 %v882
        %v906 = vunpack.c.l.b16 %v883
        %v907 = vunpack.c.l.b16 %v884
        %v908 = vunpack.c.l.b16 %v885
        %v909 = vunpack.c.l.b16 %v886
        %v910 = vunpack.c.l.b16 %v887
        %v911 = vpack.c.b16 %v904, %v903
        %v912 = vpack.c.b16 %v906, %v905
        %v913 = vpack.c.b16 %v908, %v907
        %v914 = vpack.c.b16 %v910, %v909
        %vm919 = vcmask 523264
        %v921 = vsel %vm919, %v872, 0
        %v924 = vsel %vm919, %v873, 0
        %v927 = vsel %vm919, %v874, 0
        %v930 = vsel %vm919, %v875, 0
        %v933 = vsel %vm919, %v876, 0
        %v936 = vsel %vm919, %v877, 0
        %v939 = vsel %vm919, %v878, 0
        %v942 = vsel %vm919, %v879, 0
        %944 = vmatprep.subr.bf16.mxu0 0
        %945 = vmatpush1.bf16.msra.mxu0 0
        %946 = vmatprep.subr.bf16.mxu0 0
        %947 = vmatpush1.bf16.msra.mxu0 0
        %948 = vmatprep.subr.bf16.mxu0 0
        %949 = vmatpush1.bf16.msra.mxu0 0
        %950 = vmatprep.subr.bf16.mxu0 0
        %951 = vmatpush1.bf16.msra.mxu0 0
        %952 = vmatprep.subr.bf16.mxu0 0
        %953 = vmatpush1.bf16.msra.mxu0 %v914
        %954 = vmatprep.subr.bf16.mxu0 0
        %955 = vmatpush1.bf16.msra.mxu0 %v913
        %956 = vmatprep.subr.bf16.mxu0 0
        %957 = vmatpush1.bf16.msra.mxu0 %v912
        %958 = vmatprep.subr.bf16.mxu0 0
        %959 = vmatpush1.bf16.msra.mxu0 %v911
        %960 = vmatprep.subr.bf16.mxu0 0
        %961 = vmatpush2.bf16.msra.mxu0 0
        %962 = vmatprep.subr.bf16.mxu0 0
        %963 = vmatpush2.bf16.msra.mxu0 0
        %964 = vmatprep.subr.bf16.mxu0 0
        %965 = vmatpush2.bf16.msra.mxu0 0
        %966 = vmatprep.subr.bf16.mxu0 0
        %967 = vmatpush2.bf16.msra.mxu0 0
        %968 = vmatprep.subr.bf16.mxu0 0
        %969 = vmatpush2.bf16.msra.mxu0 0
        %970 = vmatprep.subr.bf16.mxu0 0
        %971 = vmatpush2.bf16.msra.mxu0 0
        %972 = vmatprep.subr.bf16.mxu0 0
        %973 = vmatpush2.bf16.msra.mxu0 0
        %974 = vmatprep.subr.bf16.mxu0 0
        %975 = vmatpush2.bf16.msra.mxu0 0
        %976 = vmatprep.mubr.bf16.mxu0 0
        %977 = vmatmul.mubr.bf16.gmra.mxu0 %v921
        %v978 = vpop.f32.mrf.mxu0
        %v979 = vadd.f32 %v893, %v978
        %v980 = vpop.f32.mrf.mxu0
        %v981 = vpop.f32.mrf.mxu0
        %v982 = vadd.f32 %v893, %v981
        %v983 = vpop.f32.mrf.mxu0
        %984 = vmatprep.mubr.bf16.mxu0 0
        %985 = vmatmul.mubr.bf16.gmra.mxu0 %v924
        %v986 = vpop.f32.mrf.mxu0
        %v987 = vadd.f32 %v893, %v986
        %v988 = vpop.f32.mrf.mxu0
        %v989 = vpop.f32.mrf.mxu0
        %v990 = vadd.f32 %v893, %v989
        %v991 = vpop.f32.mrf.mxu0
        %992 = vmatprep.mubr.bf16.mxu0 0
        %993 = vmatmul.mubr.bf16.gmra.mxu0 %v927
        %v994 = vpop.f32.mrf.mxu0
        %v995 = vadd.f32 %v893, %v994
        %v996 = vpop.f32.mrf.mxu0
        %v997 = vpop.f32.mrf.mxu0
        %v998 = vadd.f32 %v893, %v997
        %v999 = vpop.f32.mrf.mxu0
        %1000 = vmatprep.mubr.bf16.mxu0 0
        %1001 = vmatmul.mubr.bf16.gmra.mxu0 %v930
        %v1002 = vpop.f32.mrf.mxu0
        %v1003 = vadd.f32 %v893, %v1002
        %v1004 = vpop.f32.mrf.mxu0
        %v1005 = vpop.f32.mrf.mxu0
        %v1006 = vadd.f32 %v893, %v1005
        %v1007 = vpop.f32.mrf.mxu0
        %1008 = vmatprep.mubr.bf16.mxu0 0
        %1009 = vmatmul.mubr.bf16.gmra.mxu0 %v933
        %v1010 = vpop.f32.mrf.mxu0
        %v1011 = vadd.f32 %v893, %v1010
        %v1012 = vpop.f32.mrf.mxu0
        %v1013 = vpop.f32.mrf.mxu0
        %v1014 = vadd.f32 %v893, %v1013
        %v1015 = vpop.f32.mrf.mxu0
        %1016 = vmatprep.mubr.bf16.mxu0 0
        %1017 = vmatmul.mubr.bf16.gmra.mxu0 %v936
        %v1018 = vpop.f32.mrf.mxu0
        %v1019 = vadd.f32 %v893, %v1018
        %v1020 = vpop.f32.mrf.mxu0
        %v1021 = vpop.f32.mrf.mxu0
        %v1022 = vadd.f32 %v893, %v1021
        %v1023 = vpop.f32.mrf.mxu0
        %1024 = vmatprep.mubr.bf16.mxu0 0
        %1025 = vmatmul.mubr.bf16.gmra.mxu0 %v939
        %v1026 = vpop.f32.mrf.mxu0
        %v1027 = vadd.f32 %v893, %v1026
        %v1028 = vpop.f32.mrf.mxu0
        %v1029 = vpop.f32.mrf.mxu0
        %v1030 = vadd.f32 %v893, %v1029
        %v1031 = vpop.f32.mrf.mxu0
        %1032 = vmatprep.mubr.bf16.mxu0 0
        %1033 = vmatmul.mubr.bf16.gmra.mxu0 %v942
        %v1034 = vpop.f32.mrf.mxu0
        %v1035 = vadd.f32 %v893, %v1034
        %v1036 = vpop.f32.mrf.mxu0
        %v1037 = vpop.f32.mrf.mxu0
        %v1038 = vadd.f32 %v893, %v1037
        %v1039 = vpop.f32.mrf.mxu0
        %1040 = vdwg.mxu0
        %v1041 = vmax.f32 %v979, 0.0
        %v1042 = vmax.f32 %v982, 0.0
        %v1043 = vmax.f32 %v987, 0.0
        %v1044 = vmax.f32 %v990, 0.0
        %v1045 = vmax.f32 %v995, 0.0
        %v1046 = vmax.f32 %v998, 0.0
        %v1047 = vmax.f32 %v1003, 0.0
        %v1048 = vmax.f32 %v1006, 0.0
        %v1049 = vmax.f32 %v1011, 0.0
        %v1050 = vmax.f32 %v1014, 0.0
        %v1051 = vmax.f32 %v1019, 0.0
        %v1052 = vmax.f32 %v1022, 0.0
        %v1053 = vmax.f32 %v1027, 0.0
        %v1054 = vmax.f32 %v1030, 0.0
        %v1055 = vmax.f32 %v1035, 0.0
        %v1056 = vmax.f32 %v1038, 0.0
        %v1057 = vpack.c.bf16 %v1042, %v1041
        %v1058 = vpack.c.bf16 %v1044, %v1043
        %v1059 = vpack.c.bf16 %v1046, %v1045
        %v1060 = vpack.c.bf16 %v1048, %v1047
        %v1061 = vpack.c.bf16 %v1050, %v1049
        %v1062 = vpack.c.bf16 %v1052, %v1051
        %v1063 = vpack.c.bf16 %v1054, %v1053
        %v1064 = vpack.c.bf16 %v1056, %v1055
        %v1065 = vld [vmem:[%s5] sm:$0xf]
        %v1066 = vld [vmem:[%s5 + $0x4] sm:$0xf]
        %v1067 = vld [vmem:[%s5 + $0x8] sm:$0xf]
        %v1068 = vld [vmem:[%s5 + $0xc] sm:$0xf]
        %v1069 = vld [vmem:[%s6] sm:$0x1]
        %v1071 = vlaneseq
        %v1072 = vshrl.u32 %v1071, 7
        %v1073 = vsub.s32 0, %v1072
        %v1074 = vrot.slane %v1069, %v1073
        %v1080 = vunpack.c.l.b16 %v1065
        %v1081 = vunpack.c.l.b16 %v1066
        %v1082 = vunpack.c.l.b16 %v1067
        %v1083 = vunpack.c.l.b16 %v1068
        %v1084 = vpack.c.b16 %v1081, %v1080
        %v1085 = vpack.c.b16 %v1083, %v1082
        %vm1088 = vcmask 261120
        %v1090 = vsel %vm1088, %v1057, 0
        %v1093 = vsel %vm1088, %v1058, 0
        %v1096 = vsel %vm1088, %v1059, 0
        %v1099 = vsel %vm1088, %v1060, 0
        %v1102 = vsel %vm1088, %v1061, 0
        %v1105 = vsel %vm1088, %v1062, 0
        %v1108 = vsel %vm1088, %v1063, 0
        %v1111 = vsel %vm1088, %v1064, 0
        %1113 = vmatprep.subr.bf16.mxu0 0
        %1114 = vmatpush1.bf16.msra.mxu0 0
        %1115 = vmatprep.subr.bf16.mxu0 0
        %1116 = vmatpush1.bf16.msra.mxu0 0
        %1117 = vmatprep.subr.bf16.mxu0 0
        %1118 = vmatpush1.bf16.msra.mxu0 0
        %1119 = vmatprep.subr.bf16.mxu0 0
        %1120 = vmatpush1.bf16.msra.mxu0 0
        %1121 = vmatprep.subr.bf16.mxu0 0
        %1122 = vmatpush1.bf16.msra.mxu0 0
        %1123 = vmatprep.subr.bf16.mxu0 0
        %1124 = vmatpush1.bf16.msra.mxu0 0
        %1125 = vmatprep.subr.bf16.mxu0 0
        %1126 = vmatpush1.bf16.msra.mxu0 %v1085
        %1127 = vmatprep.subr.bf16.mxu0 0
        %1128 = vmatpush1.bf16.msra.mxu0 %v1084
        %1129 = vmatprep.subr.bf16.mxu0 0
        %1130 = vmatpush2.bf16.msra.mxu0 0
        %1131 = vmatprep.subr.bf16.mxu0 0
        %1132 = vmatpush2.bf16.msra.mxu0 0
        %1133 = vmatprep.subr.bf16.mxu0 0
        %1134 = vmatpush2.bf16.msra.mxu0 0
        %1135 = vmatprep.subr.bf16.mxu0 0
        %1136 = vmatpush2.bf16.msra.mxu0 0
        %1137 = vmatprep.subr.bf16.mxu0 0
        %1138 = vmatpush2.bf16.msra.mxu0 0
        %1139 = vmatprep.subr.bf16.mxu0 0
        %1140 = vmatpush2.bf16.msra.mxu0 0
        %1141 = vmatprep.subr.bf16.mxu0 0
        %1142 = vmatpush2.bf16.msra.mxu0 0
        %1143 = vmatprep.subr.bf16.mxu0 0
        %1144 = vmatpush2.bf16.msra.mxu0 0
        %1145 = vmatprep.mubr.bf16.mxu0 0
        %1146 = vmatmul.mubr.bf16.gmra.mxu0 %v1090
        %v1147 = vpop.f32.mrf.mxu0
        %v1148 = vadd.f32 %v1074, %v1147
        %v1149 = vpop.f32.mrf.mxu0
        %v1150 = vpop.f32.mrf.mxu0
        %v1151 = vadd.f32 %v1074, %v1150
        %v1152 = vpop.f32.mrf.mxu0
        %1153 = vmatprep.mubr.bf16.mxu0 0
        %1154 = vmatmul.mubr.bf16.gmra.mxu0 %v1093
        %v1155 = vpop.f32.mrf.mxu0
        %v1156 = vadd.f32 %v1074, %v1155
        %v1157 = vpop.f32.mrf.mxu0
        %v1158 = vpop.f32.mrf.mxu0
        %v1159 = vadd.f32 %v1074, %v1158
        %v1160 = vpop.f32.mrf.mxu0
        %1161 = vmatprep.mubr.bf16.mxu0 0
        %1162 = vmatmul.mubr.bf16.gmra.mxu0 %v1096
        %v1163 = vpop.f32.mrf.mxu0
        %v1164 = vadd.f32 %v1074, %v1163
        %v1165 = vpop.f32.mrf.mxu0
        %v1166 = vpop.f32.mrf.mxu0
        %v1167 = vadd.f32 %v1074, %v1166
        %v1168 = vpop.f32.mrf.mxu0
        %1169 = vmatprep.mubr.bf16.mxu0 0
        %1170 = vmatmul.mubr.bf16.gmra.mxu0 %v1099
        %v1171 = vpop.f32.mrf.mxu0
        %v1172 = vadd.f32 %v1074, %v1171
        %v1173 = vpop.f32.mrf.mxu0
        %v1174 = vpop.f32.mrf.mxu0
        %v1175 = vadd.f32 %v1074, %v1174
        %v1176 = vpop.f32.mrf.mxu0
        %1177 = vmatprep.mubr.bf16.mxu0 0
        %1178 = vmatmul.mubr.bf16.gmra.mxu0 %v1102
        %v1179 = vpop.f32.mrf.mxu0
        %v1180 = vadd.f32 %v1074, %v1179
        %v1181 = vpop.f32.mrf.mxu0
        %v1182 = vpop.f32.mrf.mxu0
        %v1183 = vadd.f32 %v1074, %v1182
        %v1184 = vpop.f32.mrf.mxu0
        %1185 = vmatprep.mubr.bf16.mxu0 0
        %1186 = vmatmul.mubr.bf16.gmra.mxu0 %v1105
        %v1187 = vpop.f32.mrf.mxu0
        %v1188 = vadd.f32 %v1074, %v1187
        %v1189 = vpop.f32.mrf.mxu0
        %v1190 = vpop.f32.mrf.mxu0
        %v1191 = vadd.f32 %v1074, %v1190
        %v1192 = vpop.f32.mrf.mxu0
        %1193 = vmatprep.mubr.bf16.mxu0 0
        %1194 = vmatmul.mubr.bf16.gmra.mxu0 %v1108
        %v1195 = vpop.f32.mrf.mxu0
        %v1196 = vadd.f32 %v1074, %v1195
        %v1197 = vpop.f32.mrf.mxu0
        %v1198 = vpop.f32.mrf.mxu0
        %v1199 = vadd.f32 %v1074, %v1198
        %v1200 = vpop.f32.mrf.mxu0
        %1201 = vmatprep.mubr.bf16.mxu0 0
        %1202 = vmatmul.mubr.bf16.gmra.mxu0 %v1111
        %v1203 = vpop.f32.mrf.mxu0
        %v1204 = vadd.f32 %v1074, %v1203
        %v1205 = vpop.f32.mrf.mxu0
        %v1206 = vpop.f32.mrf.mxu0
        %v1207 = vadd.f32 %v1074, %v1206
        %v1208 = vpop.f32.mrf.mxu0
        %1209 = vdwg.mxu0
        %1226 = vrot.lane.b32.xlu0 %v1148, 1
        %v1227 = vpop.permute.xlu0 %1226
        %1228 = vrot.lane.b32.xlu0 %v1151, 1
        %v1229 = vpop.permute.xlu0 %1228
        %1230 = vrot.lane.b32.xlu0 %v1156, 1
        %v1231 = vpop.permute.xlu0 %1230
        %1232 = vrot.lane.b32.xlu0 %v1159, 1
        %v1233 = vpop.permute.xlu0 %1232
        %1234 = vrot.lane.b32.xlu0 %v1164, 1
        %v1235 = vpop.permute.xlu0 %1234
        %1236 = vrot.lane.b32.xlu0 %v1167, 1
        %v1237 = vpop.permute.xlu0 %1236
        %1238 = vrot.lane.b32.xlu0 %v1172, 1
        %v1239 = vpop.permute.xlu0 %1238
        %1240 = vrot.lane.b32.xlu0 %v1175, 1
        %v1241 = vpop.permute.xlu0 %1240
        %1242 = vrot.lane.b32.xlu0 %v1180, 1
        %v1243 = vpop.permute.xlu0 %1242
        %1244 = vrot.lane.b32.xlu0 %v1183, 1
        %v1245 = vpop.permute.xlu0 %1244
        %1246 = vrot.lane.b32.xlu0 %v1188, 1
        %v1247 = vpop.permute.xlu0 %1246
        %1248 = vrot.lane.b32.xlu0 %v1191, 1
        %v1249 = vpop.permute.xlu0 %1248
        %1250 = vrot.lane.b32.xlu0 %v1196, 1
        %v1251 = vpop.permute.xlu0 %1250
        %1252 = vrot.lane.b32.xlu0 %v1199, 1
        %v1253 = vpop.permute.xlu0 %1252
        %1254 = vrot.lane.b32.xlu0 %v1204, 1
        %v1255 = vpop.permute.xlu0 %1254
        %1256 = vrot.lane.b32.xlu0 %v1207, 1
        %v1257 = vpop.permute.xlu0 %1256
        %v1274 = vsub.f32 %v1148, %v1227
        %v1275 = vsub.f32 %v1151, %v1229
        %v1276 = vsub.f32 %v1156, %v1231
        %v1277 = vsub.f32 %v1159, %v1233
        %v1278 = vsub.f32 %v1164, %v1235
        %v1279 = vsub.f32 %v1167, %v1237
        %v1280 = vsub.f32 %v1172, %v1239
        %v1281 = vsub.f32 %v1175, %v1241
        %v1282 = vsub.f32 %v1180, %v1243
        %v1283 = vsub.f32 %v1183, %v1245
        %v1284 = vsub.f32 %v1188, %v1247
        %v1285 = vsub.f32 %v1191, %v1249
        %v1286 = vsub.f32 %v1196, %v1251
        %v1287 = vsub.f32 %v1199, %v1253
        %v1288 = vsub.f32 %v1204, %v1255
        %v1289 = vsub.f32 %v1207, %v1257
        %v1290 = vmax.f32 %v1274, -30.0
        %v1291 = vmax.f32 %v1275, -30.0
        %v1292 = vmax.f32 %v1276, -30.0
        %v1293 = vmax.f32 %v1277, -30.0
        %v1294 = vmax.f32 %v1278, -30.0
        %v1295 = vmax.f32 %v1279, -30.0
        %v1296 = vmax.f32 %v1280, -30.0
        %v1297 = vmax.f32 %v1281, -30.0
        %v1298 = vmax.f32 %v1282, -30.0
        %v1299 = vmax.f32 %v1283, -30.0
        %v1300 = vmax.f32 %v1284, -30.0
        %v1301 = vmax.f32 %v1285, -30.0
        %v1302 = vmax.f32 %v1286, -30.0
        %v1303 = vmax.f32 %v1287, -30.0
        %v1304 = vmax.f32 %v1288, -30.0
        %v1305 = vmax.f32 %v1289, -30.0
        %v1306 = vmin.f32 %v1290, 30.0
        %v1307 = vmin.f32 %v1291, 30.0
        %v1308 = vmin.f32 %v1292, 30.0
        %v1309 = vmin.f32 %v1293, 30.0
        %v1310 = vmin.f32 %v1294, 30.0
        %v1311 = vmin.f32 %v1295, 30.0
        %v1312 = vmin.f32 %v1296, 30.0
        %v1313 = vmin.f32 %v1297, 30.0
        %v1314 = vmin.f32 %v1298, 30.0
        %v1315 = vmin.f32 %v1299, 30.0
        %v1316 = vmin.f32 %v1300, 30.0
        %v1317 = vmin.f32 %v1301, 30.0
        %v1318 = vmin.f32 %v1302, 30.0
        %v1319 = vmin.f32 %v1303, 30.0
        %v1320 = vmin.f32 %v1304, 30.0
        %v1321 = vmin.f32 %v1305, 30.0
        %v1322 = vsub.f32 0.0, %v1306
        %v1323 = vsub.f32 0.0, %v1307
        %v1324 = vsub.f32 0.0, %v1308
        %v1325 = vsub.f32 0.0, %v1309
        %v1326 = vsub.f32 0.0, %v1310
        %v1327 = vsub.f32 0.0, %v1311
        %v1328 = vsub.f32 0.0, %v1312
        %v1329 = vsub.f32 0.0, %v1313
        %v1330 = vsub.f32 0.0, %v1314
        %v1331 = vsub.f32 0.0, %v1315
        %v1332 = vsub.f32 0.0, %v1316
        %v1333 = vsub.f32 0.0, %v1317
        %v1334 = vsub.f32 0.0, %v1318
        %v1335 = vsub.f32 0.0, %v1319
        %v1336 = vsub.f32 0.0, %v1320
        %v1337 = vsub.f32 0.0, %v1321
        %v1338 = vmul.f32 %v1322, 1.442695
        %v1339 = vpow.pop %v1338
        %v1340 = vmul.f32 %v1323, 1.442695
        %v1341 = vpow.pop %v1340
        %v1342 = vmul.f32 %v1324, 1.442695
        %v1343 = vpow.pop %v1342
        %v1344 = vmul.f32 %v1325, 1.442695
        %v1345 = vpow.pop %v1344
        %v1346 = vmul.f32 %v1326, 1.442695
        %v1347 = vpow.pop %v1346
        %v1348 = vmul.f32 %v1327, 1.442695
        %v1349 = vpow.pop %v1348
        %v1350 = vmul.f32 %v1328, 1.442695
        %v1351 = vpow.pop %v1350
        %v1352 = vmul.f32 %v1329, 1.442695
        %v1353 = vpow.pop %v1352
        %v1354 = vmul.f32 %v1330, 1.442695
        %v1355 = vpow.pop %v1354
        %v1356 = vmul.f32 %v1331, 1.442695
        %v1357 = vpow.pop %v1356
        %v1358 = vmul.f32 %v1332, 1.442695
        %v1359 = vpow.pop %v1358
        %v1360 = vmul.f32 %v1333, 1.442695
        %v1361 = vpow.pop %v1360
        %v1362 = vmul.f32 %v1334, 1.442695
        %v1363 = vpow.pop %v1362
        %v1364 = vmul.f32 %v1335, 1.442695
        %v1365 = vpow.pop %v1364
        %v1366 = vmul.f32 %v1336, 1.442695
        %v1367 = vpow.pop %v1366
        %v1368 = vmul.f32 %v1337, 1.442695
        %v1369 = vpow.pop %v1368
        %v1370 = vadd.f32 %v1339, 1.0
        %v1371 = vadd.f32 %v1341, 1.0
        %v1372 = vadd.f32 %v1343, 1.0
        %v1373 = vadd.f32 %v1345, 1.0
        %v1374 = vadd.f32 %v1347, 1.0
        %v1375 = vadd.f32 %v1349, 1.0
        %v1376 = vadd.f32 %v1351, 1.0
        %v1377 = vadd.f32 %v1353, 1.0
        %v1378 = vadd.f32 %v1355, 1.0
        %v1379 = vadd.f32 %v1357, 1.0
        %v1380 = vadd.f32 %v1359, 1.0
        %v1381 = vadd.f32 %v1361, 1.0
        %v1382 = vadd.f32 %v1363, 1.0
        %v1383 = vadd.f32 %v1365, 1.0
        %v1384 = vadd.f32 %v1367, 1.0
        %v1385 = vadd.f32 %v1369, 1.0
        %v1386 = vrcp.pop %v1370
        %v1387 = vrcp.pop %v1371
        %v1388 = vrcp.pop %v1372
        %v1389 = vrcp.pop %v1373
        %v1390 = vrcp.pop %v1374
        %v1391 = vrcp.pop %v1375
        %v1392 = vrcp.pop %v1376
        %v1393 = vrcp.pop %v1377
        %v1394 = vrcp.pop %v1378
        %v1395 = vrcp.pop %v1379
        %v1396 = vrcp.pop %v1380
        %v1397 = vrcp.pop %v1381
        %v1398 = vrcp.pop %v1382
        %v1399 = vrcp.pop %v1383
        %v1400 = vrcp.pop %v1384
        %v1401 = vrcp.pop %v1385
        %v1402 = vlaneseq
        %v1403 = vand.u32 %v1402, 127
        %vm1404 = vcmp.eq.s32.totalorder %v1403, 1
        %v1405 = vsub.f32 1.0, %v1386
        %v1406 = vsub.f32 1.0, %v1387
        %v1407 = vsub.f32 1.0, %v1388
        %v1408 = vsub.f32 1.0, %v1389
        %v1409 = vsub.f32 1.0, %v1390
        %v1410 = vsub.f32 1.0, %v1391
        %v1411 = vsub.f32 1.0, %v1392
        %v1412 = vsub.f32 1.0, %v1393
        %v1413 = vsub.f32 1.0, %v1394
        %v1414 = vsub.f32 1.0, %v1395
        %v1415 = vsub.f32 1.0, %v1396
        %v1416 = vsub.f32 1.0, %v1397
        %v1417 = vsub.f32 1.0, %v1398
        %v1418 = vsub.f32 1.0, %v1399
        %v1419 = vsub.f32 1.0, %v1400
        %v1420 = vsub.f32 1.0, %v1401
        %1422 = vset.pattern.permute.xlu0 1
        %1423 = vperm.xlu0 %1422, %v1386
        %v1424 = vpop.permute.xlu0 %1423
        %1427 = vset.pattern.permute.xlu0 1
        %1428 = vperm.xlu0 %1427, %v1387
        %v1429 = vpop.permute.xlu0 %1428
        %1432 = vset.pattern.permute.xlu0 1
        %1433 = vperm.xlu0 %1432, %v1388
        %v1434 = vpop.permute.xlu0 %1433
        %1437 = vset.pattern.permute.xlu0 1
        %1438 = vperm.xlu0 %1437, %v1389
        %v1439 = vpop.permute.xlu0 %1438
        %1442 = vset.pattern.permute.xlu0 1
        %1443 = vperm.xlu0 %1442, %v1390
        %v1444 = vpop.permute.xlu0 %1443
        %1447 = vset.pattern.permute.xlu0 1
        %1448 = vperm.xlu0 %1447, %v1391
        %v1449 = vpop.permute.xlu0 %1448
        %1452 = vset.pattern.permute.xlu0 1
        %1453 = vperm.xlu0 %1452, %v1392
        %v1454 = vpop.permute.xlu0 %1453
        %1457 = vset.pattern.permute.xlu0 1
        %1458 = vperm.xlu0 %1457, %v1393
        %v1459 = vpop.permute.xlu0 %1458
        %1462 = vset.pattern.permute.xlu0 1
        %1463 = vperm.xlu0 %1462, %v1394
        %v1464 = vpop.permute.xlu0 %1463
        %1467 = vset.pattern.permute.xlu0 1
        %1468 = vperm.xlu0 %1467, %v1395
        %v1469 = vpop.permute.xlu0 %1468
        %1472 = vset.pattern.permute.xlu0 1
        %1473 = vperm.xlu0 %1472, %v1396
        %v1474 = vpop.permute.xlu0 %1473
        %1477 = vset.pattern.permute.xlu0 1
        %1478 = vperm.xlu0 %1477, %v1397
        %v1479 = vpop.permute.xlu0 %1478
        %1482 = vset.pattern.permute.xlu0 1
        %1483 = vperm.xlu0 %1482, %v1398
        %v1484 = vpop.permute.xlu0 %1483
        %1487 = vset.pattern.permute.xlu0 1
        %1488 = vperm.xlu0 %1487, %v1399
        %v1489 = vpop.permute.xlu0 %1488
        %1492 = vset.pattern.permute.xlu0 1
        %1493 = vperm.xlu0 %1492, %v1400
        %v1494 = vpop.permute.xlu0 %1493
        %1497 = vset.pattern.permute.xlu0 1
        %1498 = vperm.xlu0 %1497, %v1401
        %v1499 = vpop.permute.xlu0 %1498
        %1502 = vset.pattern.permute.xlu0 1
        %1503 = vperm.xlu0 %1502, %v1405
        %v1504 = vpop.permute.xlu0 %1503
        %1507 = vset.pattern.permute.xlu0 1
        %1508 = vperm.xlu0 %1507, %v1406
        %v1509 = vpop.permute.xlu0 %1508
        %1512 = vset.pattern.permute.xlu0 1
        %1513 = vperm.xlu0 %1512, %v1407
        %v1514 = vpop.permute.xlu0 %1513
        %1517 = vset.pattern.permute.xlu0 1
        %1518 = vperm.xlu0 %1517, %v1408
        %v1519 = vpop.permute.xlu0 %1518
        %1522 = vset.pattern.permute.xlu0 1
        %1523 = vperm.xlu0 %1522, %v1409
        %v1524 = vpop.permute.xlu0 %1523
        %1527 = vset.pattern.permute.xlu0 1
        %1528 = vperm.xlu0 %1527, %v1410
        %v1529 = vpop.permute.xlu0 %1528
        %1532 = vset.pattern.permute.xlu0 1
        %1533 = vperm.xlu0 %1532, %v1411
        %v1534 = vpop.permute.xlu0 %1533
        %1537 = vset.pattern.permute.xlu0 1
        %1538 = vperm.xlu0 %1537, %v1412
        %v1539 = vpop.permute.xlu0 %1538
        %1542 = vset.pattern.permute.xlu0 1
        %1543 = vperm.xlu0 %1542, %v1413
        %v1544 = vpop.permute.xlu0 %1543
        %1547 = vset.pattern.permute.xlu0 1
        %1548 = vperm.xlu0 %1547, %v1414
        %v1549 = vpop.permute.xlu0 %1548
        %1552 = vset.pattern.permute.xlu0 1
        %1553 = vperm.xlu0 %1552, %v1415
        %v1554 = vpop.permute.xlu0 %1553
        %1557 = vset.pattern.permute.xlu0 1
        %1558 = vperm.xlu0 %1557, %v1416
        %v1559 = vpop.permute.xlu0 %1558
        %1562 = vset.pattern.permute.xlu0 1
        %1563 = vperm.xlu0 %1562, %v1417
        %v1564 = vpop.permute.xlu0 %1563
        %1567 = vset.pattern.permute.xlu0 1
        %1568 = vperm.xlu0 %1567, %v1418
        %v1569 = vpop.permute.xlu0 %1568
        %1572 = vset.pattern.permute.xlu0 1
        %1573 = vperm.xlu0 %1572, %v1419
        %v1574 = vpop.permute.xlu0 %1573
        %1577 = vset.pattern.permute.xlu0 1
        %1578 = vperm.xlu0 %1577, %v1420
        %v1579 = vpop.permute.xlu0 %1578
        %v1581 = vsel %vm1404, %v1424, %v1504
        %v1582 = vsel %vm1404, %v1429, %v1509
        %v1583 = vsel %vm1404, %v1434, %v1514
        %v1584 = vsel %vm1404, %v1439, %v1519
        %v1585 = vsel %vm1404, %v1444, %v1524
        %v1586 = vsel %vm1404, %v1449, %v1529
        %v1587 = vsel %vm1404, %v1454, %v1534
        %v1588 = vsel %vm1404, %v1459, %v1539
        %v1589 = vsel %vm1404, %v1464, %v1544
        %v1590 = vsel %vm1404, %v1469, %v1549
        %v1591 = vsel %vm1404, %v1474, %v1554
        %v1592 = vsel %vm1404, %v1479, %v1559
        %v1593 = vsel %vm1404, %v1484, %v1564
        %v1594 = vsel %vm1404, %v1489, %v1569
        %v1595 = vsel %vm1404, %v1494, %v1574
        %v1596 = vsel %vm1404, %v1499, %v1579
        %vm1597 = vcmask 15360
        %1598 = vst.msk [vmem:[%s300] sm:$0xff] %vm1597, %v1581
        %1599 = vst.msk [vmem:[%s300 + $0x8] sm:$0xff] %vm1597, %v1582
        %1600 = vst.msk [vmem:[%s300 + $0x10] sm:$0xff] %vm1597, %v1583
        %1601 = vst.msk [vmem:[%s300 + $0x18] sm:$0xff] %vm1597, %v1584
        %1602 = vst.msk [vmem:[%s300 + $0x20] sm:$0xff] %vm1597, %v1585
        %1603 = vst.msk [vmem:[%s300 + $0x28] sm:$0xff] %vm1597, %v1586
        %1604 = vst.msk [vmem:[%s300 + $0x30] sm:$0xff] %vm1597, %v1587
        %1605 = vst.msk [vmem:[%s300 + $0x38] sm:$0xff] %vm1597, %v1588
        %1606 = vst.msk [vmem:[%s300 + $0x40] sm:$0xff] %vm1597, %v1589
        %1607 = vst.msk [vmem:[%s300 + $0x48] sm:$0xff] %vm1597, %v1590
        %1608 = vst.msk [vmem:[%s300 + $0x50] sm:$0xff] %vm1597, %v1591
        %1609 = vst.msk [vmem:[%s300 + $0x58] sm:$0xff] %vm1597, %v1592
        %1610 = vst.msk [vmem:[%s300 + $0x60] sm:$0xff] %vm1597, %v1593
        %1611 = vst.msk [vmem:[%s300 + $0x68] sm:$0xff] %vm1597, %v1594
        %1612 = vst.msk [vmem:[%s300 + $0x70] sm:$0xff] %vm1597, %v1595
        %1613 = vst.msk [vmem:[%s300 + $0x78] sm:$0xff] %vm1597, %v1596
        %s1614 = smul.u32 16, %s21
        %p1615 = scmp.lt.s32.totalorder %s1614, 31
        %s1616 = scalar_select %p1615, %s1614, 31
        %s1617 = smul.addr %s1616, 8
        %s1618 = scalar_lea.vmem %s7, %s1617
        // Predicated region
        $region53: #{tpu_custom_call.1} parent=47 // pred_check
          %p1619 = pneg %p191
        $region54: #{tpu_custom_call.1} parent=47 // pred_check_branch
          %1621 = sbr.rel (%p1619) target = $region56
        $region55: #{tpu_custom_call.1} parent=47 // pred_region
          %s1622 = smul.u32 16, %s21
        $region56: #{tpu_custom_call.1} parent=47 // pred_fallthru
          _
      $region48: #{tpu_custom_call.1} parent=5 // pred_fallthru
        _
      %p1623 = scmp.le.s32.totalorder 2, %s16
      // Predicated region
      $region57: #{tpu_custom_call.1} parent=5 // pred_check
        %p1624 = pneg %p1623
      $region58: #{tpu_custom_call.1} parent=5 // pred_check_branch
        %1626 = sbr.rel (%p1624) target = $region60
      $region59: #{tpu_custom_call.1} parent=5 // pred_region
        %s1627 = ssub.s32 %s16, 2
        // Predicated region
        $region61: #{tpu_custom_call.1} parent=59 // pred_check
          %p1628 = pneg %p197
        $region62: #{tpu_custom_call.1} parent=59 // pred_check_branch
          %1630 = sbr.rel (%p1628) target = $region64
        $region63: #{tpu_custom_call.1} parent=59 // pred_region
          %s1631 = smul.u32 16, %s22
          %p1632 = scmp.lt.s32.totalorder %s1631, 31
          %s1633 = scalar_select %p1632, %s1631, 31
          %s1634 = smul.addr %s1633, 8
          %s1635 = scalar_lea.vmem %s7, %s1634
        $region64: #{tpu_custom_call.1} parent=59 // pred_fallthru
          _
      $region60: #{tpu_custom_call.1} parent=5 // pred_fallthru
        _
    $region6: #{tpu_custom_call.1} parent=1 // loop_footer
      %s20 = sadd.s32 1, %s16
    $region7: #{tpu_custom_call.1} parent=1 // loop_footer_branch
      %15 = sbr.rel target = $region3
    $region8: #{tpu_custom_call.1} parent=1 // loop_exit
      _
    %1636 = vsyncpa [#allocation3], 1
    %s1637 = scalar_lea.sflag [#allocation3], 1
    %1638 = vsyncpa %s1637, 1

// kernel: tpu_custom_call.1
$region0: #{tpu_custom_call.1}
  #allocation0 [shape = 'u32[]', space=smem, size = 0x4, offset = 0x4, fixed_abs, tag = 'smem constant byte address 0x4 - core index']
  #allocation1 [shape = 'u32[144,128]{1,0:T(1,128)}', space=vmem, size = 0x12000, scoped, tag = 'internal scratch']
  %s0 = inlined_call_operand.hbm [shape: f32[256,512], index: 0, kind: input, shape index: {}]
  %s1 = inlined_call_operand.vmem [shape: bf16[512,64], index: 1, kind: input, shape index: {}]
  %s2 = inlined_call_operand.vmem [shape: f32[1,64], index: 2, kind: input, shape index: {}]
  %s3 = inlined_call_operand.vmem [shape: bf16[64,32], index: 3, kind: input, shape index: {}]
  %s4 = inlined_call_operand.vmem [shape: f32[1,32], index: 4, kind: input, shape index: {}]
  %s5 = inlined_call_operand.vmem [shape: bf16[32,2], index: 5, kind: input, shape index: {}]
  %s6 = inlined_call_operand.vmem [shape: f32[1,2], index: 6, kind: input, shape index: {}]
  %s7 = inlined_call_operand.vmem [shape: f32[256,2], index: 7, kind: output, shape index: {}]
  %s8 = sld [smem:[#allocation0]]
  $region65: #{tpu_custom_call.1} parent=0
    _
  %s10 = ssub.s32 1, %s8
  %s11 = scalar_select 0, %s10, %s8
  $region1: #{tpu_custom_call.1} parent=0
    #allocation2 [shape = 'u8[524288]{0}', space=vmem, size = 0x80000, scoped, tag = 'input window, operand 0']
    #allocation3 [shape = 's32[2]{0}', space=sflag, size = 0x8, scoped, tag = 'scoped memory for tpu_custom_call.1']
    %12 = vsyncpa [#allocation3], 0
    %s13 = scalar_lea.sflag [#allocation3], 1
    %14 = vsyncpa %s13, 0
    loop: start=0, step=1, limit=4
    $region2: #{tpu_custom_call.1} parent=1 // loop_pre_header
      _
    $region3: #{tpu_custom_call.1} parent=1 // loop_header
      %s16 = sphi 0, %s20
      %p17 = scmp.ge.s32.totalorder %s16, 4
      %s26 = sphi 0, %s28
      %s29 = sphi 0, %s26
      %s30 = sphi 0, %s29
      %s46 = sphi 0, %s30
      %s50 = sphi 0, %s50
      %s52 = sphi 0, %s50
      %s53 = sphi 0, %s52
      %s67 = sphi 0, %s53
      %s71 = sphi 0, %s71
      %s73 = sphi 0, %s71
      %s74 = sphi 0, %s73
      %s88 = sphi 0, %s74
      %s92 = sphi 0, %s92
      %s94 = sphi 0, %s92
      %s95 = sphi 0, %s94
      %s109 = sphi 0, %s95
      %s113 = sphi 0, %s113
      %s115 = sphi 0, %s113
      %s116 = sphi 0, %s115
      %s130 = sphi 0, %s116
      %s134 = sphi 0, %s134
      %s136 = sphi 0, %s134
      %s137 = sphi 0, %s136
      %s151 = sphi 0, %s137
      %s155 = sphi 0, %s155
      %s157 = sphi 0, %s155
      %s158 = sphi 0, %s157
      %s172 = sphi 0, %s158
      %s178 = sphi 0, %s180
      %s181 = sphi 0, %s178
      %s182 = sphi 0, %s181
      %s198 = sphi 0, %s182
    $region4: #{tpu_custom_call.1} parent=1 // loop_header_branch
      %19 = sbr.rel (%p17) target = $region8
    $region5: #{tpu_custom_call.1} parent=1 // loop_body
      %s21 = ssub.s32 %s16, 1
      %s22 = ssub.s32 %s16, 2
      %s23 = sadd.s32 %s16, 1
      %s24 = ssub.s32 %s16, %s23
      %p25 = scmp.eq.s32.totalorder %s24, 0
      %s27 = sadd.s32 %s26, 1
      %s28 = scalar_select %p25, %s26, %s27
      %p31 = pneg %p25
      %p32 = scmp.eq.s32.totalorder %s16, 1
      %p33 = por %p31, %p32
      %p34 = scmp.ne.s32.totalorder %s26, %s29
      %p35 = scmp.eq.s32.totalorder %s16, 0
      %p36 = por %p34, %p35
      %p37 = scmp.ne.s32.totalorder %s26, %s29
      %p38 = scmp.eq.s32.totalorder %s21, 1
      %p39 = por %p37, %p38
      %p40 = scmp.ne.s32.totalorder %s29, %s30
      %p41 = scmp.eq.s32.totalorder %s21, 0
      %p42 = por %p40, %p41
      %p43 = scmp.ne.s32.totalorder %s29, %s30
      %p44 = scmp.eq.s32.totalorder %s22, 1
      %p45 = por %p43, %p44
      %p47 = scmp.ne.s32.totalorder %s30, %s46
      %p48 = scmp.eq.s32.totalorder %s22, 0
      %p49 = por %p47, %p48
      %s51 = sadd.s32 %s50, 1
      %p54 = scmp.eq.s32.totalorder %s16, 1
      %p55 = scmp.ne.s32.totalorder %s50, %s52
      %p56 = scmp.eq.s32.totalorder %s16, 0
      %p57 = por %p55, %p56
      %p58 = scmp.ne.s32.totalorder %s50, %s52
      %p59 = scmp.eq.s32.totalorder %s21, 1
      %p60 = por %p58, %p59
      %p61 = scmp.ne.s32.totalorder %s52, %s53
      %p62 = scmp.eq.s32.totalorder %s21, 0
      %p63 = por %p61, %p62
      %p64 = scmp.ne.s32.totalorder %s52, %s53
      %p65 = scmp.eq.s32.totalorder %s22, 1
      %p66 = por %p64, %p65
      %p68 = scmp.ne.s32.totalorder %s53, %s67
      %p69 = scmp.eq.s32.totalorder %s22, 0
      %p70 = por %p68, %p69
      %s72 = sadd.s32 %s71, 1
      %p75 = scmp.eq.s32.totalorder %s16, 1
      %p76 = scmp.ne.s32.totalorder %s71, %s73
      %p77 = scmp.eq.s32.totalorder %s16, 0
      %p78 = por %p76, %p77
      %p79 = scmp.ne.s32.totalorder %s71, %s73
      %p80 = scmp.eq.s32.totalorder %s21, 1
      %p81 = por %p79, %p80
      %p82 = scmp.ne.s32.totalorder %s73, %s74
      %p83 = scmp.eq.s32.totalorder %s21, 0
      %p84 = por %p82, %p83
      %p85 = scmp.ne.s32.totalorder %s73, %s74
      %p86 = scmp.eq.s32.totalorder %s22, 1
      %p87 = por %p85, %p86
      %p89 = scmp.ne.s32.totalorder %s74, %s88
      %p90 = scmp.eq.s32.totalorder %s22, 0
      %p91 = por %p89, %p90
      %s93 = sadd.s32 %s92, 1
      %p96 = scmp.eq.s32.totalorder %s16, 1
      %p97 = scmp.ne.s32.totalorder %s92, %s94
      %p98 = scmp.eq.s32.totalorder %s16, 0
      %p99 = por %p97, %p98
      %p100 = scmp.ne.s32.totalorder %s92, %s94
      %p101 = scmp.eq.s32.totalorder %s21, 1
      %p102 = por %p100, %p101
      %p103 = scmp.ne.s32.totalorder %s94, %s95
      %p104 = scmp.eq.s32.totalorder %s21, 0
      %p105 = por %p103, %p104
      %p106 = scmp.ne.s32.totalorder %s94, %s95
      %p107 = scmp.eq.s32.totalorder %s22, 1
      %p108 = por %p106, %p107
      %p110 = scmp.ne.s32.totalorder %s95, %s109
      %p111 = scmp.eq.s32.totalorder %s22, 0
      %p112 = por %p110, %p111
      %s114 = sadd.s32 %s113, 1
      %p117 = scmp.eq.s32.totalorder %s16, 1
      %p118 = scmp.ne.s32.totalorder %s113, %s115
      %p119 = scmp.eq.s32.totalorder %s16, 0
      %p120 = por %p118, %p119
      %p121 = scmp.ne.s32.totalorder %s113, %s115
      %p122 = scmp.eq.s32.totalorder %s21, 1
      %p123 = por %p121, %p122
      %p124 = scmp.ne.s32.totalorder %s115, %s116
      %p125 = scmp.eq.s32.totalorder %s21, 0
      %p126 = por %p124, %p125
      %p127 = scmp.ne.s32.totalorder %s115, %s116
      %p128 = scmp.eq.s32.totalorder %s22, 1
      %p129 = por %p127, %p128
      %p131 = scmp.ne.s32.totalorder %s116, %s130
      %p132 = scmp.eq.s32.totalorder %s22, 0
      %p133 = por %p131, %p132
      %s135 = sadd.s32 %s134, 1
      %p138 = scmp.eq.s32.totalorder %s16, 1
      %p139 = scmp.ne.s32.totalorder %s134, %s136
      %p140 = scmp.eq.s32.totalorder %s16, 0
      %p141 = por %p139, %p140
      %p142 = scmp.ne.s32.totalorder %s134, %s136
      %p143 = scmp.eq.s32.totalorder %s21, 1
      %p144 = por %p142, %p143
      %p145 = scmp.ne.s32.totalorder %s136, %s137
      %p146 = scmp.eq.s32.totalorder %s21, 0
      %p147 = por %p145, %p146
      %p148 = scmp.ne.s32.totalorder %s136, %s137
      %p149 = scmp.eq.s32.totalorder %s22, 1
      %p150 = por %p148, %p149
      %p152 = scmp.ne.s32.totalorder %s137, %s151
      %p153 = scmp.eq.s32.totalorder %s22, 0
      %p154 = por %p152, %p153
      %s156 = sadd.s32 %s155, 1
      %p159 = scmp.eq.s32.totalorder %s16, 1
      %p160 = scmp.ne.s32.totalorder %s155, %s157
      %p161 = scmp.eq.s32.totalorder %s16, 0
      %p162 = por %p160, %p161
      %p163 = scmp.ne.s32.totalorder %s155, %s157
      %p164 = scmp.eq.s32.totalorder %s21, 1
      %p165 = por %p163, %p164
      %p166 = scmp.ne.s32.totalorder %s157, %s158
      %p167 = scmp.eq.s32.totalorder %s21, 0
      %p168 = por %p166, %p167
      %p169 = scmp.ne.s32.totalorder %s157, %s158
      %p170 = scmp.eq.s32.totalorder %s22, 1
      %p171 = por %p169, %p170
      %p173 = scmp.ne.s32.totalorder %s158, %s172
      %p174 = scmp.eq.s32.totalorder %s22, 0
      %p175 = por %p173, %p174
      %s176 = ssub.s32 %s16, %s23
      %p177 = scmp.eq.s32.totalorder %s176, 0
      %s179 = sadd.s32 %s178, 1
      %s180 = scalar_select %p177, %s178, %s179
      %p183 = pneg %p177
      %p184 = scmp.eq.s32.totalorder %s16, 1
      %p185 = por %p183, %p184
      %p186 = scmp.ne.s32.totalorder %s178, %s181
      %p187 = scmp.eq.s32.totalorder %s16, 0
      %p188 = por %p186, %p187
      %p189 = scmp.ne.s32.totalorder %s178, %s181
      %p190 = scmp.eq.s32.totalorder %s21, 1
      %p191 = por %p189, %p190
      %p192 = scmp.ne.s32.totalorder %s181, %s182
      %p193 = scmp.eq.s32.totalorder %s21, 0
      %p194 = por %p192, %p193
      %p195 = scmp.ne.s32.totalorder %s181, %s182
      %p196 = scmp.eq.s32.totalorder %s22, 1
      %p197 = por %p195, %p196
      %p199 = scmp.ne.s32.totalorder %s182, %s198
      %p200 = scmp.eq.s32.totalorder %s22, 0
      %p201 = por %p199, %p200
      %p202 = scmp.le.s32.totalorder 1, %s16
      %p203 = scmp.lt.s32.totalorder %s16, 3
      %p204 = pnand %p202, %p203
      %p205 = pneg %p204
      // Predicated region
      $region9: #{tpu_custom_call.1} parent=5 // pred_check
        _
      $region10: #{tpu_custom_call.1} parent=5 // pred_check_branch
        %207 = sbr.rel (%p204) target = $region12
      $region11: #{tpu_custom_call.1} parent=5 // pred_region
        %s208 = ssub.s32 %s16, 1
        // Predicated region
        $region13: #{tpu_custom_call.1} parent=11 // pred_check
          %p209 = pneg %p63
        $region14: #{tpu_custom_call.1} parent=11 // pred_check_branch
          %211 = sbr.rel (%p209) target = $region16
        $region15: #{tpu_custom_call.1} parent=11 // pred_region
          _
        $region16: #{tpu_custom_call.1} parent=11 // pred_fallthru
          _
        // Predicated region
        $region17: #{tpu_custom_call.1} parent=11 // pred_check
          %p212 = pneg %p84
        $region18: #{tpu_custom_call.1} parent=11 // pred_check_branch
          %214 = sbr.rel (%p212) target = $region20
        $region19: #{tpu_custom_call.1} parent=11 // pred_region
          _
        $region20: #{tpu_custom_call.1} parent=11 // pred_fallthru
          _
        // Predicated region
        $region21: #{tpu_custom_call.1} parent=11 // pred_check
          %p215 = pneg %p105
        $region22: #{tpu_custom_call.1} parent=11 // pred_check_branch
          %217 = sbr.rel (%p215) target = $region24
        $region23: #{tpu_custom_call.1} parent=11 // pred_region
          _
        $region24: #{tpu_custom_call.1} parent=11 // pred_fallthru
          _
        // Predicated region
        $region25: #{tpu_custom_call.1} parent=11 // pred_check
          %p218 = pneg %p126
        $region26: #{tpu_custom_call.1} parent=11 // pred_check_branch
          %220 = sbr.rel (%p218) target = $region28
        $region27: #{tpu_custom_call.1} parent=11 // pred_region
          _
        $region28: #{tpu_custom_call.1} parent=11 // pred_fallthru
          _
        // Predicated region
        $region29: #{tpu_custom_call.1} parent=11 // pred_check
          %p221 = pneg %p147
        $region30: #{tpu_custom_call.1} parent=11 // pred_check_branch
          %223 = sbr.rel (%p221) target = $region32
        $region31: #{tpu_custom_call.1} parent=11 // pred_region
          _
        $region32: #{tpu_custom_call.1} parent=11 // pred_fallthru
          _
        // Predicated region
        $region33: #{tpu_custom_call.1} parent=11 // pred_check
          %p224 = pneg %p168
        $region34: #{tpu_custom_call.1} parent=11 // pred_check_branch
          %226 = sbr.rel (%p224) target = $region36
        $region35: #{tpu_custom_call.1} parent=11 // pred_region
          _
        $region36: #{tpu_custom_call.1} parent=11 // pred_fallthru
          _
      $region12: #{tpu_custom_call.1} parent=5 // pred_fallthru
        _
      %p227 = scmp.lt.s32.totalorder %s16, 2
      // Predicated region
      $region37: #{tpu_custom_call.1} parent=5 // pred_check
        %p228 = pneg %p227
      $region38: #{tpu_custom_call.1} parent=5 // pred_check_branch
        %230 = sbr.rel (%p228) target = $region40
      $region39: #{tpu_custom_call.1} parent=5 // pred_region
        // Predicated region
        $region41: #{tpu_custom_call.1} parent=39 // pred_check
          %p231 = pneg %p36
        $region42: #{tpu_custom_call.1} parent=39 // pred_check_branch
          %233 = sbr.rel (%p231) target = $region44
        $region43: #{tpu_custom_call.1} parent=39 // pred_region
          %s234 = sand.u32 %s26, 1
          %s235 = scalar_lea.sflag [#allocation3], %s234
          %s236 = sand.u32 %s26, 1
          %s237 = smul.addr %s236, 512
          %s238 = scalar_lea.vmem [#allocation2], %s237
          %s239 = smul.u32 16, %s16
          %s241 = ssub.s32 8192, 8192
          %242 = vsyncadd %s235, %s241
          %s243 = smul.addr %s239, 4
          %s244 = smul.addr %s243, 128
          %s245 = scalar_lea.hbm %s0, %s244
          %s246 = sshll.u32 %s238, 4
          %s247 = int_to_ptr.vmem [resolvable:$true] %s246
          %252 = dma.hbm_to_vmem [thread:$0]  %s245, 8192, %s247, %s235, 512, 512, 32
        $region44: #{tpu_custom_call.1} parent=39 // pred_fallthru
          _
      $region40: #{tpu_custom_call.1} parent=5 // pred_fallthru
        _
      %p253 = scmp.le.s32.totalorder 1, %s16
      %p254 = scmp.lt.s32.totalorder %s16, 3
      %p255 = pnand %p253, %p254
      %p256 = pneg %p255
      // Predicated region
      $region45: #{tpu_custom_call.1} parent=5 // pred_check
        _
      $region46: #{tpu_custom_call.1} parent=5 // pred_check_branch
        %258 = sbr.rel (%p255) target = $region48
      $region47: #{tpu_custom_call.1} parent=5 // pred_region
        %s259 = ssub.s32 %s16, 1
        %s260 = sand.u32 %s29, 1
        %s261 = scalar_lea.sflag [#allocation3], %s260
        %s262 = sand.u32 %s29, 1
        %s263 = smul.addr %s262, 512
        %s264 = scalar_lea.vmem [#allocation2], %s263
        // Predicated region
        $region49: #{tpu_custom_call.1} parent=47 // pred_check
          %p265 = pneg %p42
        $region50: #{tpu_custom_call.1} parent=47 // pred_check_branch
          %267 = sbr.rel (%p265) target = $region52
        $region51: #{tpu_custom_call.1} parent=47 // pred_region
          %268 = dma.done %s261, 8192
        $region52: #{tpu_custom_call.1} parent=47 // pred_fallthru
          _
        %s269 = sand.u32 %s29, 1
        %s270 = scalar_lea.sflag [#allocation3], %s269
        %s271 = sand.u32 %s29, 1
        %s272 = smul.addr %s271, 512
        %s273 = scalar_lea.vmem [#allocation2], %s272
        %p274 = pneg %p42
        %p275 = pneg %p39
        %p276 = pneg %p63
        %p277 = pneg %p60
        %p278 = pneg %p84
        %p279 = pneg %p81
        %p280 = pneg %p105
        %p281 = pneg %p102
        %p282 = pneg %p126
        %p283 = pneg %p123
        %p284 = pneg %p147
        %p285 = pneg %p144
        %p286 = pneg %p168
        %p287 = pneg %p165
        %p288 = pneg %p194
        %p289 = pneg %p191
        %s290 = smul.u32 16, %s21
        %p291 = scmp.lt.s32.totalorder %s290, 31
        %s292 = scalar_select %p291, %s290, 31
        %s293 = smul.addr %s292, 8
        %s294 = scalar_lea.vmem %s7, %s293
        %s295 = smul.u32 16, %s21
        %s296 = smul.u32 16, %s21
        %p297 = scmp.lt.s32.totalorder %s296, 31
        %s298 = scalar_select %p297, %s296, 31
        %s299 = smul.addr %s298, 8
        %s300 = scalar_lea.vmem %s7, %s299
        %s301 = smul.u32 16, %s21
        %v303 = vld [vmem:[%s264] sm:$0xff]
        %v304 = vld [vmem:[%s264 + $0x8] sm:$0xff]
        %v305 = vld [vmem:[%s264 + $0x10] sm:$0xff]
        %v306 = vld [vmem:[%s264 + $0x18] sm:$0xff]
        %v307 = vld [vmem:[%s264 + $0x20] sm:$0xff]
        %v308 = vld [vmem:[%s264 + $0x28] sm:$0xff]
        %v309 = vld [vmem:[%s264 + $0x30] sm:$0xff]
        %v310 = vld [vmem:[%s264 + $0x38] sm:$0xff]
        %v311 = vld [vmem:[%s264 + $0x40] sm:$0xff]
        %v312 = vld [vmem:[%s264 + $0x48] sm:$0xff]
        %v313 = vld [vmem:[%s264 + $0x50] sm:$0xff]
        %v314 = vld [vmem:[%s264 + $0x58] sm:$0xff]
        %v315 = vld [vmem:[%s264 + $0x60] sm:$0xff]
        %v316 = vld [vmem:[%s264 + $0x68] sm:$0xff]
        %v317 = vld [vmem:[%s264 + $0x70] sm:$0xff]
        %v318 = vld [vmem:[%s264 + $0x78] sm:$0xff]
        %v319 = vld [vmem:[%s264 + $0x80] sm:$0xff]
        %v320 = vld [vmem:[%s264 + $0x88] sm:$0xff]
        %v321 = vld [vmem:[%s264 + $0x90] sm:$0xff]
        %v322 = vld [vmem:[%s264 + $0x98] sm:$0xff]
        %v323 = vld [vmem:[%s264 + $0xa0] sm:$0xff]
        %v324 = vld [vmem:[%s264 + $0xa8] sm:$0xff]
        %v325 = vld [vmem:[%s264 + $0xb0] sm:$0xff]
        %v326 = vld [vmem:[%s264 + $0xb8] sm:$0xff]
        %v327 = vld [vmem:[%s264 + $0xc0] sm:$0xff]
        %v328 = vld [vmem:[%s264 + $0xc8] sm:$0xff]
        %v329 = vld [vmem:[%s264 + $0xd0] sm:$0xff]
        %v330 = vld [vmem:[%s264 + $0xd8] sm:$0xff]
        %v331 = vld [vmem:[%s264 + $0xe0] sm:$0xff]
        %v332 = vld [vmem:[%s264 + $0xe8] sm:$0xff]
        %v333 = vld [vmem:[%s264 + $0xf0] sm:$0xff]
        %v334 = vld [vmem:[%s264 + $0xf8] sm:$0xff]
        %v335 = vld [vmem:[%s264 + $0x100] sm:$0xff]
        %v336 = vld [vmem:[%s264 + $0x108] sm:$0xff]
        %v337 = vld [vmem:[%s264 + $0x110] sm:$0xff]
        %v338 = vld [vmem:[%s264 + $0x118] sm:$0xff]
        %v339 = vld [vmem:[%s264 + $0x120] sm:$0xff]
        %v340 = vld [vmem:[%s264 + $0x128] sm:$0xff]
        %v341 = vld [vmem:[%s264 + $0x130] sm:$0xff]
        %v342 = vld [vmem:[%s264 + $0x138] sm:$0xff]
        %v343 = vld [vmem:[%s264 + $0x140] sm:$0xff]
        %v344 = vld [vmem:[%s264 + $0x148] sm:$0xff]
        %v345 = vld [vmem:[%s264 + $0x150] sm:$0xff]
        %v346 = vld [vmem:[%s264 + $0x158] sm:$0xff]
        %v347 = vld [vmem:[%s264 + $0x160] sm:$0xff]
        %v348 = vld [vmem:[%s264 + $0x168] sm:$0xff]
        %v349 = vld [vmem:[%s264 + $0x170] sm:$0xff]
        %v350 = vld [vmem:[%s264 + $0x178] sm:$0xff]
        %v351 = vld [vmem:[%s264 + $0x180] sm:$0xff]
        %v352 = vld [vmem:[%s264 + $0x188] sm:$0xff]
        %v353 = vld [vmem:[%s264 + $0x190] sm:$0xff]
        %v354 = vld [vmem:[%s264 + $0x198] sm:$0xff]
        %v355 = vld [vmem:[%s264 + $0x1a0] sm:$0xff]
        %v356 = vld [vmem:[%s264 + $0x1a8] sm:$0xff]
        %v357 = vld [vmem:[%s264 + $0x1b0] sm:$0xff]
        %v358 = vld [vmem:[%s264 + $0x1b8] sm:$0xff]
        %v359 = vld [vmem:[%s264 + $0x1c0] sm:$0xff]
        %v360 = vld [vmem:[%s264 + $0x1c8] sm:$0xff]
        %v361 = vld [vmem:[%s264 + $0x1d0] sm:$0xff]
        %v362 = vld [vmem:[%s264 + $0x1d8] sm:$0xff]
        %v363 = vld [vmem:[%s264 + $0x1e0] sm:$0xff]
        %v364 = vld [vmem:[%s264 + $0x1e8] sm:$0xff]
        %v365 = vld [vmem:[%s264 + $0x1f0] sm:$0xff]
        %v366 = vld [vmem:[%s264 + $0x1f8] sm:$0xff]
        %v367 = vpack.c.bf16 %v307, %v303
        %v368 = vpack.c.bf16 %v308, %v304
        %v369 = vpack.c.bf16 %v309, %v305
        %v370 = vpack.c.bf16 %v310, %v306
        %v371 = vpack.c.bf16 %v315, %v311
        %v372 = vpack.c.bf16 %v316, %v312
        %v373 = vpack.c.bf16 %v317, %v313
        %v374 = vpack.c.bf16 %v318, %v314
        %v375 = vpack.c.bf16 %v323, %v319
        %v376 = vpack.c.bf16 %v324, %v320
        %v377 = vpack.c.bf16 %v325, %v321
        %v378 = vpack.c.bf16 %v326, %v322
        %v379 = vpack.c.bf16 %v331, %v327
        %v380 = vpack.c.bf16 %v332, %v328
        %v381 = vpack.c.bf16 %v333, %v329
        %v382 = vpack.c.bf16 %v334, %v330
        %v383 = vpack.c.bf16 %v339, %v335
        %v384 = vpack.c.bf16 %v340, %v336
        %v385 = vpack.c.bf16 %v341, %v337
        %v386 = vpack.c.bf16 %v342, %v338
        %v387 = vpack.c.bf16 %v347, %v343
        %v388 = vpack.c.bf16 %v348, %v344
        %v389 = vpack.c.bf16 %v349, %v345
        %v390 = vpack.c.bf16 %v350, %v346
        %v391 = vpack.c.bf16 %v355, %v351
        %v392 = vpack.c.bf16 %v356, %v352
        %v393 = vpack.c.bf16 %v357, %v353
        %v394 = vpack.c.bf16 %v358, %v354
        %v395 = vpack.c.bf16 %v363, %v359
        %v396 = vpack.c.bf16 %v364, %v360
        %v397 = vpack.c.bf16 %v365, %v361
        %v398 = vpack.c.bf16 %v366, %v362
        %v399 = vld [vmem:[%s1] sm:$0xf]
        %v400 = vld [vmem:[%s1 + $0x4] sm:$0xf]
        %v401 = vld [vmem:[%s1 + $0x8] sm:$0xf]
        %v402 = vld [vmem:[%s1 + $0xc] sm:$0xf]
        %v403 = vld [vmem:[%s1 + $0x10] sm:$0xf]
        %v404 = vld [vmem:[%s1 + $0x14] sm:$0xf]
        %v405 = vld [vmem:[%s1 + $0x18] sm:$0xf]
        %v406 = vld [vmem:[%s1 + $0x1c] sm:$0xf]
        %v407 = vld [vmem:[%s1 + $0x20] sm:$0xf]
        %v408 = vld [vmem:[%s1 + $0x24] sm:$0xf]
        %v409 = vld [vmem:[%s1 + $0x28] sm:$0xf]
        %v410 = vld [vmem:[%s1 + $0x2c] sm:$0xf]
        %v411 = vld [vmem:[%s1 + $0x30] sm:$0xf]
        %v412 = vld [vmem:[%s1 + $0x34] sm:$0xf]
        %v413 = vld [vmem:[%s1 + $0x38] sm:$0xf]
        %v414 = vld [vmem:[%s1 + $0x3c] sm:$0xf]
        %v415 = vld [vmem:[%s1 + $0x40] sm:$0xf]
        %v416 = vld [vmem:[%s1 + $0x44] sm:$0xf]
        %v417 = vld [vmem:[%s1 + $0x48] sm:$0xf]
        %v418 = vld [vmem:[%s1 + $0x4c] sm:$0xf]
        %v419 = vld [vmem:[%s1 + $0x50] sm:$0xf]
        %v420 = vld [vmem:[%s1 + $0x54] sm:$0xf]
        %v421 = vld [vmem:[%s1 + $0x58] sm:$0xf]
        %v422 = vld [vmem:[%s1 + $0x5c] sm:$0xf]
        %v423 = vld [vmem:[%s1 + $0x60] sm:$0xf]
        %v424 = vld [vmem:[%s1 + $0x64] sm:$0xf]
        %v425 = vld [vmem:[%s1 + $0x68] sm:$0xf]
        %v426 = vld [vmem:[%s1 + $0x6c] sm:$0xf]
        %v427 = vld [vmem:[%s1 + $0x70] sm:$0xf]
        %v428 = vld [vmem:[%s1 + $0x74] sm:$0xf]
        %v429 = vld [vmem:[%s1 + $0x78] sm:$0xf]
        %v430 = vld [vmem:[%s1 + $0x7c] sm:$0xf]
        %v431 = vld [vmem:[%s1 + $0x80] sm:$0xf]
        %v432 = vld [vmem:[%s1 + $0x84] sm:$0xf]
        %v433 = vld [vmem:[%s1 + $0x88] sm:$0xf]
        %v434 = vld [vmem:[%s1 + $0x8c] sm:$0xf]
        %v435 = vld [vmem:[%s1 + $0x90] sm:$0xf]
        %v436 = vld [vmem:[%s1 + $0x94] sm:$0xf]
        %v437 = vld [vmem:[%s1 + $0x98] sm:$0xf]
        %v438 = vld [vmem:[%s1 + $0x9c] sm:$0xf]
        %v439 = vld [vmem:[%s1 + $0xa0] sm:$0xf]
        %v440 = vld [vmem:[%s1 + $0xa4] sm:$0xf]
        %v441 = vld [vmem:[%s1 + $0xa8] sm:$0xf]
        %v442 = vld [vmem:[%s1 + $0xac] sm:$0xf]
        %v443 = vld [vmem:[%s1 + $0xb0] sm:$0xf]
        %v444 = vld [vmem:[%s1 + $0xb4] sm:$0xf]
        %v445 = vld [vmem:[%s1 + $0xb8] sm:$0xf]
        %v446 = vld [vmem:[%s1 + $0xbc] sm:$0xf]
        %v447 = vld [vmem:[%s1 + $0xc0] sm:$0xf]
        %v448 = vld [vmem:[%s1 + $0xc4] sm:$0xf]
        %v449 = vld [vmem:[%s1 + $0xc8] sm:$0xf]
        %v450 = vld [vmem:[%s1 + $0xcc] sm:$0xf]
        %v451 = vld [vmem:[%s1 + $0xd0] sm:$0xf]
        %v452 = vld [vmem:[%s1 + $0xd4] sm:$0xf]
        %v453 = vld [vmem:[%s1 + $0xd8] sm:$0xf]
        %v454 = vld [vmem:[%s1 + $0xdc] sm:$0xf]
        %v455 = vld [vmem:[%s1 + $0xe0] sm:$0xf]
        %v456 = vld [vmem:[%s1 + $0xe4] sm:$0xf]
        %v457 = vld [vmem:[%s1 + $0xe8] sm:$0xf]
        %v458 = vld [vmem:[%s1 + $0xec] sm:$0xf]
        %v459 = vld [vmem:[%s1 + $0xf0] sm:$0xf]
        %v460 = vld [vmem:[%s1 + $0xf4] sm:$0xf]
        %v461 = vld [vmem:[%s1 + $0xf8] sm:$0xf]
        %v462 = vld [vmem:[%s1 + $0xfc] sm:$0xf]
        %v463 = vld [vmem:[%s2] sm:$0x1]
        %v465 = vlaneseq
        %v466 = vshrl.u32 %v465, 7
        %v467 = vsub.s32 0, %v466
        %v468 = vrot.slane %v463, %v467
        %v534 = vunpack.c.l.b16 %v399
        %v535 = vunpack.c.l.b16 %v400
        %v536 = vunpack.c.l.b16 %v401
        %v537 = vunpack.c.l.b16 %v402
        %v538 = vunpack.c.l.b16 %v403
        %v539 = vunpack.c.l.b16 %v404
        %v540 = vunpack.c.l.b16 %v405
        %v541 = vunpack.c.l.b16 %v406
        %v542 = vunpack.c.l.b16 %v407
        %v543 = vunpack.c.l.b16 %v408
        %v544 = vunpack.c.l.b16 %v409
        %v545 = vunpack.c.l.b16 %v410
        %v546 = vunpack.c.l.b16 %v411
        %v547 = vunpack.c.l.b16 %v412
        %v548 = vunpack.c.l.b16 %v413
        %v549 = vunpack.c.l.b16 %v414
        %v550 = vunpack.c.l.b16 %v415
        %v551 = vunpack.c.l.b16 %v416
        %v552 = vunpack.c.l.b16 %v417
        %v553 = vunpack.c.l.b16 %v418
        %v554 = vunpack.c.l.b16 %v419
        %v555 = vunpack.c.l.b16 %v420
        %v556 = vunpack.c.l.b16 %v421
        %v557 = vunpack.c.l.b16 %v422
        %v558 = vunpack.c.l.b16 %v423
        %v559 = vunpack.c.l.b16 %v424
        %v560 = vunpack.c.l.b16 %v425
        %v561 = vunpack.c.l.b16 %v426
        %v562 = vunpack.c.l.b16 %v427
        %v563 = vunpack.c.l.b16 %v428
        %v564 = vunpack.c.l.b16 %v429
        %v565 = vunpack.c.l.b16 %v430
        %v566 = vunpack.c.l.b16 %v431
        %v567 = vunpack.c.l.b16 %v432
        %v568 = vunpack.c.l.b16 %v433
        %v569 = vunpack.c.l.b16 %v434
        %v570 = vunpack.c.l.b16 %v435
        %v571 = vunpack.c.l.b16 %v436
        %v572 = vunpack.c.l.b16 %v437
        %v573 = vunpack.c.l.b16 %v438
        %v574 = vunpack.c.l.b16 %v439
        %v575 = vunpack.c.l.b16 %v440
        %v576 = vunpack.c.l.b16 %v441
        %v577 = vunpack.c.l.b16 %v442
        %v578 = vunpack.c.l.b16 %v443
        %v579 = vunpack.c.l.b16 %v444
        %v580 = vunpack.c.l.b16 %v445
        %v581 = vunpack.c.l.b16 %v446
        %v582 = vunpack.c.l.b16 %v447
        %v583 = vunpack.c.l.b16 %v448
        %v584 = vunpack.c.l.b16 %v449
        %v585 = vunpack.c.l.b16 %v450
        %v586 = vunpack.c.l.b16 %v451
        %v587 = vunpack.c.l.b16 %v452
        %v588 = vunpack.c.l.b16 %v453
        %v589 = vunpack.c.l.b16 %v454
        %v590 = vunpack.c.l.b16 %v455
        %v591 = vunpack.c.l.b16 %v456
        %v592 = vunpack.c.l.b16 %v457
        %v593 = vunpack.c.l.b16 %v458
        %v594 = vunpack.c.l.b16 %v459
        %v595 = vunpack.c.l.b16 %v460
        %v596 = vunpack.c.l.b16 %v461
        %v597 = vunpack.c.l.b16 %v462
        %v598 = vpack.c.b16 %v535, %v534
        %v599 = vpack.c.b16 %v537, %v536
        %v600 = vpack.c.b16 %v539, %v538
        %v601 = vpack.c.b16 %v541, %v540
        %v602 = vpack.c.b16 %v543, %v542
        %v603 = vpack.c.b16 %v545, %v544
        %v604 = vpack.c.b16 %v547, %v546
        %v605 = vpack.c.b16 %v549, %v548
        %v606 = vpack.c.b16 %v551, %v550
        %v607 = vpack.c.b16 %v553, %v552
        %v608 = vpack.c.b16 %v555, %v554
        %v609 = vpack.c.b16 %v557, %v556
        %v610 = vpack.c.b16 %v559, %v558
        %v611 = vpack.c.b16 %v561, %v560
        %v612 = vpack.c.b16 %v563, %v562
        %v613 = vpack.c.b16 %v565, %v564
        %v614 = vpack.c.b16 %v567, %v566
        %v615 = vpack.c.b16 %v569, %v568
        %v616 = vpack.c.b16 %v571, %v570
        %v617 = vpack.c.b16 %v573, %v572
        %v618 = vpack.c.b16 %v575, %v574
        %v619 = vpack.c.b16 %v577, %v576
        %v620 = vpack.c.b16 %v579, %v578
        %v621 = vpack.c.b16 %v581, %v580
        %v622 = vpack.c.b16 %v583, %v582
        %v623 = vpack.c.b16 %v585, %v584
        %v624 = vpack.c.b16 %v587, %v586
        %v625 = vpack.c.b16 %v589, %v588
        %v626 = vpack.c.b16 %v591, %v590
        %v627 = vpack.c.b16 %v593, %v592
        %v628 = vpack.c.b16 %v595, %v594
        %v629 = vpack.c.b16 %v597, %v596
        %662 = vmatprep.subr.bf16.mxu0 0
        %663 = vmatpush1.bf16.msra.mxu0 %v605
        %664 = vmatprep.subr.bf16.mxu0 0
        %665 = vmatpush1.bf16.msra.mxu0 %v604
        %666 = vmatprep.subr.bf16.mxu0 0
        %667 = vmatpush1.bf16.msra.mxu0 %v603
        %668 = vmatprep.subr.bf16.mxu0 0
        %669 = vmatpush1.bf16.msra.mxu0 %v602
        %670 = vmatprep.subr.bf16.mxu0 0
        %671 = vmatpush1.bf16.msra.mxu0 %v601
        %672 = vmatprep.subr.bf16.mxu0 0
        %673 = vmatpush1.bf16.msra.mxu0 %v600
        %674 = vmatprep.subr.bf16.mxu0 0
        %675 = vmatpush1.bf16.msra.mxu0 %v599
        %676 = vmatprep.subr.bf16.mxu0 0
        %677 = vmatpush1.bf16.msra.mxu0 %v598
        %678 = vmatprep.subr.bf16.mxu0 0
        %679 = vmatpush2.bf16.msra.mxu0 %v613
        %680 = vmatprep.subr.bf16.mxu0 0
        %681 = vmatpush2.bf16.msra.mxu0 %v612
        %682 = vmatprep.subr.bf16.mxu0 0
        %683 = vmatpush2.bf16.msra.mxu0 %v611
        %684 = vmatprep.subr.bf16.mxu0 0
        %685 = vmatpush2.bf16.msra.mxu0 %v610
        %686 = vmatprep.subr.bf16.mxu0 0
        %687 = vmatpush2.bf16.msra.mxu0 %v609
        %688 = vmatprep.subr.bf16.mxu0 0
        %689 = vmatpush2.bf16.msra.mxu0 %v608
        %690 = vmatprep.subr.bf16.mxu0 0
        %691 = vmatpush2.bf16.msra.mxu0 %v607
        %692 = vmatprep.subr.bf16.mxu0 0
        %693 = vmatpush2.bf16.msra.mxu0 %v606
        %694 = vmatprep.mubr.bf16.mxu0 %v368
        %695 = vmatmul.mubr.bf16.gmra.mxu0 %v367
        %v696 = vpop.f32.mrf.mxu0
        %v697 = vadd.f32 %v468, %v696
        %v698 = vpop.f32.mrf.mxu0
        %v699 = vpop.f32.mrf.mxu0
        %v700 = vadd.f32 %v468, %v699
        %v701 = vpop.f32.mrf.mxu0
        %702 = vmatprep.mubr.bf16.mxu0 %v372
        %703 = vmatmul.mubr.bf16.gmra.mxu0 %v371
        %v704 = vpop.f32.mrf.mxu0
        %v705 = vadd.f32 %v468, %v704
        %v706 = vpop.f32.mrf.mxu0
        %v707 = vpop.f32.mrf.mxu0
        %v708 = vadd.f32 %v468, %v707
        %v709 = vpop.f32.mrf.mxu0
        %710 = vmatprep.mubr.bf16.mxu0 %v376
        %711 = vmatmul.mubr.bf16.gmra.mxu0 %v375
        %v712 = vpop.f32.mrf.mxu0
        %v713 = vadd.f32 %v468, %v712
        %v714 = vpop.f32.mrf.mxu0
        %v715 = vpop.f32.mrf.mxu0
        %v716 = vadd.f32 %v468, %v715
        %v717 = vpop.f32.mrf.mxu0
        %718 = vmatprep.mubr.bf16.mxu0 %v380
        %719 = vmatmul.mubr.bf16.gmra.mxu0 %v379
        %v720 = vpop.f32.mrf.mxu0
        %v721 = vadd.f32 %v468, %v720
        %v722 = vpop.f32.mrf.mxu0
        %v723 = vpop.f32.mrf.mxu0
        %v724 = vadd.f32 %v468, %v723
        %v725 = vpop.f32.mrf.mxu0
        %726 = vmatprep.mubr.bf16.mxu0 %v384
        %727 = vmatmul.mubr.bf16.gmra.mxu0 %v383
        %v728 = vpop.f32.mrf.mxu0
        %v729 = vadd.f32 %v468, %v728
        %v730 = vpop.f32.mrf.mxu0
        %v731 = vpop.f32.mrf.mxu0
        %v732 = vadd.f32 %v468, %v731
        %v733 = vpop.f32.mrf.mxu0
        %734 = vmatprep.mubr.bf16.mxu0 %v388
        %735 = vmatmul.mubr.bf16.gmra.mxu0 %v387
        %v736 = vpop.f32.mrf.mxu0
        %v737 = vadd.f32 %v468, %v736
        %v738 = vpop.f32.mrf.mxu0
        %v739 = vpop.f32.mrf.mxu0
        %v740 = vadd.f32 %v468, %v739
        %v741 = vpop.f32.mrf.mxu0
        %742 = vmatprep.mubr.bf16.mxu0 %v392
        %743 = vmatmul.mubr.bf16.gmra.mxu0 %v391
        %v744 = vpop.f32.mrf.mxu0
        %v745 = vadd.f32 %v468, %v744
        %v746 = vpop.f32.mrf.mxu0
        %v747 = vpop.f32.mrf.mxu0
        %v748 = vadd.f32 %v468, %v747
        %v749 = vpop.f32.mrf.mxu0
        %750 = vmatprep.mubr.bf16.mxu0 %v396
        %751 = vmatmul.mubr.bf16.gmra.mxu0 %v395
        %v752 = vpop.f32.mrf.mxu0
        %v753 = vadd.f32 %v468, %v752
        %v754 = vpop.f32.mrf.mxu0
        %v755 = vpop.f32.mrf.mxu0
        %v756 = vadd.f32 %v468, %v755
        %v757 = vpop.f32.mrf.mxu0
        %758 = vdwg.mxu0
        %759 = vmatprep.subr.bf16.mxu0 0
        %760 = vmatpush1.bf16.msra.mxu0 %v621
        %761 = vmatprep.subr.bf16.mxu0 0
        %762 = vmatpush1.bf16.msra.mxu0 %v620
        %763 = vmatprep.subr.bf16.mxu0 0
        %764 = vmatpush1.bf16.msra.mxu0 %v619
        %765 = vmatprep.subr.bf16.mxu0 0
        %766 = vmatpush1.bf16.msra.mxu0 %v618
        %767 = vmatprep.subr.bf16.mxu0 0
        %768 = vmatpush1.bf16.msra.mxu0 %v617
        %769 = vmatprep.subr.bf16.mxu0 0
        %770 = vmatpush1.bf16.msra.mxu0 %v616
        %771 = vmatprep.subr.bf16.mxu0 0
        %772 = vmatpush1.bf16.msra.mxu0 %v615
        %773 = vmatprep.subr.bf16.mxu0 0
        %774 = vmatpush1.bf16.msra.mxu0 %v614
        %775 = vmatprep.subr.bf16.mxu0 0
        %776 = vmatpush2.bf16.msra.mxu0 %v629
        %777 = vmatprep.subr.bf16.mxu0 0
        %778 = vmatpush2.bf16.msra.mxu0 %v628
        %779 = vmatprep.subr.bf16.mxu0 0
        %780 = vmatpush2.bf16.msra.mxu0 %v627
        %781 = vmatprep.subr.bf16.mxu0 0
        %782 = vmatpush2.bf16.msra.mxu0 %v626
        %783 = vmatprep.subr.bf16.mxu0 0
        %784 = vmatpush2.bf16.msra.mxu0 %v625
        %785 = vmatprep.subr.bf16.mxu0 0
        %786 = vmatpush2.bf16.msra.mxu0 %v624
        %787 = vmatprep.subr.bf16.mxu0 0
        %788 = vmatpush2.bf16.msra.mxu0 %v623
        %789 = vmatprep.subr.bf16.mxu0 0
        %790 = vmatpush2.bf16.msra.mxu0 %v622
        %791 = vmatprep.mubr.bf16.mxu0 %v370
        %792 = vmatmul.mubr.bf16.gmra.mxu0 %v369
        %v793 = vpop.f32.mrf.mxu0
        %v794 = vadd.f32 %v697, %v793
        %v795 = vpop.f32.mrf.mxu0
        %v796 = vpop.f32.mrf.mxu0
        %v797 = vadd.f32 %v700, %v796
        %v798 = vpop.f32.mrf.mxu0
        %799 = vmatprep.mubr.bf16.mxu0 %v374
        %800 = vmatmul.mubr.bf16.gmra.mxu0 %v373
        %v801 = vpop.f32.mrf.mxu0
        %v802 = vadd.f32 %v705, %v801
        %v803 = vpop.f32.mrf.mxu0
        %v804 = vpop.f32.mrf.mxu0
        %v805 = vadd.f32 %v708, %v804
        %v806 = vpop.f32.mrf.mxu0
        %807 = vmatprep.mubr.bf16.mxu0 %v378
        %808 = vmatmul.mubr.bf16.gmra.mxu0 %v377
        %v809 = vpop.f32.mrf.mxu0
        %v810 = vadd.f32 %v713, %v809
        %v811 = vpop.f32.mrf.mxu0
        %v812 = vpop.f32.mrf.mxu0
        %v813 = vadd.f32 %v716, %v812
        %v814 = vpop.f32.mrf.mxu0
        %815 = vmatprep.mubr.bf16.mxu0 %v382
        %816 = vmatmul.mubr.bf16.gmra.mxu0 %v381
        %v817 = vpop.f32.mrf.mxu0
        %v818 = vadd.f32 %v721, %v817
        %v819 = vpop.f32.mrf.mxu0
        %v820 = vpop.f32.mrf.mxu0
        %v821 = vadd.f32 %v724, %v820
        %v822 = vpop.f32.mrf.mxu0
        %823 = vmatprep.mubr.bf16.mxu0 %v386
        %824 = vmatmul.mubr.bf16.gmra.mxu0 %v385
        %v825 = vpop.f32.mrf.mxu0
        %v826 = vadd.f32 %v729, %v825
        %v827 = vpop.f32.mrf.mxu0
        %v828 = vpop.f32.mrf.mxu0
        %v829 = vadd.f32 %v732, %v828
        %v830 = vpop.f32.mrf.mxu0
        %831 = vmatprep.mubr.bf16.mxu0 %v390
        %832 = vmatmul.mubr.bf16.gmra.mxu0 %v389
        %v833 = vpop.f32.mrf.mxu0
        %v834 = vadd.f32 %v737, %v833
        %v835 = vpop.f32.mrf.mxu0
        %v836 = vpop.f32.mrf.mxu0
        %v837 = vadd.f32 %v740, %v836
        %v838 = vpop.f32.mrf.mxu0
        %839 = vmatprep.mubr.bf16.mxu0 %v394
        %840 = vmatmul.mubr.bf16.gmra.mxu0 %v393
        %v841 = vpop.f32.mrf.mxu0
        %v842 = vadd.f32 %v745, %v841
        %v843 = vpop.f32.mrf.mxu0
        %v844 = vpop.f32.mrf.mxu0
        %v845 = vadd.f32 %v748, %v844
        %v846 = vpop.f32.mrf.mxu0
        %847 = vmatprep.mubr.bf16.mxu0 %v398
        %848 = vmatmul.mubr.bf16.gmra.mxu0 %v397
        %v849 = vpop.f32.mrf.mxu0
        %v850 = vadd.f32 %v753, %v849
        %v851 = vpop.f32.mrf.mxu0
        %v852 = vpop.f32.mrf.mxu0
        %v853 = vadd.f32 %v756, %v852
        %v854 = vpop.f32.mrf.mxu0
        %855 = vdwg.mxu0
        %v856 = vmax.f32 %v794, 0.0
        %v857 = vmax.f32 %v797, 0.0
        %v858 = vmax.f32 %v802, 0.0
        %v859 = vmax.f32 %v805, 0.0
        %v860 = vmax.f32 %v810, 0.0
        %v861 = vmax.f32 %v813, 0.0
        %v862 = vmax.f32 %v818, 0.0
        %v863 = vmax.f32 %v821, 0.0
        %v864 = vmax.f32 %v826, 0.0
        %v865 = vmax.f32 %v829, 0.0
        %v866 = vmax.f32 %v834, 0.0
        %v867 = vmax.f32 %v837, 0.0
        %v868 = vmax.f32 %v842, 0.0
        %v869 = vmax.f32 %v845, 0.0
        %v870 = vmax.f32 %v850, 0.0
        %v871 = vmax.f32 %v853, 0.0
        %v872 = vpack.c.bf16 %v857, %v856
        %v873 = vpack.c.bf16 %v859, %v858
        %v874 = vpack.c.bf16 %v861, %v860
        %v875 = vpack.c.bf16 %v863, %v862
        %v876 = vpack.c.bf16 %v865, %v864
        %v877 = vpack.c.bf16 %v867, %v866
        %v878 = vpack.c.bf16 %v869, %v868
        %v879 = vpack.c.bf16 %v871, %v870
        %v880 = vld [vmem:[%s3] sm:$0xf]
        %v881 = vld [vmem:[%s3 + $0x4] sm:$0xf]
        %v882 = vld [vmem:[%s3 + $0x8] sm:$0xf]
        %v883 = vld [vmem:[%s3 + $0xc] sm:$0xf]
        %v884 = vld [vmem:[%s3 + $0x10] sm:$0xf]
        %v885 = vld [vmem:[%s3 + $0x14] sm:$0xf]
        %v886 = vld [vmem:[%s3 + $0x18] sm:$0xf]
        %v887 = vld [vmem:[%s3 + $0x1c] sm:$0xf]
        %v888 = vld [vmem:[%s4] sm:$0x1]
        %v890 = vlaneseq
        %v891 = vshrl.u32 %v890, 7
        %v892 = vsub.s32 0, %v891
        %v893 = vrot.slane %v888, %v892
        %v903 = vunpack.c.l.b16 %v880
        %v904 = vunpack.c.l.b16 %v881
        %v905 = vunpack.c.l.b16 %v882
        %v906 = vunpack.c.l.b16 %v883
        %v907 = vunpack.c.l.b16 %v884
        %v908 = vunpack.c.l.b16 %v885
        %v909 = vunpack.c.l.b16 %v886
        %v910 = vunpack.c.l.b16 %v887
        %v911 = vpack.c.b16 %v904, %v903
        %v912 = vpack.c.b16 %v906, %v905
        %v913 = vpack.c.b16 %v908, %v907
        %v914 = vpack.c.b16 %v910, %v909
        %vm919 = vcmask 523264
        %v921 = vsel %vm919, %v872, 0
        %v924 = vsel %vm919, %v873, 0
        %v927 = vsel %vm919, %v874, 0
        %v930 = vsel %vm919, %v875, 0
        %v933 = vsel %vm919, %v876, 0
        %v936 = vsel %vm919, %v877, 0
        %v939 = vsel %vm919, %v878, 0
        %v942 = vsel %vm919, %v879, 0
        %944 = vmatprep.subr.bf16.mxu0 0
        %945 = vmatpush1.bf16.msra.mxu0 0
        %946 = vmatprep.subr.bf16.mxu0 0
        %947 = vmatpush1.bf16.msra.mxu0 0
        %948 = vmatprep.subr.bf16.mxu0 0
        %949 = vmatpush1.bf16.msra.mxu0 0
        %950 = vmatprep.subr.bf16.mxu0 0
        %951 = vmatpush1.bf16.msra.mxu0 0
        %952 = vmatprep.subr.bf16.mxu0 0
        %953 = vmatpush1.bf16.msra.mxu0 %v914
        %954 = vmatprep.subr.bf16.mxu0 0
        %955 = vmatpush1.bf16.msra.mxu0 %v913
        %956 = vmatprep.subr.bf16.mxu0 0
        %957 = vmatpush1.bf16.msra.mxu0 %v912
        %958 = vmatprep.subr.bf16.mxu0 0
        %959 = vmatpush1.bf16.msra.mxu0 %v911
        %960 = vmatprep.subr.bf16.mxu0 0
        %961 = vmatpush2.bf16.msra.mxu0 0
        %962 = vmatprep.subr.bf16.mxu0 0
        %963 = vmatpush2.bf16.msra.mxu0 0
        %964 = vmatprep.subr.bf16.mxu0 0
        %965 = vmatpush2.bf16.msra.mxu0 0
        %966 = vmatprep.subr.bf16.mxu0 0
        %967 = vmatpush2.bf16.msra.mxu0 0
        %968 = vmatprep.subr.bf16.mxu0 0
        %969 = vmatpush2.bf16.msra.mxu0 0
        %970 = vmatprep.subr.bf16.mxu0 0
        %971 = vmatpush2.bf16.msra.mxu0 0
        %972 = vmatprep.subr.bf16.mxu0 0
        %973 = vmatpush2.bf16.msra.mxu0 0
        %974 = vmatprep.subr.bf16.mxu0 0
        %975 = vmatpush2.bf16.msra.mxu0 0
        %976 = vmatprep.mubr.bf16.mxu0 0
        %977 = vmatmul.mubr.bf16.gmra.mxu0 %v921
        %v978 = vpop.f32.mrf.mxu0
        %v979 = vadd.f32 %v893, %v978
        %v980 = vpop.f32.mrf.mxu0
        %v981 = vpop.f32.mrf.mxu0
        %v982 = vadd.f32 %v893, %v981
        %v983 = vpop.f32.mrf.mxu0
        %984 = vmatprep.mubr.bf16.mxu0 0
        %985 = vmatmul.mubr.bf16.gmra.mxu0 %v924
        %v986 = vpop.f32.mrf.mxu0
        %v987 = vadd.f32 %v893, %v986
        %v988 = vpop.f32.mrf.mxu0
        %v989 = vpop.f32.mrf.mxu0
        %v990 = vadd.f32 %v893, %v989
        %v991 = vpop.f32.mrf.mxu0
        %992 = vmatprep.mubr.bf16.mxu0 0
        %993 = vmatmul.mubr.bf16.gmra.mxu0 %v927
        %v994 = vpop.f32.mrf.mxu0
        %v995 = vadd.f32 %v893, %v994
        %v996 = vpop.f32.mrf.mxu0
        %v997 = vpop.f32.mrf.mxu0
        %v998 = vadd.f32 %v893, %v997
        %v999 = vpop.f32.mrf.mxu0
        %1000 = vmatprep.mubr.bf16.mxu0 0
        %1001 = vmatmul.mubr.bf16.gmra.mxu0 %v930
        %v1002 = vpop.f32.mrf.mxu0
        %v1003 = vadd.f32 %v893, %v1002
        %v1004 = vpop.f32.mrf.mxu0
        %v1005 = vpop.f32.mrf.mxu0
        %v1006 = vadd.f32 %v893, %v1005
        %v1007 = vpop.f32.mrf.mxu0
        %1008 = vmatprep.mubr.bf16.mxu0 0
        %1009 = vmatmul.mubr.bf16.gmra.mxu0 %v933
        %v1010 = vpop.f32.mrf.mxu0
        %v1011 = vadd.f32 %v893, %v1010
        %v1012 = vpop.f32.mrf.mxu0
        %v1013 = vpop.f32.mrf.mxu0
        %v1014 = vadd.f32 %v893, %v1013
        %v1015 = vpop.f32.mrf.mxu0
        %1016 = vmatprep.mubr.bf16.mxu0 0
        %1017 = vmatmul.mubr.bf16.gmra.mxu0 %v936
        %v1018 = vpop.f32.mrf.mxu0
        %v1019 = vadd.f32 %v893, %v1018
        %v1020 = vpop.f32.mrf.mxu0
        %v1021 = vpop.f32.mrf.mxu0
        %v1022 = vadd.f32 %v893, %v1021
        %v1023 = vpop.f32.mrf.mxu0
        %1024 = vmatprep.mubr.bf16.mxu0 0
        %1025 = vmatmul.mubr.bf16.gmra.mxu0 %v939
        %v1026 = vpop.f32.mrf.mxu0
        %v1027 = vadd.f32 %v893, %v1026
        %v1028 = vpop.f32.mrf.mxu0
        %v1029 = vpop.f32.mrf.mxu0
        %v1030 = vadd.f32 %v893, %v1029
        %v1031 = vpop.f32.mrf.mxu0
        %1032 = vmatprep.mubr.bf16.mxu0 0
        %1033 = vmatmul.mubr.bf16.gmra.mxu0 %v942
        %v1034 = vpop.f32.mrf.mxu0
        %v1035 = vadd.f32 %v893, %v1034
        %v1036 = vpop.f32.mrf.mxu0
        %v1037 = vpop.f32.mrf.mxu0
        %v1038 = vadd.f32 %v893, %v1037
        %v1039 = vpop.f32.mrf.mxu0
        %1040 = vdwg.mxu0
        %v1041 = vmax.f32 %v979, 0.0
        %v1042 = vmax.f32 %v982, 0.0
        %v1043 = vmax.f32 %v987, 0.0
        %v1044 = vmax.f32 %v990, 0.0
        %v1045 = vmax.f32 %v995, 0.0
        %v1046 = vmax.f32 %v998, 0.0
        %v1047 = vmax.f32 %v1003, 0.0
        %v1048 = vmax.f32 %v1006, 0.0
        %v1049 = vmax.f32 %v1011, 0.0
        %v1050 = vmax.f32 %v1014, 0.0
        %v1051 = vmax.f32 %v1019, 0.0
        %v1052 = vmax.f32 %v1022, 0.0
        %v1053 = vmax.f32 %v1027, 0.0
        %v1054 = vmax.f32 %v1030, 0.0
        %v1055 = vmax.f32 %v1035, 0.0
        %v1056 = vmax.f32 %v1038, 0.0
        %v1057 = vpack.c.bf16 %v1042, %v1041
        %v1058 = vpack.c.bf16 %v1044, %v1043
        %v1059 = vpack.c.bf16 %v1046, %v1045
        %v1060 = vpack.c.bf16 %v1048, %v1047
        %v1061 = vpack.c.bf16 %v1050, %v1049
        %v1062 = vpack.c.bf16 %v1052, %v1051
        %v1063 = vpack.c.bf16 %v1054, %v1053
        %v1064 = vpack.c.bf16 %v1056, %v1055
        %v1065 = vld [vmem:[%s5] sm:$0xf]
        %v1066 = vld [vmem:[%s5 + $0x4] sm:$0xf]
        %v1067 = vld [vmem:[%s5 + $0x8] sm:$0xf]
        %v1068 = vld [vmem:[%s5 + $0xc] sm:$0xf]
        %v1069 = vld [vmem:[%s6] sm:$0x1]
        %v1071 = vlaneseq
        %v1072 = vshrl.u32 %v1071, 7
        %v1073 = vsub.s32 0, %v1072
        %v1074 = vrot.slane %v1069, %v1073
        %v1080 = vunpack.c.l.b16 %v1065
        %v1081 = vunpack.c.l.b16 %v1066
        %v1082 = vunpack.c.l.b16 %v1067
        %v1083 = vunpack.c.l.b16 %v1068
        %v1084 = vpack.c.b16 %v1081, %v1080
        %v1085 = vpack.c.b16 %v1083, %v1082
        %vm1088 = vcmask 261120
        %v1090 = vsel %vm1088, %v1057, 0
        %v1093 = vsel %vm1088, %v1058, 0
        %v1096 = vsel %vm1088, %v1059, 0
        %v1099 = vsel %vm1088, %v1060, 0
        %v1102 = vsel %vm1088, %v1061, 0
        %v1105 = vsel %vm1088, %v1062, 0
        %v1108 = vsel %vm1088, %v1063, 0
        %v1111 = vsel %vm1088, %v1064, 0
        %1113 = vmatprep.subr.bf16.mxu0 0
        %1114 = vmatpush1.bf16.msra.mxu0 0
        %1115 = vmatprep.subr.bf16.mxu0 0
        %1116 = vmatpush1.bf16.msra.mxu0 0
        %1117 = vmatprep.subr.bf16.mxu0 0
        %1118 = vmatpush1.bf16.msra.mxu0 0
        %1119 = vmatprep.subr.bf16.mxu0 0
        %1120 = vmatpush1.bf16.msra.mxu0 0
        %1121 = vmatprep.subr.bf16.mxu0 0
        %1122 = vmatpush1.bf16.msra.mxu0 0
        %1123 = vmatprep.subr.bf16.mxu0 0
        %1124 = vmatpush1.bf16.msra.mxu0 0
        %1125 = vmatprep.subr.bf16.mxu0 0
        %1126 = vmatpush1.bf16.msra.mxu0 %v1085
        %1127 = vmatprep.subr.bf16.mxu0 0
        %1128 = vmatpush1.bf16.msra.mxu0 %v1084
        %1129 = vmatprep.subr.bf16.mxu0 0
        %1130 = vmatpush2.bf16.msra.mxu0 0
        %1131 = vmatprep.subr.bf16.mxu0 0
        %1132 = vmatpush2.bf16.msra.mxu0 0
        %1133 = vmatprep.subr.bf16.mxu0 0
        %1134 = vmatpush2.bf16.msra.mxu0 0
        %1135 = vmatprep.subr.bf16.mxu0 0
        %1136 = vmatpush2.bf16.msra.mxu0 0
        %1137 = vmatprep.subr.bf16.mxu0 0
        %1138 = vmatpush2.bf16.msra.mxu0 0
        %1139 = vmatprep.subr.bf16.mxu0 0
        %1140 = vmatpush2.bf16.msra.mxu0 0
        %1141 = vmatprep.subr.bf16.mxu0 0
        %1142 = vmatpush2.bf16.msra.mxu0 0
        %1143 = vmatprep.subr.bf16.mxu0 0
        %1144 = vmatpush2.bf16.msra.mxu0 0
        %1145 = vmatprep.mubr.bf16.mxu0 0
        %1146 = vmatmul.mubr.bf16.gmra.mxu0 %v1090
        %v1147 = vpop.f32.mrf.mxu0
        %v1148 = vadd.f32 %v1074, %v1147
        %v1149 = vpop.f32.mrf.mxu0
        %v1150 = vpop.f32.mrf.mxu0
        %v1151 = vadd.f32 %v1074, %v1150
        %v1152 = vpop.f32.mrf.mxu0
        %1153 = vmatprep.mubr.bf16.mxu0 0
        %1154 = vmatmul.mubr.bf16.gmra.mxu0 %v1093
        %v1155 = vpop.f32.mrf.mxu0
        %v1156 = vadd.f32 %v1074, %v1155
        %v1157 = vpop.f32.mrf.mxu0
        %v1158 = vpop.f32.mrf.mxu0
        %v1159 = vadd.f32 %v1074, %v1158
        %v1160 = vpop.f32.mrf.mxu0
        %1161 = vmatprep.mubr.bf16.mxu0 0
        %1162 = vmatmul.mubr.bf16.gmra.mxu0 %v1096
        %v1163 = vpop.f32.mrf.mxu0
        %v1164 = vadd.f32 %v1074, %v1163
        %v1165 = vpop.f32.mrf.mxu0
        %v1166 = vpop.f32.mrf.mxu0
        %v1167 = vadd.f32 %v1074, %v1166
        %v1168 = vpop.f32.mrf.mxu0
        %1169 = vmatprep.mubr.bf16.mxu0 0
        %1170 = vmatmul.mubr.bf16.gmra.mxu0 %v1099
        %v1171 = vpop.f32.mrf.mxu0
        %v1172 = vadd.f32 %v1074, %v1171
        %v1173 = vpop.f32.mrf.mxu0
        %v1174 = vpop.f32.mrf.mxu0
        %v1175 = vadd.f32 %v1074, %v1174
        %v1176 = vpop.f32.mrf.mxu0
        %1177 = vmatprep.mubr.bf16.mxu0 0
        %1178 = vmatmul.mubr.bf16.gmra.mxu0 %v1102
        %v1179 = vpop.f32.mrf.mxu0
        %v1180 = vadd.f32 %v1074, %v1179
        %v1181 = vpop.f32.mrf.mxu0
        %v1182 = vpop.f32.mrf.mxu0
        %v1183 = vadd.f32 %v1074, %v1182
        %v1184 = vpop.f32.mrf.mxu0
        %1185 = vmatprep.mubr.bf16.mxu0 0
        %1186 = vmatmul.mubr.bf16.gmra.mxu0 %v1105
        %v1187 = vpop.f32.mrf.mxu0
        %v1188 = vadd.f32 %v1074, %v1187
        %v1189 = vpop.f32.mrf.mxu0
        %v1190 = vpop.f32.mrf.mxu0
        %v1191 = vadd.f32 %v1074, %v1190
        %v1192 = vpop.f32.mrf.mxu0
        %1193 = vmatprep.mubr.bf16.mxu0 0
        %1194 = vmatmul.mubr.bf16.gmra.mxu0 %v1108
        %v1195 = vpop.f32.mrf.mxu0
        %v1196 = vadd.f32 %v1074, %v1195
        %v1197 = vpop.f32.mrf.mxu0
        %v1198 = vpop.f32.mrf.mxu0
        %v1199 = vadd.f32 %v1074, %v1198
        %v1200 = vpop.f32.mrf.mxu0
        %1201 = vmatprep.mubr.bf16.mxu0 0
        %1202 = vmatmul.mubr.bf16.gmra.mxu0 %v1111
        %v1203 = vpop.f32.mrf.mxu0
        %v1204 = vadd.f32 %v1074, %v1203
        %v1205 = vpop.f32.mrf.mxu0
        %v1206 = vpop.f32.mrf.mxu0
        %v1207 = vadd.f32 %v1074, %v1206
        %v1208 = vpop.f32.mrf.mxu0
        %1209 = vdwg.mxu0
        %1226 = vrot.lane.b32.xlu0 %v1148, 1
        %v1227 = vpop.permute.xlu0 %1226
        %1228 = vrot.lane.b32.xlu0 %v1151, 1
        %v1229 = vpop.permute.xlu0 %1228
        %1230 = vrot.lane.b32.xlu0 %v1156, 1
        %v1231 = vpop.permute.xlu0 %1230
        %1232 = vrot.lane.b32.xlu0 %v1159, 1
        %v1233 = vpop.permute.xlu0 %1232
        %1234 = vrot.lane.b32.xlu0 %v1164, 1
        %v1235 = vpop.permute.xlu0 %1234
        %1236 = vrot.lane.b32.xlu0 %v1167, 1
        %v1237 = vpop.permute.xlu0 %1236
        %1238 = vrot.lane.b32.xlu0 %v1172, 1
        %v1239 = vpop.permute.xlu0 %1238
        %1240 = vrot.lane.b32.xlu0 %v1175, 1
        %v1241 = vpop.permute.xlu0 %1240
        %1242 = vrot.lane.b32.xlu0 %v1180, 1
        %v1243 = vpop.permute.xlu0 %1242
        %1244 = vrot.lane.b32.xlu0 %v1183, 1
        %v1245 = vpop.permute.xlu0 %1244
        %1246 = vrot.lane.b32.xlu0 %v1188, 1
        %v1247 = vpop.permute.xlu0 %1246
        %1248 = vrot.lane.b32.xlu0 %v1191, 1
        %v1249 = vpop.permute.xlu0 %1248
        %1250 = vrot.lane.b32.xlu0 %v1196, 1
        %v1251 = vpop.permute.xlu0 %1250
        %1252 = vrot.lane.b32.xlu0 %v1199, 1
        %v1253 = vpop.permute.xlu0 %1252
        %1254 = vrot.lane.b32.xlu0 %v1204, 1
        %v1255 = vpop.permute.xlu0 %1254
        %1256 = vrot.lane.b32.xlu0 %v1207, 1
        %v1257 = vpop.permute.xlu0 %1256
        %v1274 = vsub.f32 %v1148, %v1227
        %v1275 = vsub.f32 %v1151, %v1229
        %v1276 = vsub.f32 %v1156, %v1231
        %v1277 = vsub.f32 %v1159, %v1233
        %v1278 = vsub.f32 %v1164, %v1235
        %v1279 = vsub.f32 %v1167, %v1237
        %v1280 = vsub.f32 %v1172, %v1239
        %v1281 = vsub.f32 %v1175, %v1241
        %v1282 = vsub.f32 %v1180, %v1243
        %v1283 = vsub.f32 %v1183, %v1245
        %v1284 = vsub.f32 %v1188, %v1247
        %v1285 = vsub.f32 %v1191, %v1249
        %v1286 = vsub.f32 %v1196, %v1251
        %v1287 = vsub.f32 %v1199, %v1253
        %v1288 = vsub.f32 %v1204, %v1255
        %v1289 = vsub.f32 %v1207, %v1257
        %v1290 = vmax.f32 %v1274, -30.0
        %v1291 = vmax.f32 %v1275, -30.0
        %v1292 = vmax.f32 %v1276, -30.0
        %v1293 = vmax.f32 %v1277, -30.0
        %v1294 = vmax.f32 %v1278, -30.0
        %v1295 = vmax.f32 %v1279, -30.0
        %v1296 = vmax.f32 %v1280, -30.0
        %v1297 = vmax.f32 %v1281, -30.0
        %v1298 = vmax.f32 %v1282, -30.0
        %v1299 = vmax.f32 %v1283, -30.0
        %v1300 = vmax.f32 %v1284, -30.0
        %v1301 = vmax.f32 %v1285, -30.0
        %v1302 = vmax.f32 %v1286, -30.0
        %v1303 = vmax.f32 %v1287, -30.0
        %v1304 = vmax.f32 %v1288, -30.0
        %v1305 = vmax.f32 %v1289, -30.0
        %v1306 = vmin.f32 %v1290, 30.0
        %v1307 = vmin.f32 %v1291, 30.0
        %v1308 = vmin.f32 %v1292, 30.0
        %v1309 = vmin.f32 %v1293, 30.0
        %v1310 = vmin.f32 %v1294, 30.0
        %v1311 = vmin.f32 %v1295, 30.0
        %v1312 = vmin.f32 %v1296, 30.0
        %v1313 = vmin.f32 %v1297, 30.0
        %v1314 = vmin.f32 %v1298, 30.0
        %v1315 = vmin.f32 %v1299, 30.0
        %v1316 = vmin.f32 %v1300, 30.0
        %v1317 = vmin.f32 %v1301, 30.0
        %v1318 = vmin.f32 %v1302, 30.0
        %v1319 = vmin.f32 %v1303, 30.0
        %v1320 = vmin.f32 %v1304, 30.0
        %v1321 = vmin.f32 %v1305, 30.0
        %v1322 = vsub.f32 0.0, %v1306
        %v1323 = vsub.f32 0.0, %v1307
        %v1324 = vsub.f32 0.0, %v1308
        %v1325 = vsub.f32 0.0, %v1309
        %v1326 = vsub.f32 0.0, %v1310
        %v1327 = vsub.f32 0.0, %v1311
        %v1328 = vsub.f32 0.0, %v1312
        %v1329 = vsub.f32 0.0, %v1313
        %v1330 = vsub.f32 0.0, %v1314
        %v1331 = vsub.f32 0.0, %v1315
        %v1332 = vsub.f32 0.0, %v1316
        %v1333 = vsub.f32 0.0, %v1317
        %v1334 = vsub.f32 0.0, %v1318
        %v1335 = vsub.f32 0.0, %v1319
        %v1336 = vsub.f32 0.0, %v1320
        %v1337 = vsub.f32 0.0, %v1321
        %v1338 = vmul.f32 %v1322, 1.442695
        %v1339 = vpow.pop %v1338
        %v1340 = vmul.f32 %v1323, 1.442695
        %v1341 = vpow.pop %v1340
        %v1342 = vmul.f32 %v1324, 1.442695
        %v1343 = vpow.pop %v1342
        %v1344 = vmul.f32 %v1325, 1.442695
        %v1345 = vpow.pop %v1344
        %v1346 = vmul.f32 %v1326, 1.442695
        %v1347 = vpow.pop %v1346
        %v1348 = vmul.f32 %v1327, 1.442695
        %v1349 = vpow.pop %v1348
        %v1350 = vmul.f32 %v1328, 1.442695
        %v1351 = vpow.pop %v1350
        %v1352 = vmul.f32 %v1329, 1.442695
        %v1353 = vpow.pop %v1352
        %v1354 = vmul.f32 %v1330, 1.442695
        %v1355 = vpow.pop %v1354
        %v1356 = vmul.f32 %v1331, 1.442695
        %v1357 = vpow.pop %v1356
        %v1358 = vmul.f32 %v1332, 1.442695
        %v1359 = vpow.pop %v1358
        %v1360 = vmul.f32 %v1333, 1.442695
        %v1361 = vpow.pop %v1360
        %v1362 = vmul.f32 %v1334, 1.442695
        %v1363 = vpow.pop %v1362
        %v1364 = vmul.f32 %v1335, 1.442695
        %v1365 = vpow.pop %v1364
        %v1366 = vmul.f32 %v1336, 1.442695
        %v1367 = vpow.pop %v1366
        %v1368 = vmul.f32 %v1337, 1.442695
        %v1369 = vpow.pop %v1368
        %v1370 = vadd.f32 %v1339, 1.0
        %v1371 = vadd.f32 %v1341, 1.0
        %v1372 = vadd.f32 %v1343, 1.0
        %v1373 = vadd.f32 %v1345, 1.0
        %v1374 = vadd.f32 %v1347, 1.0
        %v1375 = vadd.f32 %v1349, 1.0
        %v1376 = vadd.f32 %v1351, 1.0
        %v1377 = vadd.f32 %v1353, 1.0
        %v1378 = vadd.f32 %v1355, 1.0
        %v1379 = vadd.f32 %v1357, 1.0
        %v1380 = vadd.f32 %v1359, 1.0
        %v1381 = vadd.f32 %v1361, 1.0
        %v1382 = vadd.f32 %v1363, 1.0
        %v1383 = vadd.f32 %v1365, 1.0
        %v1384 = vadd.f32 %v1367, 1.0
        %v1385 = vadd.f32 %v1369, 1.0
        %v1386 = vrcp.pop %v1370
        %v1387 = vrcp.pop %v1371
        %v1388 = vrcp.pop %v1372
        %v1389 = vrcp.pop %v1373
        %v1390 = vrcp.pop %v1374
        %v1391 = vrcp.pop %v1375
        %v1392 = vrcp.pop %v1376
        %v1393 = vrcp.pop %v1377
        %v1394 = vrcp.pop %v1378
        %v1395 = vrcp.pop %v1379
        %v1396 = vrcp.pop %v1380
        %v1397 = vrcp.pop %v1381
        %v1398 = vrcp.pop %v1382
        %v1399 = vrcp.pop %v1383
        %v1400 = vrcp.pop %v1384
        %v1401 = vrcp.pop %v1385
        %v1402 = vlaneseq
        %v1403 = vand.u32 %v1402, 127
        %vm1404 = vcmp.eq.s32.totalorder %v1403, 1
        %v1405 = vsub.f32 1.0, %v1386
        %v1406 = vsub.f32 1.0, %v1387
        %v1407 = vsub.f32 1.0, %v1388
        %v1408 = vsub.f32 1.0, %v1389
        %v1409 = vsub.f32 1.0, %v1390
        %v1410 = vsub.f32 1.0, %v1391
        %v1411 = vsub.f32 1.0, %v1392
        %v1412 = vsub.f32 1.0, %v1393
        %v1413 = vsub.f32 1.0, %v1394
        %v1414 = vsub.f32 1.0, %v1395
        %v1415 = vsub.f32 1.0, %v1396
        %v1416 = vsub.f32 1.0, %v1397
        %v1417 = vsub.f32 1.0, %v1398
        %v1418 = vsub.f32 1.0, %v1399
        %v1419 = vsub.f32 1.0, %v1400
        %v1420 = vsub.f32 1.0, %v1401
        %1422 = vset.pattern.permute.xlu0 1
        %1423 = vperm.xlu0 %1422, %v1386
        %v1424 = vpop.permute.xlu0 %1423
        %1427 = vset.pattern.permute.xlu0 1
        %1428 = vperm.xlu0 %1427, %v1387
        %v1429 = vpop.permute.xlu0 %1428
        %1432 = vset.pattern.permute.xlu0 1
        %1433 = vperm.xlu0 %1432, %v1388
        %v1434 = vpop.permute.xlu0 %1433
        %1437 = vset.pattern.permute.xlu0 1
        %1438 = vperm.xlu0 %1437, %v1389
        %v1439 = vpop.permute.xlu0 %1438
        %1442 = vset.pattern.permute.xlu0 1
        %1443 = vperm.xlu0 %1442, %v1390
        %v1444 = vpop.permute.xlu0 %1443
        %1447 = vset.pattern.permute.xlu0 1
        %1448 = vperm.xlu0 %1447, %v1391
        %v1449 = vpop.permute.xlu0 %1448
        %1452 = vset.pattern.permute.xlu0 1
        %1453 = vperm.xlu0 %1452, %v1392
        %v1454 = vpop.permute.xlu0 %1453
        %1457 = vset.pattern.permute.xlu0 1
        %1458 = vperm.xlu0 %1457, %v1393
        %v1459 = vpop.permute.xlu0 %1458
        %1462 = vset.pattern.permute.xlu0 1
        %1463 = vperm.xlu0 %1462, %v1394
        %v1464 = vpop.permute.xlu0 %1463
        %1467 = vset.pattern.permute.xlu0 1
        %1468 = vperm.xlu0 %1467, %v1395
        %v1469 = vpop.permute.xlu0 %1468
        %1472 = vset.pattern.permute.xlu0 1
        %1473 = vperm.xlu0 %1472, %v1396
        %v1474 = vpop.permute.xlu0 %1473
        %1477 = vset.pattern.permute.xlu0 1
        %1478 = vperm.xlu0 %1477, %v1397
        %v1479 = vpop.permute.xlu0 %1478
        %1482 = vset.pattern.permute.xlu0 1
        %1483 = vperm.xlu0 %1482, %v1398
        %v1484 = vpop.permute.xlu0 %1483
        %1487 = vset.pattern.permute.xlu0 1
        %1488 = vperm.xlu0 %1487, %v1399
        %v1489 = vpop.permute.xlu0 %1488
        %1492 = vset.pattern.permute.xlu0 1
        %1493 = vperm.xlu0 %1492, %v1400
        %v1494 = vpop.permute.xlu0 %1493
        %1497 = vset.pattern.permute.xlu0 1
        %1498 = vperm.xlu0 %1497, %v1401
        %v1499 = vpop.permute.xlu0 %1498
        %1502 = vset.pattern.permute.xlu0 1
        %1503 = vperm.xlu0 %1502, %v1405
        %v1504 = vpop.permute.xlu0 %1503
        %1507 = vset.pattern.permute.xlu0 1
        %1508 = vperm.xlu0 %1507, %v1406
        %v1509 = vpop.permute.xlu0 %1508
        %1512 = vset.pattern.permute.xlu0 1
        %1513 = vperm.xlu0 %1512, %v1407
        %v1514 = vpop.permute.xlu0 %1513
        %1517 = vset.pattern.permute.xlu0 1
        %1518 = vperm.xlu0 %1517, %v1408
        %v1519 = vpop.permute.xlu0 %1518
        %1522 = vset.pattern.permute.xlu0 1
        %1523 = vperm.xlu0 %1522, %v1409
        %v1524 = vpop.permute.xlu0 %1523
        %1527 = vset.pattern.permute.xlu0 1
        %1528 = vperm.xlu0 %1527, %v1410
        %v1529 = vpop.permute.xlu0 %1528
        %1532 = vset.pattern.permute.xlu0 1
        %1533 = vperm.xlu0 %1532, %v1411
        %v1534 = vpop.permute.xlu0 %1533
        %1537 = vset.pattern.permute.xlu0 1
        %1538 = vperm.xlu0 %1537, %v1412
        %v1539 = vpop.permute.xlu0 %1538
        %1542 = vset.pattern.permute.xlu0 1
        %1543 = vperm.xlu0 %1542, %v1413
        %v1544 = vpop.permute.xlu0 %1543
        %1547 = vset.pattern.permute.xlu0 1
        %1548 = vperm.xlu0 %1547, %v1414
        %v1549 = vpop.permute.xlu0 %1548
        %1552 = vset.pattern.permute.xlu0 1
        %1553 = vperm.xlu0 %1552, %v1415
        %v1554 = vpop.permute.xlu0 %1553
        %1557 = vset.pattern.permute.xlu0 1
        %1558 = vperm.xlu0 %1557, %v1416
        %v1559 = vpop.permute.xlu0 %1558
        %1562 = vset.pattern.permute.xlu0 1
        %1563 = vperm.xlu0 %1562, %v1417
        %v1564 = vpop.permute.xlu0 %1563
        %1567 = vset.pattern.permute.xlu0 1
        %1568 = vperm.xlu0 %1567, %v1418
        %v1569 = vpop.permute.xlu0 %1568
        %1572 = vset.pattern.permute.xlu0 1
        %1573 = vperm.xlu0 %1572, %v1419
        %v1574 = vpop.permute.xlu0 %1573
        %1577 = vset.pattern.permute.xlu0 1
        %1578 = vperm.xlu0 %1577, %v1420
        %v1579 = vpop.permute.xlu0 %1578
        %v1581 = vsel %vm1404, %v1424, %v1504
        %v1582 = vsel %vm1404, %v1429, %v1509
        %v1583 = vsel %vm1404, %v1434, %v1514
        %v1584 = vsel %vm1404, %v1439, %v1519
        %v1585 = vsel %vm1404, %v1444, %v1524
        %v1586 = vsel %vm1404, %v1449, %v1529
        %v1587 = vsel %vm1404, %v1454, %v1534
        %v1588 = vsel %vm1404, %v1459, %v1539
        %v1589 = vsel %vm1404, %v1464, %v1544
        %v1590 = vsel %vm1404, %v1469, %v1549
        %v1591 = vsel %vm1404, %v1474, %v1554
        %v1592 = vsel %vm1404, %v1479, %v1559
        %v1593 = vsel %vm1404, %v1484, %v1564
        %v1594 = vsel %vm1404, %v1489, %v1569
        %v1595 = vsel %vm1404, %v1494, %v1574
        %v1596 = vsel %vm1404, %v1499, %v1579
        %vm1597 = vcmask 15360
        %1598 = vst.msk [vmem:[%s300] sm:$0xff] %vm1597, %v1581
        %1599 = vst.msk [vmem:[%s300 + $0x8] sm:$0xff] %vm1597, %v1582
        %1600 = vst.msk [vmem:[%s300 + $0x10] sm:$0xff] %vm1597, %v1583
        %1601 = vst.msk [vmem:[%s300 + $0x18] sm:$0xff] %vm1597, %v1584
        %1602 = vst.msk [vmem:[%s300 + $0x20] sm:$0xff] %vm1597, %v1585
        %1603 = vst.msk [vmem:[%s300 + $0x28] sm:$0xff] %vm1597, %v1586
        %1604 = vst.msk [vmem:[%s300 + $0x30] sm:$0xff] %vm1597, %v1587
        %1605 = vst.msk [vmem:[%s300 + $0x38] sm:$0xff] %vm1597, %v1588
        %1606 = vst.msk [vmem:[%s300 + $0x40] sm:$0xff] %vm1597, %v1589
        %1607 = vst.msk [vmem:[%s300 + $0x48] sm:$0xff] %vm1597, %v1590
        %1608 = vst.msk [vmem:[%s300 + $0x50] sm:$0xff] %vm1597, %v1591
        %1609 = vst.msk [vmem:[%s300 + $0x58] sm:$0xff] %vm1597, %v1592
        %1610 = vst.msk [vmem:[%s300 + $0x60] sm:$0xff] %vm1597, %v1593
        %1611 = vst.msk [vmem:[%s300 + $0x68] sm:$0xff] %vm1597, %v1594
        %1612 = vst.msk [vmem:[%s300 + $0x70] sm:$0xff] %vm1597, %v1595
        %1613 = vst.msk [vmem:[%s300 + $0x78] sm:$0xff] %vm1597, %v1596
        %s1614 = smul.u32 16, %s21
        %p1615 = scmp.lt.s32.totalorder %s1614, 31
        %s1616 = scalar_select %p1615, %s1614, 31
        %s1617 = smul.addr %s1616, 8
        %s1618 = scalar_lea.vmem %s7, %s1617
        // Predicated region
        $region53: #{tpu_custom_call.1} parent=47 // pred_check
          %p1619 = pneg %p191
        $region54: #{tpu_custom_call.1} parent=47 // pred_check_branch
          %1621 = sbr.rel (%p1619) target = $region56
        $region55: #{tpu_custom_call.1} parent=47 // pred_region
          %s1622 = smul.u32 16, %s21
        $region56: #{tpu_custom_call.1} parent=47 // pred_fallthru
          _
      $region48: #{tpu_custom_call.1} parent=5 // pred_fallthru
        _
      %p1623 = scmp.le.s32.totalorder 2, %s16
      // Predicated region
      $region57: #{tpu_custom_call.1} parent=5 // pred_check
        %p1624 = pneg %p1623
      $region58: #{tpu_custom_call.1} parent=5 // pred_check_branch
        %1626 = sbr.rel (%p1624) target = $region60
      $region59: #{tpu_custom_call.1} parent=5 // pred_region
        %s1627 = ssub.s32 %s16, 2
        // Predicated region
        $region61: #{tpu_custom_call.1} parent=59 // pred_check
          %p1628 = pneg %p197
        $region62: #{tpu_custom_call.1} parent=59 // pred_check_branch
          %1630 = sbr.rel (%p1628) target = $region64
        $region63: #{tpu_custom_call.1} parent=59 // pred_region
          %s1631 = smul.u32 16, %s22
          %p1632 = scmp.lt.s32.totalorder %s1631, 31
          %s1633 = scalar_select %p1632, %s1631, 31
          %s1634 = smul.addr %s1633, 8
          %s1635 = scalar_lea.vmem %s7, %s1634
        $region64: #{tpu_custom_call.1} parent=59 // pred_fallthru
          _
      $region60: #{tpu_custom_call.1} parent=5 // pred_fallthru
        _
    $region6: #{tpu_custom_call.1} parent=1 // loop_footer
      %s20 = sadd.s32 1, %s16
    $region7: #{tpu_custom_call.1} parent=1 // loop_footer_branch
      %15 = sbr.rel target = $region3
    $region8: #{tpu_custom_call.1} parent=1 // loop_exit
      _
    %1636 = vsyncpa [#allocation3], 1
    %s1637 = scalar_lea.sflag [#allocation3], 1
    %1638 = vsyncpa %s1637, 1

</llo_original>
